<compile_context>
chip_gen: v7x
topology: tpu7x:2x2x1
jax: 0.10.0
libtpu: 0.0.40
codegen_flags: <defaults>
</compile_context>

<pallas_src>
import math
import jax
import jax.numpy as jnp
from jax.experimental import pallas as pl
from jax.experimental.pallas import tpu as pltpu

# ----------------------- static (small) configuration -----------------------
BATCH            = 2
INPUT_SIZE       = 32
HIDDEN           = 32
NUM_UNITS        = 4
TOPK             = 2
NUM_SCHEMAS      = 2

NUM_INPUT_HEADS  = 1
INPUT_KEY_SIZE   = 16
INPUT_QUERY_SIZE = 16
INPUT_VALUE_SIZE = 32

NUM_COMM_HEADS   = 4
COMM_KEY_SIZE    = 16
COMM_QUERY_SIZE  = 16
COMM_VALUE_SIZE  = HIDDEN   # the module forces comm_value_size == hidden_size


# --------------------------------- kernel -----------------------------------
def rim_cell_kernel(x_ref, h_ref, kv_w_ref, kv_b_ref, query_bd_ref,
                    x2h_bd_ref, h2h_bd_ref, qkvc_bd_ref, out_bd_ref,
                    o_ref, qkv3_ref, ctx3_ref):
    f32 = jnp.float32
    B = x_ref.shape[0]
    U, H = NUM_UNITS, HIDDEN
    IKS, IVS = INPUT_KEY_SIZE, INPUT_VALUE_SIZE
    NCH, CQS, CKS, CVS = (NUM_COMM_HEADS, COMM_QUERY_SIZE,
                          COMM_KEY_SIZE, COMM_VALUE_SIZE)
    QPU, KPU, VPU = NCH * CQS, NCH * CKS, NCH * CVS
    QKV_PU = QPU + KPU + VPU                       # per-unit fused q|k|v width

    x = x_ref[...]                                 # (B, INPUT_SIZE)
    h_flat = h_ref[...]                            # (B, U*H), columns (unit, h)

    # --- in-kernel 0/1 helper matrices (iota comparisons; no integer div) ----
    def unit_expand(width):                        # (U, U*width)
        lane = jax.lax.broadcasted_iota(jnp.int32, (U, U * width), 1)
        unit = jax.lax.broadcasted_iota(jnp.int32, (U, U * width), 0)
        lo = unit * width
        return jnp.logical_and(lane >= lo, lane < lo + width).astype(f32)

    e_iv = unit_expand(IVS)                        # repeat unit scalar over IVS lanes
    e_h = unit_expand(H)                           # repeat unit scalar over H lanes
    row = jax.lax.broadcasted_iota(jnp.int32, (U * IKS, U), 0)
    col = jax.lax.broadcasted_iota(jnp.int32, (U * IKS, U), 1)
    lo = col * IKS
    seg = jnp.logical_and(row >= lo, row < lo + IKS).astype(f32)   # (U*IKS, U)

    # ---------------- input attention (NUM_INPUT_HEADS == 1) -----------------
    # Fused key|value projection of the real input; the null input is all
    # zeros so its key/value are exactly the biases.
    kv_b = kv_b_ref[...]                                               # (1, IKS+IVS)
    kv = jnp.dot(x, kv_w_ref[...], preferred_element_type=f32) + kv_b  # (B, IKS+IVS)
    key_r, val_r = kv[:, :IKS], kv[:, IKS:]                            # (B,16) (B,32)
    key_n, val_n = kv_b[:, :IKS], kv_b[:, IKS:]                        # (1,16) (1,32)

    q_flat = jnp.dot(h_flat, query_bd_ref[...],
                     preferred_element_type=f32)                       # (B, U*IKS)

    key_r_t = jnp.concatenate([key_r] * U, axis=1)                     # (B, U*IKS)
    key_n_t = jnp.concatenate([key_n] * U, axis=1)                     # (1, U*IKS)
    inv_sqrt_ik = 1.0 / math.sqrt(IKS)
    s_real = jnp.dot(q_flat * key_r_t, seg,
                     preferred_element_type=f32) * inv_sqrt_ik          # (B, U)
    s_null = jnp.dot(q_flat * key_n_t, seg,
                     preferred_element_type=f32) * inv_sqrt_ik          # (B, U)

    # top-k active-unit mask via ranks (index tie-break == lax.top_k/torch.topk)
    sv = s_real[:, None, :]                                             # (B, 1, U)
    su = s_real[:, :, None]                                             # (B, U, 1)
    vidx = jax.lax.broadcasted_iota(jnp.int32, (B, U, U), 2)
    uidx = jax.lax.broadcasted_iota(jnp.int32, (B, U, U), 1)
    beats = jnp.logical_or(sv > su, jnp.logical_and(sv == su, vidx < uidx))
    rank = jnp.sum(beats.astype(jnp.int32), axis=-1)                    # (B, U)
    mask_bu = (rank < TOPK).astype(f32)                                 # (B, U)

    # softmax over {real, null} == sigmoid of the score difference
    # (input_dropout is identity at inference)
    p_real = jax.nn.sigmoid(s_real - s_null)                            # (B, U)

    # per-unit scalars repeated across each unit's lane block
    p_rep = jnp.dot(p_real, e_iv, preferred_element_type=f32)           # (B, U*IVS)
    mask_rep_iv = jnp.dot(mask_bu, e_iv, preferred_element_type=f32)    # (B, U*IVS)
    mask_rep_h = jnp.dot(mask_bu, e_h, preferred_element_type=f32)      # (B, U*H)

    val_r_t = jnp.concatenate([val_r] * U, axis=1)                      # (B, U*IVS)
    val_n_t = jnp.concatenate([val_n] * U, axis=1)                      # (1, U*IVS)
    inputs_flat = mask_rep_iv * (p_rep * val_r_t + (1.0 - p_rep) * val_n_t)

    # -------- GroupGRUCell (schema weights pre-mixed, block-diagonal) --------
    # TODO(synk): GroupGRUCell_sharedParameters source is not provided; modeled
    # as per-unit GRU weights mixed from the schema banks via schema_weighting
    # (no bias); Number_active / UnitActivityMask are unused in this forward.
    gx = jnp.dot(inputs_flat, x2h_bd_ref[...], preferred_element_type=f32)  # (B, 3*U*H)
    gh = jnp.dot(h_flat, h2h_bd_ref[...], preferred_element_type=f32)       # (B, 3*U*H)
    UH = U * H
    r = jax.nn.sigmoid(gx[:, :UH] + gh[:, :UH])
    z = jax.nn.sigmoid(gx[:, UH:2 * UH] + gh[:, UH:2 * UH])
    n = jnp.tanh(gx[:, 2 * UH:] + r * gh[:, 2 * UH:])
    h_new_flat = n + z * (h_flat - n)            # blocked_grad = identity forward

    # ------------------- communication attention -----------------------------
    qkv = jnp.dot(h_new_flat, qkvc_bd_ref[...],
                  preferred_element_type=f32)                           # (B, U*QKV_PU)
    for u in range(U):                           # flat -> (B, U, q|k|v) scratch
        qkv3_ref[:, u, :] = qkv[:, u * QKV_PU:(u + 1) * QKV_PU]

    inv_sqrt_ck = 1.0 / math.sqrt(CKS)
    for hh in range(NCH):                        # heads; each batched over B
        q_h = qkv3_ref[:, :, hh * CQS:(hh + 1) * CQS]                    # (B,U,CQS)
        k_h = qkv3_ref[:, :, QPU + hh * CKS:QPU + (hh + 1) * CKS]        # (B,U,CKS)
        v_h = qkv3_ref[:, :, QPU + KPU + hh * CVS:QPU + KPU + (hh + 1) * CVS]
        att = jnp.einsum('buk,bvk->buv', q_h, k_h,
                         preferred_element_type=f32) * inv_sqrt_ck       # (B,U,U)
        att = att - jnp.max(att, axis=-1, keepdims=True)
        ea = jnp.exp(att)
        p = ea * pl.reciprocal(jnp.sum(ea, axis=-1, keepdims=True), approx=True)
        p = p * mask_bu[:, :, None]              # zero query rows of inactive units
        # (comm_dropout is identity at inference)
        ctx3_ref[:, :, hh * CVS:(hh + 1) * CVS] = jnp.einsum(
            'buv,bvd->bud', p, v_h, preferred_element_type=f32)          # (B,U,CVS)

    ctx_flat = jnp.concatenate([ctx3_ref[:, u, :] for u in range(U)], axis=1)  # (B, U*NCH*CVS)
    h_comm_flat = jnp.dot(ctx_flat, out_bd_ref[...],
                          preferred_element_type=f32) + h_new_flat       # (B, U*H)

    # ------------------------------ final blend ------------------------------
    o_ref[...] = (mask_rep_h * h_comm_flat
                  + (1.0 - mask_rep_h) * h_flat).astype(o_ref.dtype)


# -------------------- wrapper-side weight folding (XLA) ----------------------
def _block_diag(w):
    """(U, din, dout) per-unit weights -> (U*din, U*dout) block-diagonal."""
    u, di, do = w.shape
    eye = jnp.eye(u, dtype=w.dtype)
    return jnp.einsum('uv,uij->uivj', eye, w).reshape(u * di, u * do)


def _block_diag_gate_major(w, num_gates):
    """(U, din, num_gates*g) -> (U*din, num_gates*U*g) block-diagonal with
    output columns ordered (gate, unit, g) so GRU gate math stays 2-D flat."""
    u, di, tot = w.shape
    g = tot // num_gates
    w4 = w.reshape(u, di, num_gates, g)
    eye = jnp.eye(u, dtype=w.dtype)
    full = jnp.einsum('uv,uigj->uigvj', eye, w4)        # (U, din, G, U, g)
    return full.reshape(u * di, num_gates * u * g)


def _prepare_weights(p):
    kv_w = jnp.concatenate([p["key_w"], p["val_w"]], axis=1)              # (32, 48)
    kv_b = jnp.concatenate([p["key_b"], p["val_b"]], axis=1)              # (1, 48)
    query_bd = _block_diag(p["query_w"])                                  # (128, 64)
    x2h = jnp.einsum('us,sij->uij', p["schema_w"], p["gru_x2h_w"])        # schema mix
    h2h = jnp.einsum('us,sij->uij', p["schema_w"], p["gru_h2h_w"])
    x2h_bd = _block_diag_gate_major(x2h, 3)                               # (128, 384)
    h2h_bd = _block_diag_gate_major(h2h, 3)                               # (128, 384)
    qkvc = jnp.concatenate([p["qc_w"], p["kc_w"], p["vc_w"]], axis=2)     # (4, 32, 256)
    qkvc_bd = _block_diag(qkvc)                                           # (128, 1024)
    out_bd = _block_diag(p["out_w"])                                      # (512, 128)
    return kv_w, kv_b, query_bd, x2h_bd, h2h_bd, qkvc_bd, out_bd


@jax.jit
def rim_cell_forward(x, hs, params):
    B, one, din = x.shape
    assert one == 1 and din == INPUT_SIZE and hs.shape == (B, NUM_UNITS, HIDDEN)

    weights = _prepare_weights(params)            # batch-invariant, runs under XLA
    x2 = x.reshape(B, INPUT_SIZE)
    h_flat = hs.reshape(B, NUM_UNITS * HIDDEN)    # lane-dense (B, 128)

    qkv_pu = NUM_COMM_HEADS * (COMM_QUERY_SIZE + COMM_KEY_SIZE + COMM_VALUE_SIZE)
    vmem = pl.BlockSpec(memory_space=pltpu.MemorySpace.VMEM)
    out_flat = pl.pallas_call(
        rim_cell_kernel,
        out_shape=jax.ShapeDtypeStruct((B, NUM_UNITS * HIDDEN), jnp.float32),
        in_specs=[vmem] * (2 + len(weights)),
        out_specs=vmem,
        scratch_shapes=[
            pltpu.VMEM((B, NUM_UNITS, qkv_pu), jnp.float32),
            pltpu.VMEM((B, NUM_UNITS, NUM_COMM_HEADS * COMM_VALUE_SIZE), jnp.float32),
        ],
    )(x2, h_flat, *weights)
    # TODO(synk): if this cell is iterated over a sequence, move the timestep
    # loop inside the kernel (hs carried in VMEM / input_output_aliases) to
    # avoid per-step relaunch + hs HBM round-trips.
    return out_flat.reshape(B, NUM_UNITS, HIDDEN)


# ------------------------ deterministic parameters ---------------------------
def init_params(key):
    ks = jax.random.split(key, 12)

    def rnd(k, shape, scale=0.1):
        return scale * jax.random.normal(k, shape, dtype=jnp.float32)

    p = {}
    p["key_w"] = rnd(ks[0], (INPUT_SIZE, NUM_INPUT_HEADS * INPUT_QUERY_SIZE))
    p["key_b"] = rnd(ks[1], (1, NUM_INPUT_HEADS * INPUT_QUERY_SIZE))
    p["val_w"] = rnd(ks[2], (INPUT_SIZE, NUM_INPUT_HEADS * INPUT_VALUE_SIZE))
    p["val_b"] = rnd(ks[3], (1, NUM_INPUT_HEADS * INPUT_VALUE_SIZE))
    p["query_w"] = rnd(ks[4], (NUM_UNITS, HIDDEN, NUM_INPUT_HEADS * INPUT_KEY_SIZE))
    p["schema_w"] = jax.nn.softmax(
        jax.random.normal(ks[5], (NUM_UNITS, NUM_SCHEMAS), dtype=jnp.float32), axis=-1)
    p["gru_x2h_w"] = rnd(ks[6], (NUM_SCHEMAS, INPUT_VALUE_SIZE, 3 * HIDDEN))
    p["gru_h2h_w"] = rnd(ks[7], (NUM_SCHEMAS, HIDDEN, 3 * HIDDEN))
    p["qc_w"] = rnd(ks[8], (NUM_UNITS, HIDDEN, NUM_COMM_HEADS * COMM_QUERY_SIZE))
    p["kc_w"] = rnd(ks[9], (NUM_UNITS, HIDDEN, NUM_COMM_HEADS * COMM_KEY_SIZE))
    p["vc_w"] = rnd(ks[10], (NUM_UNITS, HIDDEN, NUM_COMM_HEADS * COMM_VALUE_SIZE))
    p["out_w"] = rnd(ks[11], (NUM_UNITS, NUM_COMM_HEADS * COMM_VALUE_SIZE, COMM_VALUE_SIZE))
    return p


# -------------------------- pure-JAX reference -------------------------------
def reference_forward(x, hs, p):
    B = x.shape[0]
    x2 = jnp.concatenate([x, jnp.zeros_like(x)], axis=1)                # (B, 2, Din)
    key = x2 @ p["key_w"] + p["key_b"]
    val = x2 @ p["val_w"] + p["val_b"]
    qry = jnp.einsum('bud,udk->buk', hs, p["query_w"])

    key = key.reshape(B, 2, NUM_INPUT_HEADS, INPUT_KEY_SIZE).transpose(0, 2, 1, 3)
    valm = val.reshape(B, 2, NUM_INPUT_HEADS, INPUT_VALUE_SIZE).transpose(0, 2, 1, 3).mean(axis=1)
    qry = qry.reshape(B, NUM_UNITS, NUM_INPUT_HEADS, INPUT_KEY_SIZE).transpose(0, 2, 1, 3)

    scores = jnp.einsum('bhuk,bhnk->bhun', qry, key) / math.sqrt(INPUT_KEY_SIZE)
    scores = scores.mean(axis=1)                                        # (B, U, 2)
    not_null = scores[:, :, 0]
    _, idx = jax.lax.top_k(not_null, TOPK)
    mask = jnp.zeros((B, NUM_UNITS), jnp.float32)
    rows = jnp.repeat(jnp.arange(B), TOPK)
    mask = mask.at[rows, idx.reshape(-1)].set(1.0)

    probs = jax.nn.softmax(scores, axis=-1)
    inputs = jnp.einsum('bun,bnv->buv', probs, valm) * mask[:, :, None]

    x2h = jnp.einsum('us,sij->uij', p["schema_w"], p["gru_x2h_w"])
    h2h = jnp.einsum('us,sij->uij', p["schema_w"], p["gru_h2h_w"])
    gx = jnp.einsum('bui,uij->buj', inputs, x2h)
    gh = jnp.einsum('bui,uij->buj', hs, h2h)
    H = HIDDEN
    i_r, i_i, i_n = gx[..., :H], gx[..., H:2 * H], gx[..., 2 * H:]
    h_r, h_i, h_n = gh[..., :H], gh[..., H:2 * H], gh[..., 2 * H:]
    r = jax.nn.sigmoid(i_r + h_r)
    z = jax.nn.sigmoid(i_i + h_i)
    n = jnp.tanh(i_n + r * h_n)
    h_rnn = n + z * (hs - n)

    h_new = h_rnn
    qc = jnp.einsum('bud,udk->buk', h_new, p["qc_w"]).reshape(
        B, NUM_UNITS, NUM_COMM_HEADS, COMM_QUERY_SIZE).transpose(0, 2, 1, 3)
    kc = jnp.einsum('bud,udk->buk', h_new, p["kc_w"]).reshape(
        B, NUM_UNITS, NUM_COMM_HEADS, COMM_KEY_SIZE).transpose(0, 2, 1, 3)
    vc = jnp.einsum('bud,udk->buk', h_new, p["vc_w"]).reshape(
        B, NUM_UNITS, NUM_COMM_HEADS, COMM_VALUE_SIZE).transpose(0, 2, 1, 3)
    att = jnp.einsum('bhuk,bhvk->bhuv', qc, kc) / math.sqrt(COMM_KEY_SIZE)
    att = jax.nn.softmax(att, axis=-1)
    att = att * mask[:, None, :, None]
    ctx = jnp.einsum('bhuv,bhvd->bhud', att, vc)
    ctx = ctx.transpose(0, 2, 1, 3).reshape(B, NUM_UNITS, NUM_COMM_HEADS * COMM_VALUE_SIZE)
    out = jnp.einsum('bud,udk->buk', ctx, p["out_w"])
    h_comm = out + h_new

    return mask[:, :, None] * h_comm + (1.0 - mask[:, :, None]) * hs


if __name__ == "__main__":
    root = jax.random.PRNGKey(0)
    kx, kh, kp = jax.random.split(root, 3)
    x = jax.random.normal(kx, (BATCH, 1, INPUT_SIZE), dtype=jnp.float32)
    hs = jax.random.normal(kh, (BATCH, NUM_UNITS, HIDDEN), dtype=jnp.float32)
    params = init_params(kp)

    hs_new = jax.block_until_ready(rim_cell_forward(x, hs, params))

    ref = reference_forward(x, hs, params)
    assert hs_new.shape == (BATCH, NUM_UNITS, HIDDEN)
    assert bool(jnp.allclose(hs_new, ref, atol=1e-2, rtol=1e-2))
    print("KERNEL_OK")
</pallas_src>

<mosaic_0001>
module attributes {stable_mosaic.version = 11 : i64} {
  func.func @rim_cell_kernel(%arg0: memref<2x32xf32, #tpu.memory_space<vmem>>, %arg1: memref<2x128xf32, #tpu.memory_space<vmem>>, %arg2: memref<32x48xf32, #tpu.memory_space<vmem>>, %arg3: memref<1x48xf32, #tpu.memory_space<vmem>>, %arg4: memref<128x64xf32, #tpu.memory_space<vmem>>, %arg5: memref<128x384xf32, #tpu.memory_space<vmem>>, %arg6: memref<128x384xf32, #tpu.memory_space<vmem>>, %arg7: memref<128x1024xf32, #tpu.memory_space<vmem>>, %arg8: memref<512x128xf32, #tpu.memory_space<vmem>>, %arg9: memref<2x128xf32, #tpu.memory_space<vmem>>, %arg10: memref<2x4x256xf32, #tpu.memory_space<vmem>>, %arg11: memref<2x4x128xf32, #tpu.memory_space<vmem>>) attributes {dimension_semantics = [], scalar_prefetch = 0 : i64, scratch_operands = 2 : i64, tpu.core_type = #tpu.core_type<tc>} {
    %c0 = arith.constant 0 : index
    %c0_0 = arith.constant 0 : index
    %0 = vector.load %arg0[%c0, %c0_0] : memref<2x32xf32, #tpu.memory_space<vmem>>, vector<2x32xf32>
    %c0_1 = arith.constant 0 : index
    %c0_2 = arith.constant 0 : index
    %1 = vector.load %arg1[%c0_1, %c0_2] : memref<2x128xf32, #tpu.memory_space<vmem>>, vector<2x128xf32>
    %2 = tpu.iota {dimensions = array<i32: 1>} : vector<4x128xi32>
    %3 = tpu.iota {dimensions = array<i32: 0>} : vector<4x128xi32>
    %c32_i32 = arith.constant 32 : i32
    %4 = vector.broadcast %c32_i32 : i32 to vector<4x128xi32>
    %5 = arith.muli %3, %4 : vector<4x128xi32>
    %6 = arith.cmpi sge, %2, %5 : vector<4x128xi32>
    %c32_i32_3 = arith.constant 32 : i32
    %7 = vector.broadcast %c32_i32_3 : i32 to vector<4x128xi32>
    %8 = arith.addi %5, %7 : vector<4x128xi32>
    %9 = arith.cmpi slt, %2, %8 : vector<4x128xi32>
    %10 = arith.andi %6, %9 : vector<4x128xi1>
    %11 = arith.extui %10 : vector<4x128xi1> to vector<4x128xi32>
    %12 = arith.sitofp %11 : vector<4x128xi32> to vector<4x128xf32>
    %13 = tpu.iota {dimensions = array<i32: 1>} : vector<4x128xi32>
    %14 = tpu.iota {dimensions = array<i32: 0>} : vector<4x128xi32>
    %c32_i32_4 = arith.constant 32 : i32
    %15 = vector.broadcast %c32_i32_4 : i32 to vector<4x128xi32>
    %16 = arith.muli %14, %15 : vector<4x128xi32>
    %17 = arith.cmpi sge, %13, %16 : vector<4x128xi32>
    %c32_i32_5 = arith.constant 32 : i32
    %18 = vector.broadcast %c32_i32_5 : i32 to vector<4x128xi32>
    %19 = arith.addi %16, %18 : vector<4x128xi32>
    %20 = arith.cmpi slt, %13, %19 : vector<4x128xi32>
    %21 = arith.andi %17, %20 : vector<4x128xi1>
    %22 = arith.extui %21 : vector<4x128xi1> to vector<4x128xi32>
    %23 = arith.sitofp %22 : vector<4x128xi32> to vector<4x128xf32>
    %24 = tpu.iota {dimensions = array<i32: 0>} : vector<64x4xi32>
    %25 = tpu.iota {dimensions = array<i32: 1>} : vector<64x4xi32>
    %c16_i32 = arith.constant 16 : i32
    %26 = vector.broadcast %c16_i32 : i32 to vector<64x4xi32>
    %27 = arith.muli %25, %26 : vector<64x4xi32>
    %28 = arith.cmpi sge, %24, %27 : vector<64x4xi32>
    %c16_i32_6 = arith.constant 16 : i32
    %29 = vector.broadcast %c16_i32_6 : i32 to vector<64x4xi32>
    %30 = arith.addi %27, %29 : vector<64x4xi32>
    %31 = arith.cmpi slt, %24, %30 : vector<64x4xi32>
    %32 = arith.andi %28, %31 : vector<64x4xi1>
    %33 = arith.extui %32 : vector<64x4xi1> to vector<64x4xi32>
    %34 = arith.sitofp %33 : vector<64x4xi32> to vector<64x4xf32>
    %c0_7 = arith.constant 0 : index
    %c0_8 = arith.constant 0 : index
    %35 = vector.load %arg3[%c0_7, %c0_8] : memref<1x48xf32, #tpu.memory_space<vmem>>, vector<1x48xf32>
    %c0_9 = arith.constant 0 : index
    %c0_10 = arith.constant 0 : index
    %36 = vector.load %arg2[%c0_9, %c0_10] : memref<32x48xf32, #tpu.memory_space<vmem>>, vector<32x48xf32>
    %cst = arith.constant dense<0.000000e+00> : vector<2x48xf32>
    %37 = tpu.matmul %0, %36, %cst {dimension_numbers = #tpu.dot_dimension_numbers<[1], [0], [0], [1], [0, 0, 1, 1], [], []>} : vector<2x32xf32>, vector<32x48xf32>, vector<2x48xf32> -> vector<2x48xf32>
    %38 = vector.broadcast %35 : vector<1x48xf32> to vector<2x48xf32>
    %39 = arith.addf %37, %38 : vector<2x48xf32>
    %40 = vector.extract_strided_slice %39 {offsets = [0, 0], sizes = [2, 16], strides = [1, 1]} : vector<2x48xf32> to vector<2x16xf32>
    %41 = vector.extract_strided_slice %39 {offsets = [0, 16], sizes = [2, 32], strides = [1, 1]} : vector<2x48xf32> to vector<2x32xf32>
    %42 = vector.extract_strided_slice %35 {offsets = [0, 0], sizes = [1, 16], strides = [1, 1]} : vector<1x48xf32> to vector<1x16xf32>
    %43 = vector.extract_strided_slice %35 {offsets = [0, 16], sizes = [1, 32], strides = [1, 1]} : vector<1x48xf32> to vector<1x32xf32>
    %c0_11 = arith.constant 0 : index
    %c0_12 = arith.constant 0 : index
    %44 = vector.load %arg4[%c0_11, %c0_12] : memref<128x64xf32, #tpu.memory_space<vmem>>, vector<128x64xf32>
    %cst_13 = arith.constant dense<0.000000e+00> : vector<2x64xf32>
    %45 = tpu.matmul %1, %44, %cst_13 {dimension_numbers = #tpu.dot_dimension_numbers<[1], [0], [0], [1], [0, 0, 1, 1], [], []>} : vector<2x128xf32>, vector<128x64xf32>, vector<2x64xf32> -> vector<2x64xf32>
    %46 = tpu.concatenate %40, %40, %40, %40 in 1 : vector<2x16xf32>, vector<2x16xf32>, vector<2x16xf32>, vector<2x16xf32> -> vector<2x64xf32>
    %47 = tpu.concatenate %42, %42, %42, %42 in 1 : vector<1x16xf32>, vector<1x16xf32>, vector<1x16xf32>, vector<1x16xf32> -> vector<1x64xf32>
    %48 = arith.mulf %45, %46 : vector<2x64xf32>
    %cst_14 = arith.constant dense<0.000000e+00> : vector<2x4xf32>
    %49 = tpu.matmul %48, %34, %cst_14 {dimension_numbers = #tpu.dot_dimension_numbers<[1], [0], [0], [1], [0, 0, 1, 1], [], []>} : vector<2x64xf32>, vector<64x4xf32>, vector<2x4xf32> -> vector<2x4xf32>
    %cst_15 = arith.constant 2.500000e-01 : f32
    %50 = vector.broadcast %cst_15 : f32 to vector<2x4xf32>
    %51 = arith.mulf %49, %50 : vector<2x4xf32>
    %52 = vector.broadcast %47 : vector<1x64xf32> to vector<2x64xf32>
    %53 = arith.mulf %45, %52 : vector<2x64xf32>
    %cst_16 = arith.constant dense<0.000000e+00> : vector<2x4xf32>
    %54 = tpu.matmul %53, %34, %cst_16 {dimension_numbers = #tpu.dot_dimension_numbers<[1], [0], [0], [1], [0, 0, 1, 1], [], []>} : vector<2x64xf32>, vector<64x4xf32>, vector<2x4xf32> -> vector<2x4xf32>
    %cst_17 = arith.constant 2.500000e-01 : f32
    %55 = vector.broadcast %cst_17 : f32 to vector<2x4xf32>
    %56 = arith.mulf %54, %55 : vector<2x4xf32>
    %57 = vector.shape_cast %51 : vector<2x4xf32> to vector<2x1x4xf32>
    %58 = vector.shape_cast %51 : vector<2x4xf32> to vector<2x4x1xf32>
    %59 = tpu.iota {dimensions = array<i32: 2>} : vector<2x4x4xi32>
    %60 = tpu.iota {dimensions = array<i32: 1>} : vector<2x4x4xi32>
    %61 = vector.broadcast %57 : vector<2x1x4xf32> to vector<2x4x4xf32>
    %62 = vector.broadcast %58 : vector<2x4x1xf32> to vector<2x4x4xf32>
    %63 = arith.cmpf ogt, %61, %62 : vector<2x4x4xf32>
    %64 = vector.broadcast %57 : vector<2x1x4xf32> to vector<2x4x4xf32>
    %65 = vector.broadcast %58 : vector<2x4x1xf32> to vector<2x4x4xf32>
    %66 = arith.cmpf oeq, %64, %65 : vector<2x4x4xf32>
    %67 = arith.cmpi slt, %59, %60 : vector<2x4x4xi32>
    %68 = arith.andi %66, %67 : vector<2x4x4xi1>
    %69 = arith.ori %63, %68 : vector<2x4x4xi1>
    %70 = arith.extui %69 : vector<2x4x4xi1> to vector<2x4x4xi32>
    %cst_18 = arith.constant dense<0> : vector<2x4xi32>
    %71 = vector.multi_reduction <add>, %70, %cst_18 [2] : vector<2x4x4xi32> to vector<2x4xi32>
    %c2_i32 = arith.constant 2 : i32
    %72 = vector.broadcast %c2_i32 : i32 to vector<2x4xi32>
    %73 = arith.cmpi slt, %71, %72 : vector<2x4xi32>
    %74 = arith.extui %73 : vector<2x4xi1> to vector<2x4xi32>
    %75 = arith.sitofp %74 : vector<2x4xi32> to vector<2x4xf32>
    %76 = arith.subf %51, %56 : vector<2x4xf32>
    %77 = arith.negf %76 : vector<2x4xf32>
    %78 = math.exp %77 : vector<2x4xf32>
    %cst_19 = arith.constant 1.000000e+00 : f32
    %79 = vector.broadcast %cst_19 : f32 to vector<2x4xf32>
    %80 = arith.addf %79, %78 : vector<2x4xf32>
    %81 = arith.divf %79, %80 : vector<2x4xf32>
    %cst_20 = arith.constant dense<0.000000e+00> : vector<2x128xf32>
    %82 = tpu.matmul %81, %12, %cst_20 {dimension_numbers = #tpu.dot_dimension_numbers<[1], [0], [0], [1], [0, 0, 1, 1], [], []>} : vector<2x4xf32>, vector<4x128xf32>, vector<2x128xf32> -> vector<2x128xf32>
    %cst_21 = arith.constant dense<0.000000e+00> : vector<2x128xf32>
    %83 = tpu.matmul %75, %12, %cst_21 {dimension_numbers = #tpu.dot_dimension_numbers<[1], [0], [0], [1], [0, 0, 1, 1], [], []>} : vector<2x4xf32>, vector<4x128xf32>, vector<2x128xf32> -> vector<2x128xf32>
    %cst_22 = arith.constant dense<0.000000e+00> : vector<2x128xf32>
    %84 = tpu.matmul %75, %23, %cst_22 {dimension_numbers = #tpu.dot_dimension_numbers<[1], [0], [0], [1], [0, 0, 1, 1], [], []>} : vector<2x4xf32>, vector<4x128xf32>, vector<2x128xf32> -> vector<2x128xf32>
    %85 = tpu.concatenate %41, %41, %41, %41 in 1 : vector<2x32xf32>, vector<2x32xf32>, vector<2x32xf32>, vector<2x32xf32> -> vector<2x128xf32>
    %86 = tpu.concatenate %43, %43, %43, %43 in 1 : vector<1x32xf32>, vector<1x32xf32>, vector<1x32xf32>, vector<1x32xf32> -> vector<1x128xf32>
    %87 = arith.mulf %82, %85 : vector<2x128xf32>
    %cst_23 = arith.constant 1.000000e+00 : f32
    %88 = vector.broadcast %cst_23 : f32 to vector<2x128xf32>
    %89 = arith.subf %88, %82 : vector<2x128xf32>
    %90 = vector.broadcast %86 : vector<1x128xf32> to vector<2x128xf32>
    %91 = arith.mulf %89, %90 : vector<2x128xf32>
    %92 = arith.addf %87, %91 : vector<2x128xf32>
    %93 = arith.mulf %83, %92 : vector<2x128xf32>
    %c0_24 = arith.constant 0 : index
    %c0_25 = arith.constant 0 : index
    %94 = vector.load %arg5[%c0_24, %c0_25] : memref<128x384xf32, #tpu.memory_space<vmem>>, vector<128x384xf32>
    %cst_26 = arith.constant dense<0.000000e+00> : vector<2x384xf32>
    %95 = tpu.matmul %93, %94, %cst_26 {dimension_numbers = #tpu.dot_dimension_numbers<[1], [0], [0], [1], [0, 0, 1, 1], [], []>} : vector<2x128xf32>, vector<128x384xf32>, vector<2x384xf32> -> vector<2x384xf32>
    %c0_27 = arith.constant 0 : index
    %c0_28 = arith.constant 0 : index
    %96 = vector.load %arg6[%c0_27, %c0_28] : memref<128x384xf32, #tpu.memory_space<vmem>>, vector<128x384xf32>
    %cst_29 = arith.constant dense<0.000000e+00> : vector<2x384xf32>
    %97 = tpu.matmul %1, %96, %cst_29 {dimension_numbers = #tpu.dot_dimension_numbers<[1], [0], [0], [1], [0, 0, 1, 1], [], []>} : vector<2x128xf32>, vector<128x384xf32>, vector<2x384xf32> -> vector<2x384xf32>
    %98 = vector.extract_strided_slice %95 {offsets = [0, 0], sizes = [2, 128], strides = [1, 1]} : vector<2x384xf32> to vector<2x128xf32>
    %99 = vector.extract_strided_slice %97 {offsets = [0, 0], sizes = [2, 128], strides = [1, 1]} : vector<2x384xf32> to vector<2x128xf32>
    %100 = arith.addf %98, %99 : vector<2x128xf32>
    %101 = arith.negf %100 : vector<2x128xf32>
    %102 = math.exp %101 : vector<2x128xf32>
    %cst_30 = arith.constant 1.000000e+00 : f32
    %103 = vector.broadcast %cst_30 : f32 to vector<2x128xf32>
    %104 = arith.addf %103, %102 : vector<2x128xf32>
    %105 = arith.divf %103, %104 : vector<2x128xf32>
    %106 = vector.extract_strided_slice %95 {offsets = [0, 128], sizes = [2, 128], strides = [1, 1]} : vector<2x384xf32> to vector<2x128xf32>
    %107 = vector.extract_strided_slice %97 {offsets = [0, 128], sizes = [2, 128], strides = [1, 1]} : vector<2x384xf32> to vector<2x128xf32>
    %108 = arith.addf %106, %107 : vector<2x128xf32>
    %109 = arith.negf %108 : vector<2x128xf32>
    %110 = math.exp %109 : vector<2x128xf32>
    %cst_31 = arith.constant 1.000000e+00 : f32
    %111 = vector.broadcast %cst_31 : f32 to vector<2x128xf32>
    %112 = arith.addf %111, %110 : vector<2x128xf32>
    %113 = arith.divf %111, %112 : vector<2x128xf32>
    %114 = vector.extract_strided_slice %95 {offsets = [0, 256], sizes = [2, 128], strides = [1, 1]} : vector<2x384xf32> to vector<2x128xf32>
    %115 = vector.extract_strided_slice %97 {offsets = [0, 256], sizes = [2, 128], strides = [1, 1]} : vector<2x384xf32> to vector<2x128xf32>
    %116 = arith.mulf %105, %115 : vector<2x128xf32>
    %117 = arith.addf %114, %116 : vector<2x128xf32>
    %118 = math.tanh %117 : vector<2x128xf32>
    %119 = arith.subf %1, %118 : vector<2x128xf32>
    %120 = arith.mulf %113, %119 : vector<2x128xf32>
    %121 = arith.addf %118, %120 : vector<2x128xf32>
    %c0_32 = arith.constant 0 : index
    %c0_33 = arith.constant 0 : index
    %122 = vector.load %arg7[%c0_32, %c0_33] : memref<128x1024xf32, #tpu.memory_space<vmem>>, vector<128x1024xf32>
    %cst_34 = arith.constant dense<0.000000e+00> : vector<2x1024xf32>
    %123 = tpu.matmul %121, %122, %cst_34 {dimension_numbers = #tpu.dot_dimension_numbers<[1], [0], [0], [1], [0, 0, 1, 1], [], []>} : vector<2x128xf32>, vector<128x1024xf32>, vector<2x1024xf32> -> vector<2x1024xf32>
    %124 = vector.extract_strided_slice %123 {offsets = [0, 0], sizes = [2, 256], strides = [1, 1]} : vector<2x1024xf32> to vector<2x256xf32>
    %c0_35 = arith.constant 0 : index
    %c0_36 = arith.constant 0 : index
    %c0_37 = arith.constant 0 : index
    %125 = vector.load %arg10[%c0_35, %c0_36, %c0_37] : memref<2x4x256xf32, #tpu.memory_space<vmem>>, vector<2x1x256xf32>
    %126 = vector.shape_cast %125 : vector<2x1x256xf32> to vector<2x256xf32>
    %127 = vector.shape_cast %124 : vector<2x256xf32> to vector<2x1x256xf32>
    tpu.vector_store %arg10[%c0_35, %c0_36, %c0_37], %127 {strides = array<i32>} : memref<2x4x256xf32, #tpu.memory_space<vmem>>, vector<2x1x256xf32>,
    %128 = vector.extract_strided_slice %123 {offsets = [0, 256], sizes = [2, 256], strides = [1, 1]} : vector<2x1024xf32> to vector<2x256xf32>
    %c0_38 = arith.constant 0 : index
    %c1 = arith.constant 1 : index
    %c0_39 = arith.constant 0 : index
    %129 = vector.load %arg10[%c0_38, %c1, %c0_39] : memref<2x4x256xf32, #tpu.memory_space<vmem>>, vector<2x1x256xf32>
    %130 = vector.shape_cast %129 : vector<2x1x256xf32> to vector<2x256xf32>
    %131 = vector.shape_cast %128 : vector<2x256xf32> to vector<2x1x256xf32>
    tpu.vector_store %arg10[%c0_38, %c1, %c0_39], %131 {strides = array<i32>} : memref<2x4x256xf32, #tpu.memory_space<vmem>>, vector<2x1x256xf32>,
    %132 = vector.extract_strided_slice %123 {offsets = [0, 512], sizes = [2, 256], strides = [1, 1]} : vector<2x1024xf32> to vector<2x256xf32>
    %c0_40 = arith.constant 0 : index
    %c2 = arith.constant 2 : index
    %c0_41 = arith.constant 0 : index
    %133 = vector.load %arg10[%c0_40, %c2, %c0_41] : memref<2x4x256xf32, #tpu.memory_space<vmem>>, vector<2x1x256xf32>
    %134 = vector.shape_cast %133 : vector<2x1x256xf32> to vector<2x256xf32>
    %135 = vector.shape_cast %132 : vector<2x256xf32> to vector<2x1x256xf32>
    tpu.vector_store %arg10[%c0_40, %c2, %c0_41], %135 {strides = array<i32>} : memref<2x4x256xf32, #tpu.memory_space<vmem>>, vector<2x1x256xf32>,
    %136 = vector.extract_strided_slice %123 {offsets = [0, 768], sizes = [2, 256], strides = [1, 1]} : vector<2x1024xf32> to vector<2x256xf32>
    %c0_42 = arith.constant 0 : index
    %c3 = arith.constant 3 : index
    %c0_43 = arith.constant 0 : index
    %137 = vector.load %arg10[%c0_42, %c3, %c0_43] : memref<2x4x256xf32, #tpu.memory_space<vmem>>, vector<2x1x256xf32>
    %138 = vector.shape_cast %137 : vector<2x1x256xf32> to vector<2x256xf32>
    %139 = vector.shape_cast %136 : vector<2x256xf32> to vector<2x1x256xf32>
    tpu.vector_store %arg10[%c0_42, %c3, %c0_43], %139 {strides = array<i32>} : memref<2x4x256xf32, #tpu.memory_space<vmem>>, vector<2x1x256xf32>,
    %c0_44 = arith.constant 0 : index
    %c0_45 = arith.constant 0 : index
    %c0_46 = arith.constant 0 : index
    %140 = vector.load %arg10[%c0_44, %c0_45, %c0_46] : memref<2x4x256xf32, #tpu.memory_space<vmem>>, vector<2x4x16xf32>
    %c0_47 = arith.constant 0 : index
    %c0_48 = arith.constant 0 : index
    %c64 = arith.constant 64 : index
    %141 = vector.load %arg10[%c0_47, %c0_48, %c64] : memref<2x4x256xf32, #tpu.memory_space<vmem>>, vector<2x4x16xf32>
    %c0_49 = arith.constant 0 : index
    %c0_50 = arith.constant 0 : index
    %c128 = arith.constant 128 : index
    %142 = vector.load %arg10[%c0_49, %c0_50, %c128] : memref<2x4x256xf32, #tpu.memory_space<vmem>>, vector<2x4x32xf32>
    "tpu.trace_start"() <{level = 10 : i32, message = "buk,bvk->buv"}> : () -> ()
    %cst_51 = arith.constant dense<0.000000e+00> : vector<2x4x4xf32>
    %143 = tpu.matmul %140, %141, %cst_51 {dimension_numbers = #tpu.dot_dimension_numbers<[2], [2], [1], [1], [0, 0, 0, 1, 1, 1], [0], [0]>} : vector<2x4x16xf32>, vector<2x4x16xf32>, vector<2x4x4xf32> -> vector<2x4x4xf32>
    "tpu.trace_stop"() : () -> ()
    %cst_52 = arith.constant 2.500000e-01 : f32
    %144 = vector.broadcast %cst_52 : f32 to vector<2x4x4xf32>
    %145 = arith.mulf %143, %144 : vector<2x4x4xf32>
    %cst_53 = arith.constant dense<0xFF800000> : vector<2x4xf32>
    %146 = vector.multi_reduction <maximumf>, %145, %cst_53 [2] : vector<2x4x4xf32> to vector<2x4xf32>
    %147 = vector.shape_cast %146 : vector<2x4xf32> to vector<2x4x1xf32>
    %148 = vector.broadcast %147 : vector<2x4x1xf32> to vector<2x4x4xf32>
    %149 = arith.subf %145, %148 : vector<2x4x4xf32>
    %150 = math.exp %149 : vector<2x4x4xf32>
    %cst_54 = arith.constant dense<0.000000e+00> : vector<2x4xf32>
    %151 = vector.multi_reduction <add>, %150, %cst_54 [2] : vector<2x4x4xf32> to vector<2x4xf32>
    %152 = vector.shape_cast %151 : vector<2x4xf32> to vector<2x4x1xf32>
    %153 = tpu.reciprocal %152 {approx = true} : vector<2x4x1xf32> -> vector<2x4x1xf32>
    %154 = vector.broadcast %153 : vector<2x4x1xf32> to vector<2x4x4xf32>
    %155 = arith.mulf %150, %154 : vector<2x4x4xf32>
    %156 = vector.shape_cast %75 : vector<2x4xf32> to vector<2x4x1xf32>
    %157 = vector.broadcast %156 : vector<2x4x1xf32> to vector<2x4x4xf32>
    %158 = arith.mulf %155, %157 : vector<2x4x4xf32>
    "tpu.trace_start"() <{level = 10 : i32, message = "buv,bvd->bud"}> : () -> ()
    %cst_55 = arith.constant dense<0.000000e+00> : vector<2x4x32xf32>
    %159 = tpu.matmul %158, %142, %cst_55 {dimension_numbers = #tpu.dot_dimension_numbers<[2], [1], [1], [2], [0, 0, 0, 1, 1, 2], [0], [0]>} : vector<2x4x4xf32>, vector<2x4x32xf32>, vector<2x4x32xf32> -> vector<2x4x32xf32>
    "tpu.trace_stop"() : () -> ()
    %c0_56 = arith.constant 0 : index
    %c0_57 = arith.constant 0 : index
    %c0_58 = arith.constant 0 : index
    %160 = vector.load %arg11[%c0_56, %c0_57, %c0_58] : memref<2x4x128xf32, #tpu.memory_space<vmem>>, vector<2x4x32xf32>
    tpu.vector_store %arg11[%c0_56, %c0_57, %c0_58], %159 {strides = array<i32>} : memref<2x4x128xf32, #tpu.memory_space<vmem>>, vector<2x4x32xf32>,
    %c0_59 = arith.constant 0 : index
    %c0_60 = arith.constant 0 : index
    %c16 = arith.constant 16 : index
    %161 = vector.load %arg10[%c0_59, %c0_60, %c16] : memref<2x4x256xf32, #tpu.memory_space<vmem>>, vector<2x4x16xf32>
    %c0_61 = arith.constant 0 : index
    %c0_62 = arith.constant 0 : index
    %c80 = arith.constant 80 : index
    %162 = vector.load %arg10[%c0_61, %c0_62, %c80] : memref<2x4x256xf32, #tpu.memory_space<vmem>>, vector<2x4x16xf32>
    %c0_63 = arith.constant 0 : index
    %c0_64 = arith.constant 0 : index
    %c160 = arith.constant 160 : index
    %163 = vector.load %arg10[%c0_63, %c0_64, %c160] : memref<2x4x256xf32, #tpu.memory_space<vmem>>, vector<2x4x32xf32>
    "tpu.trace_start"() <{level = 10 : i32, message = "buk,bvk->buv"}> : () -> ()
    %cst_65 = arith.constant dense<0.000000e+00> : vector<2x4x4xf32>
    %164 = tpu.matmul %161, %162, %cst_65 {dimension_numbers = #tpu.dot_dimension_numbers<[2], [2], [1], [1], [0, 0, 0, 1, 1, 1], [0], [0]>} : vector<2x4x16xf32>, vector<2x4x16xf32>, vector<2x4x4xf32> -> vector<2x4x4xf32>
    "tpu.trace_stop"() : () -> ()
    %cst_66 = arith.constant 2.500000e-01 : f32
    %165 = vector.broadcast %cst_66 : f32 to vector<2x4x4xf32>
    %166 = arith.mulf %164, %165 : vector<2x4x4xf32>
    %cst_67 = arith.constant dense<0xFF800000> : vector<2x4xf32>
    %167 = vector.multi_reduction <maximumf>, %166, %cst_67 [2] : vector<2x4x4xf32> to vector<2x4xf32>
    %168 = vector.shape_cast %167 : vector<2x4xf32> to vector<2x4x1xf32>
    %169 = vector.broadcast %168 : vector<2x4x1xf32> to vector<2x4x4xf32>
    %170 = arith.subf %166, %169 : vector<2x4x4xf32>
    %171 = math.exp %170 : vector<2x4x4xf32>
    %cst_68 = arith.constant dense<0.000000e+00> : vector<2x4xf32>
    %172 = vector.multi_reduction <add>, %171, %cst_68 [2] : vector<2x4x4xf32> to vector<2x4xf32>
    %173 = vector.shape_cast %172 : vector<2x4xf32> to vector<2x4x1xf32>
    %174 = tpu.reciprocal %173 {approx = true} : vector<2x4x1xf32> -> vector<2x4x1xf32>
    %175 = vector.broadcast %174 : vector<2x4x1xf32> to vector<2x4x4xf32>
    %176 = arith.mulf %171, %175 : vector<2x4x4xf32>
    %177 = vector.shape_cast %75 : vector<2x4xf32> to vector<2x4x1xf32>
    %178 = vector.broadcast %177 : vector<2x4x1xf32> to vector<2x4x4xf32>
    %179 = arith.mulf %176, %178 : vector<2x4x4xf32>
    "tpu.trace_start"() <{level = 10 : i32, message = "buv,bvd->bud"}> : () -> ()
    %cst_69 = arith.constant dense<0.000000e+00> : vector<2x4x32xf32>
    %180 = tpu.matmul %179, %163, %cst_69 {dimension_numbers = #tpu.dot_dimension_numbers<[2], [1], [1], [2], [0, 0, 0, 1, 1, 2], [0], [0]>} : vector<2x4x4xf32>, vector<2x4x32xf32>, vector<2x4x32xf32> -> vector<2x4x32xf32>
    "tpu.trace_stop"() : () -> ()
    %c0_70 = arith.constant 0 : index
    %c0_71 = arith.constant 0 : index
    %c32 = arith.constant 32 : index
    %181 = vector.load %arg11[%c0_70, %c0_71, %c32] : memref<2x4x128xf32, #tpu.memory_space<vmem>>, vector<2x4x32xf32>
    tpu.vector_store %arg11[%c0_70, %c0_71, %c32], %180 {strides = array<i32>} : memref<2x4x128xf32, #tpu.memory_space<vmem>>, vector<2x4x32xf32>,
    %c0_72 = arith.constant 0 : index
    %c0_73 = arith.constant 0 : index
    %c32_74 = arith.constant 32 : index
    %182 = vector.load %arg10[%c0_72, %c0_73, %c32_74] : memref<2x4x256xf32, #tpu.memory_space<vmem>>, vector<2x4x16xf32>
    %c0_75 = arith.constant 0 : index
    %c0_76 = arith.constant 0 : index
    %c96 = arith.constant 96 : index
    %183 = vector.load %arg10[%c0_75, %c0_76, %c96] : memref<2x4x256xf32, #tpu.memory_space<vmem>>, vector<2x4x16xf32>
    %c0_77 = arith.constant 0 : index
    %c0_78 = arith.constant 0 : index
    %c192 = arith.constant 192 : index
    %184 = vector.load %arg10[%c0_77, %c0_78, %c192] : memref<2x4x256xf32, #tpu.memory_space<vmem>>, vector<2x4x32xf32>
    "tpu.trace_start"() <{level = 10 : i32, message = "buk,bvk->buv"}> : () -> ()
    %cst_79 = arith.constant dense<0.000000e+00> : vector<2x4x4xf32>
    %185 = tpu.matmul %182, %183, %cst_79 {dimension_numbers = #tpu.dot_dimension_numbers<[2], [2], [1], [1], [0, 0, 0, 1, 1, 1], [0], [0]>} : vector<2x4x16xf32>, vector<2x4x16xf32>, vector<2x4x4xf32> -> vector<2x4x4xf32>
    "tpu.trace_stop"() : () -> ()
    %cst_80 = arith.constant 2.500000e-01 : f32
    %186 = vector.broadcast %cst_80 : f32 to vector<2x4x4xf32>
    %187 = arith.mulf %185, %186 : vector<2x4x4xf32>
    %cst_81 = arith.constant dense<0xFF800000> : vector<2x4xf32>
    %188 = vector.multi_reduction <maximumf>, %187, %cst_81 [2] : vector<2x4x4xf32> to vector<2x4xf32>
    %189 = vector.shape_cast %188 : vector<2x4xf32> to vector<2x4x1xf32>
    %190 = vector.broadcast %189 : vector<2x4x1xf32> to vector<2x4x4xf32>
    %191 = arith.subf %187, %190 : vector<2x4x4xf32>
    %192 = math.exp %191 : vector<2x4x4xf32>
    %cst_82 = arith.constant dense<0.000000e+00> : vector<2x4xf32>
    %193 = vector.multi_reduction <add>, %192, %cst_82 [2] : vector<2x4x4xf32> to vector<2x4xf32>
    %194 = vector.shape_cast %193 : vector<2x4xf32> to vector<2x4x1xf32>
    %195 = tpu.reciprocal %194 {approx = true} : vector<2x4x1xf32> -> vector<2x4x1xf32>
    %196 = vector.broadcast %195 : vector<2x4x1xf32> to vector<2x4x4xf32>
    %197 = arith.mulf %192, %196 : vector<2x4x4xf32>
    %198 = vector.shape_cast %75 : vector<2x4xf32> to vector<2x4x1xf32>
    %199 = vector.broadcast %198 : vector<2x4x1xf32> to vector<2x4x4xf32>
    %200 = arith.mulf %197, %199 : vector<2x4x4xf32>
    "tpu.trace_start"() <{level = 10 : i32, message = "buv,bvd->bud"}> : () -> ()
    %cst_83 = arith.constant dense<0.000000e+00> : vector<2x4x32xf32>
    %201 = tpu.matmul %200, %184, %cst_83 {dimension_numbers = #tpu.dot_dimension_numbers<[2], [1], [1], [2], [0, 0, 0, 1, 1, 2], [0], [0]>} : vector<2x4x4xf32>, vector<2x4x32xf32>, vector<2x4x32xf32> -> vector<2x4x32xf32>
    "tpu.trace_stop"() : () -> ()
    %c0_84 = arith.constant 0 : index
    %c0_85 = arith.constant 0 : index
    %c64_86 = arith.constant 64 : index
    %202 = vector.load %arg11[%c0_84, %c0_85, %c64_86] : memref<2x4x128xf32, #tpu.memory_space<vmem>>, vector<2x4x32xf32>
    tpu.vector_store %arg11[%c0_84, %c0_85, %c64_86], %201 {strides = array<i32>} : memref<2x4x128xf32, #tpu.memory_space<vmem>>, vector<2x4x32xf32>,
    %c0_87 = arith.constant 0 : index
    %c0_88 = arith.constant 0 : index
    %c48 = arith.constant 48 : index
    %203 = vector.load %arg10[%c0_87, %c0_88, %c48] : memref<2x4x256xf32, #tpu.memory_space<vmem>>, vector<2x4x16xf32>
    %c0_89 = arith.constant 0 : index
    %c0_90 = arith.constant 0 : index
    %c112 = arith.constant 112 : index
    %204 = vector.load %arg10[%c0_89, %c0_90, %c112] : memref<2x4x256xf32, #tpu.memory_space<vmem>>, vector<2x4x16xf32>
    %c0_91 = arith.constant 0 : index
    %c0_92 = arith.constant 0 : index
    %c224 = arith.constant 224 : index
    %205 = vector.load %arg10[%c0_91, %c0_92, %c224] : memref<2x4x256xf32, #tpu.memory_space<vmem>>, vector<2x4x32xf32>
    "tpu.trace_start"() <{level = 10 : i32, message = "buk,bvk->buv"}> : () -> ()
    %cst_93 = arith.constant dense<0.000000e+00> : vector<2x4x4xf32>
    %206 = tpu.matmul %203, %204, %cst_93 {dimension_numbers = #tpu.dot_dimension_numbers<[2], [2], [1], [1], [0, 0, 0, 1, 1, 1], [0], [0]>} : vector<2x4x16xf32>, vector<2x4x16xf32>, vector<2x4x4xf32> -> vector<2x4x4xf32>
    "tpu.trace_stop"() : () -> ()
    %cst_94 = arith.constant 2.500000e-01 : f32
    %207 = vector.broadcast %cst_94 : f32 to vector<2x4x4xf32>
    %208 = arith.mulf %206, %207 : vector<2x4x4xf32>
    %cst_95 = arith.constant dense<0xFF800000> : vector<2x4xf32>
    %209 = vector.multi_reduction <maximumf>, %208, %cst_95 [2] : vector<2x4x4xf32> to vector<2x4xf32>
    %210 = vector.shape_cast %209 : vector<2x4xf32> to vector<2x4x1xf32>
    %211 = vector.broadcast %210 : vector<2x4x1xf32> to vector<2x4x4xf32>
    %212 = arith.subf %208, %211 : vector<2x4x4xf32>
    %213 = math.exp %212 : vector<2x4x4xf32>
    %cst_96 = arith.constant dense<0.000000e+00> : vector<2x4xf32>
    %214 = vector.multi_reduction <add>, %213, %cst_96 [2] : vector<2x4x4xf32> to vector<2x4xf32>
    %215 = vector.shape_cast %214 : vector<2x4xf32> to vector<2x4x1xf32>
    %216 = tpu.reciprocal %215 {approx = true} : vector<2x4x1xf32> -> vector<2x4x1xf32>
    %217 = vector.broadcast %216 : vector<2x4x1xf32> to vector<2x4x4xf32>
    %218 = arith.mulf %213, %217 : vector<2x4x4xf32>
    %219 = vector.shape_cast %75 : vector<2x4xf32> to vector<2x4x1xf32>
    %220 = vector.broadcast %219 : vector<2x4x1xf32> to vector<2x4x4xf32>
    %221 = arith.mulf %218, %220 : vector<2x4x4xf32>
    "tpu.trace_start"() <{level = 10 : i32, message = "buv,bvd->bud"}> : () -> ()
    %cst_97 = arith.constant dense<0.000000e+00> : vector<2x4x32xf32>
    %222 = tpu.matmul %221, %205, %cst_97 {dimension_numbers = #tpu.dot_dimension_numbers<[2], [1], [1], [2], [0, 0, 0, 1, 1, 2], [0], [0]>} : vector<2x4x4xf32>, vector<2x4x32xf32>, vector<2x4x32xf32> -> vector<2x4x32xf32>
    "tpu.trace_stop"() : () -> ()
    %c0_98 = arith.constant 0 : index
    %c0_99 = arith.constant 0 : index
    %c96_100 = arith.constant 96 : index
    %223 = vector.load %arg11[%c0_98, %c0_99, %c96_100] : memref<2x4x128xf32, #tpu.memory_space<vmem>>, vector<2x4x32xf32>
    tpu.vector_store %arg11[%c0_98, %c0_99, %c96_100], %222 {strides = array<i32>} : memref<2x4x128xf32, #tpu.memory_space<vmem>>, vector<2x4x32xf32>,
    %c0_101 = arith.constant 0 : index
    %c0_102 = arith.constant 0 : index
    %c0_103 = arith.constant 0 : index
    %224 = vector.load %arg11[%c0_101, %c0_102, %c0_103] : memref<2x4x128xf32, #tpu.memory_space<vmem>>, vector<2x1x128xf32>
    %225 = vector.shape_cast %224 : vector<2x1x128xf32> to vector<2x128xf32>
    %c0_104 = arith.constant 0 : index
    %c1_105 = arith.constant 1 : index
    %c0_106 = arith.constant 0 : index
    %226 = vector.load %arg11[%c0_104, %c1_105, %c0_106] : memref<2x4x128xf32, #tpu.memory_space<vmem>>, vector<2x1x128xf32>
    %227 = vector.shape_cast %226 : vector<2x1x128xf32> to vector<2x128xf32>
    %c0_107 = arith.constant 0 : index
    %c2_108 = arith.constant 2 : index
    %c0_109 = arith.constant 0 : index
    %228 = vector.load %arg11[%c0_107, %c2_108, %c0_109] : memref<2x4x128xf32, #tpu.memory_space<vmem>>, vector<2x1x128xf32>
    %229 = vector.shape_cast %228 : vector<2x1x128xf32> to vector<2x128xf32>
    %c0_110 = arith.constant 0 : index
    %c3_111 = arith.constant 3 : index
    %c0_112 = arith.constant 0 : index
    %230 = vector.load %arg11[%c0_110, %c3_111, %c0_112] : memref<2x4x128xf32, #tpu.memory_space<vmem>>, vector<2x1x128xf32>
    %231 = vector.shape_cast %230 : vector<2x1x128xf32> to vector<2x128xf32>
    %232 = tpu.concatenate %225, %227, %229, %231 in 1 : vector<2x128xf32>, vector<2x128xf32>, vector<2x128xf32>, vector<2x128xf32> -> vector<2x512xf32>
    %c0_113 = arith.constant 0 : index
    %c0_114 = arith.constant 0 : index
    %233 = vector.load %arg8[%c0_113, %c0_114] : memref<512x128xf32, #tpu.memory_space<vmem>>, vector<512x128xf32>
    %cst_115 = arith.constant dense<0.000000e+00> : vector<2x128xf32>
    %234 = tpu.matmul %232, %233, %cst_115 {dimension_numbers = #tpu.dot_dimension_numbers<[1], [0], [0], [1], [0, 0, 1, 1], [], []>} : vector<2x512xf32>, vector<512x128xf32>, vector<2x128xf32> -> vector<2x128xf32>
    %235 = arith.addf %234, %121 : vector<2x128xf32>
    %236 = arith.mulf %84, %235 : vector<2x128xf32>
    %cst_116 = arith.constant 1.000000e+00 : f32
    %237 = vector.broadcast %cst_116 : f32 to vector<2x128xf32>
    %238 = arith.subf %237, %84 : vector<2x128xf32>
    %239 = arith.mulf %238, %1 : vector<2x128xf32>
    %240 = arith.addf %236, %239 : vector<2x128xf32>
    %c0_117 = arith.constant 0 : index
    %c0_118 = arith.constant 0 : index
    %241 = vector.load %arg9[%c0_117, %c0_118] : memref<2x128xf32, #tpu.memory_space<vmem>>, vector<2x128xf32>
    tpu.vector_store %arg9[%c0_117, %c0_118], %240 {strides = array<i32>} : memref<2x128xf32, #tpu.memory_space<vmem>>, vector<2x128xf32>,
    return
  }
}

</mosaic_0001>

<llo_original>
// kernel: rim_cell_forward.1
$region0: #{rim_cell_forward.1}
  #allocation0 [shape = 'u32[]', space=smem, size = 0x4, offset = 0x4, fixed_abs, tag = 'smem constant byte address 0x4 - core index']
  #allocation1 [shape = 'u32[144,128]{1,0:T(1,128)}', space=vmem, size = 0x12000, scoped, tag = 'internal scratch']
  #allocation2 [shape = 'f32[2,4,256]{2,1,0:T(4,128)}', space=vmem, size = 0x2000, scoped, tag = 'scratch operand']
  #allocation3 [shape = 'f32[2,4,128]{2,1,0:T(4,128)}', space=vmem, size = 0x1000, scoped, tag = 'scratch operand']
  %s0 = inlined_call_operand.vmem [shape: f32[2,32], index: 0, kind: input, shape index: {}]
  %s1 = inlined_call_operand.vmem [shape: f32[2,128], index: 1, kind: input, shape index: {}]
  %s2 = inlined_call_operand.vmem [shape: f32[32,48], index: 2, kind: input, shape index: {}]
  %s3 = inlined_call_operand.vmem [shape: f32[1,48], index: 3, kind: input, shape index: {}]
  %s4 = inlined_call_operand.vmem [shape: f32[128,64], index: 4, kind: input, shape index: {}]
  %s5 = inlined_call_operand.vmem [shape: f32[128,384], index: 5, kind: input, shape index: {}]
  %s6 = inlined_call_operand.vmem [shape: f32[128,384], index: 6, kind: input, shape index: {}]
  %s7 = inlined_call_operand.vmem [shape: f32[128,1024], index: 7, kind: input, shape index: {}]
  %s8 = inlined_call_operand.vmem [shape: f32[512,128], index: 8, kind: input, shape index: {}]
  %s9 = inlined_call_operand.vmem [shape: f32[2,128], index: 9, kind: output, shape index: {}]
  %s10 = sld [smem:[#allocation0]]
  $region46: #{rim_cell_forward.1} parent=0
    _
  %s12 = ssub.s32 1, %s10
  %s13 = scalar_select 0, %s12, %s10
  // Predicated region
  $region2: #{rim_cell_forward.1} parent=0 // pred_check
    _
  $region3: #{rim_cell_forward.1} parent=0 // pred_check_branch
    %15 = sbr.rel (0) target = $region5
  $region4: #{rim_cell_forward.1} parent=0 // pred_region
    _
  $region5: #{rim_cell_forward.1} parent=0 // pred_fallthru
    _
  // Predicated region
  $region6: #{rim_cell_forward.1} parent=0 // pred_check
    _
  $region7: #{rim_cell_forward.1} parent=0 // pred_check_branch
    %17 = sbr.rel (0) target = $region9
  $region8: #{rim_cell_forward.1} parent=0 // pred_region
    _
  $region9: #{rim_cell_forward.1} parent=0 // pred_fallthru
    _
  // Predicated region
  $region10: #{rim_cell_forward.1} parent=0 // pred_check
    _
  $region11: #{rim_cell_forward.1} parent=0 // pred_check_branch
    %19 = sbr.rel (0) target = $region13
  $region12: #{rim_cell_forward.1} parent=0 // pred_region
    _
  $region13: #{rim_cell_forward.1} parent=0 // pred_fallthru
    _
  // Predicated region
  $region14: #{rim_cell_forward.1} parent=0 // pred_check
    _
  $region15: #{rim_cell_forward.1} parent=0 // pred_check_branch
    %21 = sbr.rel (0) target = $region17
  $region16: #{rim_cell_forward.1} parent=0 // pred_region
    _
  $region17: #{rim_cell_forward.1} parent=0 // pred_fallthru
    _
  // Predicated region
  $region18: #{rim_cell_forward.1} parent=0 // pred_check
    _
  $region19: #{rim_cell_forward.1} parent=0 // pred_check_branch
    %23 = sbr.rel (0) target = $region21
  $region20: #{rim_cell_forward.1} parent=0 // pred_region
    _
  $region21: #{rim_cell_forward.1} parent=0 // pred_fallthru
    _
  // Predicated region
  $region22: #{rim_cell_forward.1} parent=0 // pred_check
    _
  $region23: #{rim_cell_forward.1} parent=0 // pred_check_branch
    %25 = sbr.rel (0) target = $region25
  $region24: #{rim_cell_forward.1} parent=0 // pred_region
    _
  $region25: #{rim_cell_forward.1} parent=0 // pred_fallthru
    _
  // Predicated region
  $region26: #{rim_cell_forward.1} parent=0 // pred_check
    _
  $region27: #{rim_cell_forward.1} parent=0 // pred_check_branch
    %27 = sbr.rel (0) target = $region29
  $region28: #{rim_cell_forward.1} parent=0 // pred_region
    _
  $region29: #{rim_cell_forward.1} parent=0 // pred_fallthru
    _
  // Predicated region
  $region30: #{rim_cell_forward.1} parent=0 // pred_check
    _
  $region31: #{rim_cell_forward.1} parent=0 // pred_check_branch
    %29 = sbr.rel (0) target = $region33
  $region32: #{rim_cell_forward.1} parent=0 // pred_region
    _
  $region33: #{rim_cell_forward.1} parent=0 // pred_fallthru
    _
  // Predicated region
  $region34: #{rim_cell_forward.1} parent=0 // pred_check
    _
  $region35: #{rim_cell_forward.1} parent=0 // pred_check_branch
    %31 = sbr.rel (0) target = $region37
  $region36: #{rim_cell_forward.1} parent=0 // pred_region
    _
  $region37: #{rim_cell_forward.1} parent=0 // pred_fallthru
    _
  %v32 = vld [vmem:[%s0] sm:$0x3]
  %v33 = vld [vmem:[%s1] sm:$0x3]
  %v34 = vlaneseq
  %v35 = vand.u32 %v34, 127
  %v36 = vlaneseq
  %v37 = vshrl.u32 %v36, 7
  %v38 = vmul.u32 %v37, 32
  %vm39 = vcmp.ge.s32.totalorder %v35, %v38
  %v40 = vadd.s32 %v38, 32
  %vm41 = vcmp.lt.s32.totalorder %v35, %v40
  %vm42 = vmand %vm39, %vm41
  %v43 = vsel %vm42, 1, 0
  %v44 = vcvt.s32.f32 %v43
  %v45 = vadd.s32 %v37, 8
  %v46 = vadd.s32 %v37, 16
  %v47 = vadd.s32 %v37, 24
  %v48 = vadd.s32 %v37, 32
  %v49 = vadd.s32 %v37, 40
  %v50 = vadd.s32 %v37, 48
  %v51 = vadd.s32 %v37, 56
  %v52 = vmul.u32 %v35, 16
  %vm53 = vcmp.ge.s32.totalorder %v37, %v52
  %vm54 = vcmp.ge.s32.totalorder %v45, %v52
  %vm55 = vcmp.ge.s32.totalorder %v46, %v52
  %vm56 = vcmp.ge.s32.totalorder %v47, %v52
  %vm57 = vcmp.ge.s32.totalorder %v48, %v52
  %vm58 = vcmp.ge.s32.totalorder %v49, %v52
  %vm59 = vcmp.ge.s32.totalorder %v50, %v52
  %vm60 = vcmp.ge.s32.totalorder %v51, %v52
  %v61 = vadd.s32 %v52, 16
  %vm62 = vcmp.lt.s32.totalorder %v37, %v61
  %vm63 = vcmp.lt.s32.totalorder %v45, %v61
  %vm64 = vcmp.lt.s32.totalorder %v46, %v61
  %vm65 = vcmp.lt.s32.totalorder %v47, %v61
  %vm66 = vcmp.lt.s32.totalorder %v48, %v61
  %vm67 = vcmp.lt.s32.totalorder %v49, %v61
  %vm68 = vcmp.lt.s32.totalorder %v50, %v61
  %vm69 = vcmp.lt.s32.totalorder %v51, %v61
  %vm70 = vmand %vm53, %vm62
  %vm71 = vmand %vm54, %vm63
  %vm72 = vmand %vm55, %vm64
  %vm73 = vmand %vm56, %vm65
  %vm74 = vmand %vm57, %vm66
  %vm75 = vmand %vm58, %vm67
  %vm76 = vmand %vm59, %vm68
  %vm77 = vmand %vm60, %vm69
  %v78 = vsel %vm70, 1, 0
  %v79 = vsel %vm71, 1, 0
  %v80 = vsel %vm72, 1, 0
  %v81 = vsel %vm73, 1, 0
  %v82 = vsel %vm74, 1, 0
  %v83 = vsel %vm75, 1, 0
  %v84 = vsel %vm76, 1, 0
  %v85 = vsel %vm77, 1, 0
  %v86 = vcvt.s32.f32 %v78
  %v87 = vcvt.s32.f32 %v79
  %v88 = vcvt.s32.f32 %v80
  %v89 = vcvt.s32.f32 %v81
  %v90 = vcvt.s32.f32 %v82
  %v91 = vcvt.s32.f32 %v83
  %v92 = vcvt.s32.f32 %v84
  %v93 = vcvt.s32.f32 %v85
  %v94 = vld [vmem:[%s3] sm:$0x1]
  %v95 = vld [vmem:[%s2] sm:$0xff]
  %v96 = vld [vmem:[%s2 + $0x8] sm:$0xff]
  %v97 = vld [vmem:[%s2 + $0x10] sm:$0xff]
  %v98 = vld [vmem:[%s2 + $0x18] sm:$0xff]
  %v100 = vlaneseq
  %v101 = vshrl.u32 %v100, 7
  %v102 = vsub.s32 0, %v101
  %v103 = vrot.slane %v94, %v102
  %vm105 = vcmask 261120
  %v107 = vsel %vm105, %v32, 0
  %109 = vmatprep.subr.mxu0 0.0
  %110 = vmatpush1.msra.mxu0 %v95
  %111 = vmatprep.subr.mxu0 0.0
  %112 = vmatpush1.msra.mxu0 %v96
  %113 = vmatprep.subr.mxu0 0.0
  %114 = vmatpush1.msra.mxu0 %v97
  %115 = vmatprep.subr.mxu0 0.0
  %116 = vmatpush1.msra.mxu0 %v98
  %117 = vmatprep.subr.mxu0 0.0
  %118 = vmatpush1.msra.mxu0 0.0
  %119 = vmatprep.subr.mxu0 0.0
  %120 = vmatpush1.msra.mxu0 0.0
  %121 = vmatprep.subr.mxu0 0.0
  %122 = vmatpush1.msra.mxu0 0.0
  %123 = vmatprep.subr.mxu0 0.0
  %124 = vmatpush1.msra.mxu0 0.0
  %125 = vmatprep.subr.mxu0 0.0
  %126 = vmatpush1.msra.mxu0 0.0
  %127 = vmatprep.subr.mxu0 0.0
  %128 = vmatpush1.msra.mxu0 0.0
  %129 = vmatprep.subr.mxu0 0.0
  %130 = vmatpush1.msra.mxu0 0.0
  %131 = vmatprep.subr.mxu0 0.0
  %132 = vmatpush1.msra.mxu0 0.0
  %133 = vmatprep.subr.mxu0 0.0
  %134 = vmatpush1.msra.mxu0 0.0
  %135 = vmatprep.subr.mxu0 0.0
  %136 = vmatpush1.msra.mxu0 0.0
  %137 = vmatprep.subr.mxu0 0.0
  %138 = vmatpush1.msra.mxu0 0.0
  %139 = vmatprep.subr.mxu0 0.0
  %140 = vmatpush1.msra.mxu0 0.0
  %141 = vmatprep.subr.mxu0 0.0
  %142 = vmatpush1.msra.mxu0 0.0
  %143 = vmatprep.subr.mxu0 0.0
  %144 = vmatpush1.msra.mxu0 0.0
  %145 = vmatprep.subr.mxu0 0.0
  %146 = vmatpush1.msra.mxu0 0.0
  %147 = vmatprep.subr.mxu0 0.0
  %148 = vmatpush1.msra.mxu0 0.0
  %149 = vmatprep.subr.mxu0 0.0
  %150 = vmatpush1.msra.mxu0 0.0
  %151 = vmatprep.subr.mxu0 0.0
  %152 = vmatpush1.msra.mxu0 0.0
  %153 = vmatprep.subr.mxu0 0.0
  %154 = vmatpush1.msra.mxu0 0.0
  %155 = vmatprep.subr.mxu0 0.0
  %156 = vmatpush1.msra.mxu0 0.0
  %157 = vmatprep.subr.mxu0 0.0
  %158 = vmatpush1.msra.mxu0 0.0
  %159 = vmatprep.subr.mxu0 0.0
  %160 = vmatpush1.msra.mxu0 0.0
  %161 = vmatprep.subr.mxu0 0.0
  %162 = vmatpush1.msra.mxu0 0.0
  %163 = vmatprep.subr.mxu0 0.0
  %164 = vmatpush1.msra.mxu0 0.0
  %165 = vmatprep.subr.mxu0 0.0
  %166 = vmatpush1.msra.mxu0 0.0
  %167 = vmatprep.subr.mxu0 0.0
  %168 = vmatpush1.msra.mxu0 0.0
  %169 = vmatprep.subr.mxu0 0.0
  %170 = vmatpush1.msra.mxu0 0.0
  %171 = vmatprep.subr.mxu0 0.0
  %172 = vmatpush1.msra.mxu0 0.0
  %173 = vmatprep.mubr.f32.mxu0 0.0
  %174 = vmatmul.mubr.f32.gmra.mrb[0].mxu0 %v107
  %v175 = vpop.f32.mrb[0].mxu0
  %v176 = vadd.f32 %v103, %v175
  %v177 = vpop.f32.mrb[0].mxu0
  %178 = vdwg.mxu0
  %v179 = vld [vmem:[%s4] sm:$0xff]
  %v180 = vld [vmem:[%s4 + $0x8] sm:$0xff]
  %v181 = vld [vmem:[%s4 + $0x10] sm:$0xff]
  %v182 = vld [vmem:[%s4 + $0x18] sm:$0xff]
  %v183 = vld [vmem:[%s4 + $0x20] sm:$0xff]
  %v184 = vld [vmem:[%s4 + $0x28] sm:$0xff]
  %v185 = vld [vmem:[%s4 + $0x30] sm:$0xff]
  %v186 = vld [vmem:[%s4 + $0x38] sm:$0xff]
  %v187 = vld [vmem:[%s4 + $0x40] sm:$0xff]
  %v188 = vld [vmem:[%s4 + $0x48] sm:$0xff]
  %v189 = vld [vmem:[%s4 + $0x50] sm:$0xff]
  %v190 = vld [vmem:[%s4 + $0x58] sm:$0xff]
  %v191 = vld [vmem:[%s4 + $0x60] sm:$0xff]
  %v192 = vld [vmem:[%s4 + $0x68] sm:$0xff]
  %v193 = vld [vmem:[%s4 + $0x70] sm:$0xff]
  %v194 = vld [vmem:[%s4 + $0x78] sm:$0xff]
  %195 = vmatprep.subr.mxu0 0.0
  %196 = vmatpush1.msra.mxu0 %v179
  %197 = vmatprep.subr.mxu0 0.0
  %198 = vmatpush1.msra.mxu0 %v180
  %199 = vmatprep.subr.mxu0 0.0
  %200 = vmatpush1.msra.mxu0 %v181
  %201 = vmatprep.subr.mxu0 0.0
  %202 = vmatpush1.msra.mxu0 %v182
  %203 = vmatprep.subr.mxu0 0.0
  %204 = vmatpush1.msra.mxu0 %v183
  %205 = vmatprep.subr.mxu0 0.0
  %206 = vmatpush1.msra.mxu0 %v184
  %207 = vmatprep.subr.mxu0 0.0
  %208 = vmatpush1.msra.mxu0 %v185
  %209 = vmatprep.subr.mxu0 0.0
  %210 = vmatpush1.msra.mxu0 %v186
  %211 = vmatprep.subr.mxu0 0.0
  %212 = vmatpush1.msra.mxu0 %v187
  %213 = vmatprep.subr.mxu0 0.0
  %214 = vmatpush1.msra.mxu0 %v188
  %215 = vmatprep.subr.mxu0 0.0
  %216 = vmatpush1.msra.mxu0 %v189
  %217 = vmatprep.subr.mxu0 0.0
  %218 = vmatpush1.msra.mxu0 %v190
  %219 = vmatprep.subr.mxu0 0.0
  %220 = vmatpush1.msra.mxu0 %v191
  %221 = vmatprep.subr.mxu0 0.0
  %222 = vmatpush1.msra.mxu0 %v192
  %223 = vmatprep.subr.mxu0 0.0
  %224 = vmatpush1.msra.mxu0 %v193
  %225 = vmatprep.subr.mxu0 0.0
  %226 = vmatpush1.msra.mxu0 %v194
  %227 = vmatprep.subr.mxu0 0.0
  %228 = vmatpush1.msra.mxu0 0.0
  %229 = vmatprep.subr.mxu0 0.0
  %230 = vmatpush1.msra.mxu0 0.0
  %231 = vmatprep.subr.mxu0 0.0
  %232 = vmatpush1.msra.mxu0 0.0
  %233 = vmatprep.subr.mxu0 0.0
  %234 = vmatpush1.msra.mxu0 0.0
  %235 = vmatprep.subr.mxu0 0.0
  %236 = vmatpush1.msra.mxu0 0.0
  %237 = vmatprep.subr.mxu0 0.0
  %238 = vmatpush1.msra.mxu0 0.0
  %239 = vmatprep.subr.mxu0 0.0
  %240 = vmatpush1.msra.mxu0 0.0
  %241 = vmatprep.subr.mxu0 0.0
  %242 = vmatpush1.msra.mxu0 0.0
  %243 = vmatprep.subr.mxu0 0.0
  %244 = vmatpush1.msra.mxu0 0.0
  %245 = vmatprep.subr.mxu0 0.0
  %246 = vmatpush1.msra.mxu0 0.0
  %247 = vmatprep.subr.mxu0 0.0
  %248 = vmatpush1.msra.mxu0 0.0
  %249 = vmatprep.subr.mxu0 0.0
  %250 = vmatpush1.msra.mxu0 0.0
  %251 = vmatprep.subr.mxu0 0.0
  %252 = vmatpush1.msra.mxu0 0.0
  %253 = vmatprep.subr.mxu0 0.0
  %254 = vmatpush1.msra.mxu0 0.0
  %255 = vmatprep.subr.mxu0 0.0
  %256 = vmatpush1.msra.mxu0 0.0
  %257 = vmatprep.subr.mxu0 0.0
  %258 = vmatpush1.msra.mxu0 0.0
  %259 = vmatprep.mubr.f32.mxu0 0.0
  %260 = vmatmul.mubr.f32.gmra.mrb[0].mxu0 %v33
  %v261 = vpop.f32.mrb[0].mxu0
  %v262 = vadd.f32 0.0, %v261
  %v263 = vpop.f32.mrb[0].mxu0
  %264 = vdwg.mxu0
  %266 = vrot.lane.b32.xlu0 %v176, 16
  %v267 = vpop.permute.xlu0 %266
  %269 = vrot.lane.b32.xlu0 %v176, 32
  %v270 = vpop.permute.xlu0 %269
  %272 = vrot.lane.b32.xlu0 %v176, 48
  %v273 = vpop.permute.xlu0 %272
  %vm275 = vcmask 130048
  %v276 = vsel %vm275, %v176, %v267
  %v277 = vsel %vm105, %v276, %v270
  %vm278 = vcmask 392192
  %v279 = vsel %vm278, %v277, %v273
  %280 = vrot.lane.b32.xlu0 %v103, 16
  %v281 = vpop.permute.xlu0 %280
  %283 = vrot.lane.b32.xlu0 %v103, 32
  %v284 = vpop.permute.xlu0 %283
  %286 = vrot.lane.b32.xlu0 %v103, 48
  %v287 = vpop.permute.xlu0 %286
  %v289 = vsel %vm275, %v94, %v281
  %v290 = vsel %vm105, %v289, %v284
  %v291 = vsel %vm278, %v290, %v287
  %v292 = vmul.f32 %v262, %v279
  %vm293 = vcmask 523264
  %v295 = vsel %vm293, %v292, 0
  %297 = vmatprep.subr.mxu0 0.0
  %298 = vmatpush1.msra.mxu0 %v86
  %299 = vmatprep.subr.mxu0 0.0
  %300 = vmatpush1.msra.mxu0 %v87
  %301 = vmatprep.subr.mxu0 0.0
  %302 = vmatpush1.msra.mxu0 %v88
  %303 = vmatprep.subr.mxu0 0.0
  %304 = vmatpush1.msra.mxu0 %v89
  %305 = vmatprep.subr.mxu0 0.0
  %306 = vmatpush1.msra.mxu0 %v90
  %307 = vmatprep.subr.mxu0 0.0
  %308 = vmatpush1.msra.mxu0 %v91
  %309 = vmatprep.subr.mxu0 0.0
  %310 = vmatpush1.msra.mxu0 %v92
  %311 = vmatprep.subr.mxu0 0.0
  %312 = vmatpush1.msra.mxu0 %v93
  %313 = vmatprep.subr.mxu0 0.0
  %314 = vmatpush1.msra.mxu0 0.0
  %315 = vmatprep.subr.mxu0 0.0
  %316 = vmatpush1.msra.mxu0 0.0
  %317 = vmatprep.subr.mxu0 0.0
  %318 = vmatpush1.msra.mxu0 0.0
  %319 = vmatprep.subr.mxu0 0.0
  %320 = vmatpush1.msra.mxu0 0.0
  %321 = vmatprep.subr.mxu0 0.0
  %322 = vmatpush1.msra.mxu0 0.0
  %323 = vmatprep.subr.mxu0 0.0
  %324 = vmatpush1.msra.mxu0 0.0
  %325 = vmatprep.subr.mxu0 0.0
  %326 = vmatpush1.msra.mxu0 0.0
  %327 = vmatprep.subr.mxu0 0.0
  %328 = vmatpush1.msra.mxu0 0.0
  %329 = vmatprep.subr.mxu0 0.0
  %330 = vmatpush1.msra.mxu0 0.0
  %331 = vmatprep.subr.mxu0 0.0
  %332 = vmatpush1.msra.mxu0 0.0
  %333 = vmatprep.subr.mxu0 0.0
  %334 = vmatpush1.msra.mxu0 0.0
  %335 = vmatprep.subr.mxu0 0.0
  %336 = vmatpush1.msra.mxu0 0.0
  %337 = vmatprep.subr.mxu0 0.0
  %338 = vmatpush1.msra.mxu0 0.0
  %339 = vmatprep.subr.mxu0 0.0
  %340 = vmatpush1.msra.mxu0 0.0
  %341 = vmatprep.subr.mxu0 0.0
  %342 = vmatpush1.msra.mxu0 0.0
  %343 = vmatprep.subr.mxu0 0.0
  %344 = vmatpush1.msra.mxu0 0.0
  %345 = vmatprep.subr.mxu0 0.0
  %346 = vmatpush1.msra.mxu0 0.0
  %347 = vmatprep.subr.mxu0 0.0
  %348 = vmatpush1.msra.mxu0 0.0
  %349 = vmatprep.subr.mxu0 0.0
  %350 = vmatpush1.msra.mxu0 0.0
  %351 = vmatprep.subr.mxu0 0.0
  %352 = vmatpush1.msra.mxu0 0.0
  %353 = vmatprep.subr.mxu0 0.0
  %354 = vmatpush1.msra.mxu0 0.0
  %355 = vmatprep.subr.mxu0 0.0
  %356 = vmatpush1.msra.mxu0 0.0
  %357 = vmatprep.subr.mxu0 0.0
  %358 = vmatpush1.msra.mxu0 0.0
  %359 = vmatprep.subr.mxu0 0.0
  %360 = vmatpush1.msra.mxu0 0.0
  %361 = vmatprep.mubr.f32.mxu0 0.0
  %362 = vmatmul.mubr.f32.gmra.mrb[0].mxu0 %v295
  %v363 = vpop.f32.mrb[0].mxu0
  %v364 = vadd.f32 0.0, %v363
  %v365 = vpop.f32.mrb[0].mxu0
  %366 = vdwg.mxu0
  %v367 = vmul.f32 %v364, 0.25
  %v368 = vlaneseq
  %v369 = vshrl.u32 %v368, 7
  %v370 = vsub.s32 0, %v369
  %v371 = vrot.slane %v291, %v370
  %v372 = vmul.f32 %v262, %v371
  %v374 = vsel %vm293, %v372, 0
  %376 = vmatprep.subr.mxu0 0.0
  %377 = vmatpush1.msra.mxu0 %v86
  %378 = vmatprep.subr.mxu0 0.0
  %379 = vmatpush1.msra.mxu0 %v87
  %380 = vmatprep.subr.mxu0 0.0
  %381 = vmatpush1.msra.mxu0 %v88
  %382 = vmatprep.subr.mxu0 0.0
  %383 = vmatpush1.msra.mxu0 %v89
  %384 = vmatprep.subr.mxu0 0.0
  %385 = vmatpush1.msra.mxu0 %v90
  %386 = vmatprep.subr.mxu0 0.0
  %387 = vmatpush1.msra.mxu0 %v91
  %388 = vmatprep.subr.mxu0 0.0
  %389 = vmatpush1.msra.mxu0 %v92
  %390 = vmatprep.subr.mxu0 0.0
  %391 = vmatpush1.msra.mxu0 %v93
  %392 = vmatprep.subr.mxu0 0.0
  %393 = vmatpush1.msra.mxu0 0.0
  %394 = vmatprep.subr.mxu0 0.0
  %395 = vmatpush1.msra.mxu0 0.0
  %396 = vmatprep.subr.mxu0 0.0
  %397 = vmatpush1.msra.mxu0 0.0
  %398 = vmatprep.subr.mxu0 0.0
  %399 = vmatpush1.msra.mxu0 0.0
  %400 = vmatprep.subr.mxu0 0.0
  %401 = vmatpush1.msra.mxu0 0.0
  %402 = vmatprep.subr.mxu0 0.0
  %403 = vmatpush1.msra.mxu0 0.0
  %404 = vmatprep.subr.mxu0 0.0
  %405 = vmatpush1.msra.mxu0 0.0
  %406 = vmatprep.subr.mxu0 0.0
  %407 = vmatpush1.msra.mxu0 0.0
  %408 = vmatprep.subr.mxu0 0.0
  %409 = vmatpush1.msra.mxu0 0.0
  %410 = vmatprep.subr.mxu0 0.0
  %411 = vmatpush1.msra.mxu0 0.0
  %412 = vmatprep.subr.mxu0 0.0
  %413 = vmatpush1.msra.mxu0 0.0
  %414 = vmatprep.subr.mxu0 0.0
  %415 = vmatpush1.msra.mxu0 0.0
  %416 = vmatprep.subr.mxu0 0.0
  %417 = vmatpush1.msra.mxu0 0.0
  %418 = vmatprep.subr.mxu0 0.0
  %419 = vmatpush1.msra.mxu0 0.0
  %420 = vmatprep.subr.mxu0 0.0
  %421 = vmatpush1.msra.mxu0 0.0
  %422 = vmatprep.subr.mxu0 0.0
  %423 = vmatpush1.msra.mxu0 0.0
  %424 = vmatprep.subr.mxu0 0.0
  %425 = vmatpush1.msra.mxu0 0.0
  %426 = vmatprep.subr.mxu0 0.0
  %427 = vmatpush1.msra.mxu0 0.0
  %428 = vmatprep.subr.mxu0 0.0
  %429 = vmatpush1.msra.mxu0 0.0
  %430 = vmatprep.subr.mxu0 0.0
  %431 = vmatpush1.msra.mxu0 0.0
  %432 = vmatprep.subr.mxu0 0.0
  %433 = vmatpush1.msra.mxu0 0.0
  %434 = vmatprep.subr.mxu0 0.0
  %435 = vmatpush1.msra.mxu0 0.0
  %436 = vmatprep.subr.mxu0 0.0
  %437 = vmatpush1.msra.mxu0 0.0
  %438 = vmatprep.subr.mxu0 0.0
  %439 = vmatpush1.msra.mxu0 0.0
  %440 = vmatprep.mubr.f32.mxu0 0.0
  %441 = vmatmul.mubr.f32.gmra.mrb[0].mxu0 %v374
  %v442 = vpop.f32.mrb[0].mxu0
  %v443 = vadd.f32 0.0, %v442
  %v444 = vpop.f32.mrb[0].mxu0
  %445 = vdwg.mxu0
  %v446 = vmul.f32 %v443, 0.25
  %v449 = vunpack.c.l.s4 1966171168
  %v450 = vunpack.c.0.s8 %v449
  %v451 = vlaneseq
  %v452 = vshrl.u32 %v451, 7
  %v453 = vsub.s32 %v450, %v452
  %v454 = vrot.slane %v367, %v453
  %v455 = vcombine.high %v454, %v454
  %v457 = vunpack.c.l.s4 1966171168
  %v458 = vunpack.c.0.s8 %v457
  %v459 = vlaneseq
  %v460 = vshrl.u32 %v459, 7
  %v461 = vsub.s32 %v458, %v460
  %v462 = vrot.slane %v454, %v461
  %v464 = vunpack.c.l.s4 1966171168
  %v465 = vunpack.c.0.s8 %v464
  %v466 = vlaneseq
  %v467 = vshrl.u32 %v466, 7
  %v468 = vsub.s32 %v465, %v467
  %v469 = vrot.slane %v455, %v468
  %v470 = vlaneseq
  %v471 = vshrl.u32 %v470, 7
  %v472 = vsub.s32 0, %v471
  %v473 = vrot.slane %v367, %v472
  %475 = vbcast.lane.b32.xlu0 %v473, 256
  %v476 = vpop.permute.xlu0 %475
  %v477 = vlaneseq
  %v478 = vshrl.u32 %v477, 7
  %v479 = vsub.s32 1, %v478
  %v480 = vrot.slane %v367, %v479
  %482 = vbcast.lane.b32.xlu0 %v480, 256
  %v483 = vpop.permute.xlu0 %482
  %v484 = vlaneseq
  %v485 = vshrl.u32 %v484, 7
  %v486 = vsub.s32 0, %v485
  %v487 = vrot.slane %v462, %v486
  %v488 = vlaneseq
  %v489 = vshrl.u32 %v488, 7
  %v490 = vsub.s32 0, %v489
  %v491 = vrot.slane %v469, %v490
  %vm494 = vcmp.gt.f32.partialorder %v487, %v476
  %vm495 = vcmp.gt.f32.partialorder %v491, %v483
  %vm496 = vcmp.eq.f32.partialorder %v487, %v476
  %vm497 = vcmp.eq.f32.partialorder %v491, %v483
  %vm498 = vcmp.lt.s32.totalorder %v35, %v37
  %vm499 = vmand %vm496, %vm498
  %vm500 = vmand %vm497, %vm498
  %vm501 = vmor %vm494, %vm499
  %vm502 = vmor %vm495, %vm500
  %v503 = vsel %vm501, 1, 0
  %v504 = vsel %vm502, 1, 0
  %vm505 = vcmask 27648
  %v506 = vsel %vm505, %v503, 0
  %v507 = vand.u32 %v506, 65535
  %v508 = vshrl.u32 %v506, 16
  %v509 = vcvt.s32.f32 %v507
  %v510 = vcvt.s32.f32 %v508
  %511 = vadd.xlane.f32.xlu0 %v509
  %v512 = vpop.xlane.xlu0 %511
  %513 = vadd.xlane.f32.xlu0 %v510
  %v514 = vpop.xlane.xlu0 %513
  %v515 = vcvt.f32.s32 %v512
  %v516 = vcvt.f32.s32 %v514
  %v517 = vshll.u32 %v516, 16
  %v518 = vadd.s32 %v517, %v515
  %v519 = vsel %vm505, %v504, 0
  %v520 = vand.u32 %v519, 65535
  %v521 = vshrl.u32 %v519, 16
  %v522 = vcvt.s32.f32 %v520
  %v523 = vcvt.s32.f32 %v521
  %524 = vadd.xlane.f32.xlu0 %v522
  %v525 = vpop.xlane.xlu0 %524
  %526 = vadd.xlane.f32.xlu0 %v523
  %v527 = vpop.xlane.xlu0 %526
  %v528 = vcvt.f32.s32 %v525
  %v529 = vcvt.f32.s32 %v527
  %v530 = vshll.u32 %v529, 16
  %v531 = vadd.s32 %v530, %v528
  %vm532 = vcmp.lt.s32.totalorder %v518, 2
  %vm533 = vcmp.lt.s32.totalorder %v531, 2
  %v534 = vsel %vm532, 1, 0
  %v535 = vsel %vm533, 1, 0
  %v536 = vcvt.s32.f32 %v534
  %v537 = vcvt.s32.f32 %v535
  %v538 = vsub.f32 %v367, %v446
  %v539 = vxor.u32 %v538, 2147483648
  %v540 = vmul.f32 %v539, 1.442695
  %v541 = vpow.pop %v540
  %v542 = vadd.f32 %v541, 1.0
  %v543 = vrcp.pop %v542
  %v544 = vmul.f32 1.0, %v543
  %vm545 = vcmask 31744
  %v547 = vsel %vm545, %v544, 0
  %vm549 = vcmask 1043456
  %v551 = vsel %vm549, %v44, 0
  %553 = vmatprep.subr.mxu0 0.0
  %554 = vmatpush1.msra.mxu0 %v551
  %555 = vmatprep.subr.mxu0 0.0
  %556 = vmatpush1.msra.mxu0 0.0
  %557 = vmatprep.subr.mxu0 0.0
  %558 = vmatpush1.msra.mxu0 0.0
  %559 = vmatprep.subr.mxu0 0.0
  %560 = vmatpush1.msra.mxu0 0.0
  %561 = vmatprep.subr.mxu0 0.0
  %562 = vmatpush1.msra.mxu0 0.0
  %563 = vmatprep.subr.mxu0 0.0
  %564 = vmatpush1.msra.mxu0 0.0
  %565 = vmatprep.subr.mxu0 0.0
  %566 = vmatpush1.msra.mxu0 0.0
  %567 = vmatprep.subr.mxu0 0.0
  %568 = vmatpush1.msra.mxu0 0.0
  %569 = vmatprep.subr.mxu0 0.0
  %570 = vmatpush1.msra.mxu0 0.0
  %571 = vmatprep.subr.mxu0 0.0
  %572 = vmatpush1.msra.mxu0 0.0
  %573 = vmatprep.subr.mxu0 0.0
  %574 = vmatpush1.msra.mxu0 0.0
  %575 = vmatprep.subr.mxu0 0.0
  %576 = vmatpush1.msra.mxu0 0.0
  %577 = vmatprep.subr.mxu0 0.0
  %578 = vmatpush1.msra.mxu0 0.0
  %579 = vmatprep.subr.mxu0 0.0
  %580 = vmatpush1.msra.mxu0 0.0
  %581 = vmatprep.subr.mxu0 0.0
  %582 = vmatpush1.msra.mxu0 0.0
  %583 = vmatprep.subr.mxu0 0.0
  %584 = vmatpush1.msra.mxu0 0.0
  %585 = vmatprep.subr.mxu0 0.0
  %586 = vmatpush1.msra.mxu0 0.0
  %587 = vmatprep.subr.mxu0 0.0
  %588 = vmatpush1.msra.mxu0 0.0
  %589 = vmatprep.subr.mxu0 0.0
  %590 = vmatpush1.msra.mxu0 0.0
  %591 = vmatprep.subr.mxu0 0.0
  %592 = vmatpush1.msra.mxu0 0.0
  %593 = vmatprep.subr.mxu0 0.0
  %594 = vmatpush1.msra.mxu0 0.0
  %595 = vmatprep.subr.mxu0 0.0
  %596 = vmatpush1.msra.mxu0 0.0
  %597 = vmatprep.subr.mxu0 0.0
  %598 = vmatpush1.msra.mxu0 0.0
  %599 = vmatprep.subr.mxu0 0.0
  %600 = vmatpush1.msra.mxu0 0.0
  %601 = vmatprep.subr.mxu0 0.0
  %602 = vmatpush1.msra.mxu0 0.0
  %603 = vmatprep.subr.mxu0 0.0
  %604 = vmatpush1.msra.mxu0 0.0
  %605 = vmatprep.subr.mxu0 0.0
  %606 = vmatpush1.msra.mxu0 0.0
  %607 = vmatprep.subr.mxu0 0.0
  %608 = vmatpush1.msra.mxu0 0.0
  %609 = vmatprep.subr.mxu0 0.0
  %610 = vmatpush1.msra.mxu0 0.0
  %611 = vmatprep.subr.mxu0 0.0
  %612 = vmatpush1.msra.mxu0 0.0
  %613 = vmatprep.subr.mxu0 0.0
  %614 = vmatpush1.msra.mxu0 0.0
  %615 = vmatprep.subr.mxu0 0.0
  %616 = vmatpush1.msra.mxu0 0.0
  %617 = vmatprep.mubr.f32.mxu0 0.0
  %618 = vmatmul.mubr.f32.gmra.mrb[0].mxu0 %v547
  %v619 = vpop.f32.mrb[0].mxu0
  %v620 = vadd.f32 0.0, %v619
  %v621 = vpop.f32.mrb[0].mxu0
  %622 = vdwg.mxu0
  %v625 = vlaneseq
  %v626 = vshrl.u32 %v625, 7
  %v627 = vsub.s32 %v35, %v626
  %v628 = vrot.slane %v536, %v627
  %v629 = vlaneseq
  %v630 = vshrl.u32 %v629, 7
  %v631 = vsub.s32 %v35, %v630
  %v632 = vrot.slane %v537, %v631
  %vm633 = vcmask 1041409
  %v634 = vsel %vm633, %v632, %v628
  %v635 = vsel %vm545, %v634, 0
  %637 = vmatprep.subr.mxu0 0.0
  %638 = vmatpush1.msra.mxu0 %v551
  %639 = vmatprep.subr.mxu0 0.0
  %640 = vmatpush1.msra.mxu0 0.0
  %641 = vmatprep.subr.mxu0 0.0
  %642 = vmatpush1.msra.mxu0 0.0
  %643 = vmatprep.subr.mxu0 0.0
  %644 = vmatpush1.msra.mxu0 0.0
  %645 = vmatprep.subr.mxu0 0.0
  %646 = vmatpush1.msra.mxu0 0.0
  %647 = vmatprep.subr.mxu0 0.0
  %648 = vmatpush1.msra.mxu0 0.0
  %649 = vmatprep.subr.mxu0 0.0
  %650 = vmatpush1.msra.mxu0 0.0
  %651 = vmatprep.subr.mxu0 0.0
  %652 = vmatpush1.msra.mxu0 0.0
  %653 = vmatprep.subr.mxu0 0.0
  %654 = vmatpush1.msra.mxu0 0.0
  %655 = vmatprep.subr.mxu0 0.0
  %656 = vmatpush1.msra.mxu0 0.0
  %657 = vmatprep.subr.mxu0 0.0
  %658 = vmatpush1.msra.mxu0 0.0
  %659 = vmatprep.subr.mxu0 0.0
  %660 = vmatpush1.msra.mxu0 0.0
  %661 = vmatprep.subr.mxu0 0.0
  %662 = vmatpush1.msra.mxu0 0.0
  %663 = vmatprep.subr.mxu0 0.0
  %664 = vmatpush1.msra.mxu0 0.0
  %665 = vmatprep.subr.mxu0 0.0
  %666 = vmatpush1.msra.mxu0 0.0
  %667 = vmatprep.subr.mxu0 0.0
  %668 = vmatpush1.msra.mxu0 0.0
  %669 = vmatprep.subr.mxu0 0.0
  %670 = vmatpush1.msra.mxu0 0.0
  %671 = vmatprep.subr.mxu0 0.0
  %672 = vmatpush1.msra.mxu0 0.0
  %673 = vmatprep.subr.mxu0 0.0
  %674 = vmatpush1.msra.mxu0 0.0
  %675 = vmatprep.subr.mxu0 0.0
  %676 = vmatpush1.msra.mxu0 0.0
  %677 = vmatprep.subr.mxu0 0.0
  %678 = vmatpush1.msra.mxu0 0.0
  %679 = vmatprep.subr.mxu0 0.0
  %680 = vmatpush1.msra.mxu0 0.0
  %681 = vmatprep.subr.mxu0 0.0
  %682 = vmatpush1.msra.mxu0 0.0
  %683 = vmatprep.subr.mxu0 0.0
  %684 = vmatpush1.msra.mxu0 0.0
  %685 = vmatprep.subr.mxu0 0.0
  %686 = vmatpush1.msra.mxu0 0.0
  %687 = vmatprep.subr.mxu0 0.0
  %688 = vmatpush1.msra.mxu0 0.0
  %689 = vmatprep.subr.mxu0 0.0
  %690 = vmatpush1.msra.mxu0 0.0
  %691 = vmatprep.subr.mxu0 0.0
  %692 = vmatpush1.msra.mxu0 0.0
  %693 = vmatprep.subr.mxu0 0.0
  %694 = vmatpush1.msra.mxu0 0.0
  %695 = vmatprep.subr.mxu0 0.0
  %696 = vmatpush1.msra.mxu0 0.0
  %697 = vmatprep.subr.mxu0 0.0
  %698 = vmatpush1.msra.mxu0 0.0
  %699 = vmatprep.subr.mxu0 0.0
  %700 = vmatpush1.msra.mxu0 0.0
  %701 = vmatprep.mubr.f32.mxu0 0.0
  %702 = vmatmul.mubr.f32.gmra.mrb[0].mxu0 %v635
  %v703 = vpop.f32.mrb[0].mxu0
  %v704 = vadd.f32 0.0, %v703
  %v705 = vpop.f32.mrb[0].mxu0
  %706 = vdwg.mxu0
  %707 = vrot.lane.b32.xlu0 %v176, 112
  %v708 = vpop.permute.xlu0 %707
  %710 = vrot.lane.b32.xlu0 %v176, 80
  %v711 = vpop.permute.xlu0 %710
  %v713 = vsel %vm105, %v708, %v267
  %v714 = vsel %vm293, %v713, %v273
  %vm715 = vcmask 785408
  %v716 = vsel %vm715, %v714, %v711
  %717 = vrot.lane.b32.xlu0 %v103, 112
  %v718 = vpop.permute.xlu0 %717
  %720 = vrot.lane.b32.xlu0 %v103, 80
  %v721 = vpop.permute.xlu0 %720
  %v723 = vsel %vm105, %v718, %v281
  %v724 = vsel %vm293, %v723, %v287
  %v725 = vsel %vm715, %v724, %v721
  %v726 = vmul.f32 %v620, %v716
  %v727 = vsub.f32 1.0, %v620
  %v728 = vlaneseq
  %v729 = vshrl.u32 %v728, 7
  %v730 = vsub.s32 0, %v729
  %v731 = vrot.slane %v725, %v730
  %v732 = vmul.f32 %v727, %v731
  %v733 = vadd.f32 %v726, %v732
  %v734 = vmul.f32 %v704, %v733
  %v735 = vld [vmem:[%s5] sm:$0xff]
  %v736 = vld [vmem:[%s5 + $0x8] sm:$0xff]
  %v737 = vld [vmem:[%s5 + $0x10] sm:$0xff]
  %v738 = vld [vmem:[%s5 + $0x18] sm:$0xff]
  %v739 = vld [vmem:[%s5 + $0x20] sm:$0xff]
  %v740 = vld [vmem:[%s5 + $0x28] sm:$0xff]
  %v741 = vld [vmem:[%s5 + $0x30] sm:$0xff]
  %v742 = vld [vmem:[%s5 + $0x38] sm:$0xff]
  %v743 = vld [vmem:[%s5 + $0x40] sm:$0xff]
  %v744 = vld [vmem:[%s5 + $0x48] sm:$0xff]
  %v745 = vld [vmem:[%s5 + $0x50] sm:$0xff]
  %v746 = vld [vmem:[%s5 + $0x58] sm:$0xff]
  %v747 = vld [vmem:[%s5 + $0x60] sm:$0xff]
  %v748 = vld [vmem:[%s5 + $0x68] sm:$0xff]
  %v749 = vld [vmem:[%s5 + $0x70] sm:$0xff]
  %v750 = vld [vmem:[%s5 + $0x78] sm:$0xff]
  %v751 = vld [vmem:[%s5 + $0x80] sm:$0xff]
  %v752 = vld [vmem:[%s5 + $0x88] sm:$0xff]
  %v753 = vld [vmem:[%s5 + $0x90] sm:$0xff]
  %v754 = vld [vmem:[%s5 + $0x98] sm:$0xff]
  %v755 = vld [vmem:[%s5 + $0xa0] sm:$0xff]
  %v756 = vld [vmem:[%s5 + $0xa8] sm:$0xff]
  %v757 = vld [vmem:[%s5 + $0xb0] sm:$0xff]
  %v758 = vld [vmem:[%s5 + $0xb8] sm:$0xff]
  %v759 = vld [vmem:[%s5 + $0xc0] sm:$0xff]
  %v760 = vld [vmem:[%s5 + $0xc8] sm:$0xff]
  %v761 = vld [vmem:[%s5 + $0xd0] sm:$0xff]
  %v762 = vld [vmem:[%s5 + $0xd8] sm:$0xff]
  %v763 = vld [vmem:[%s5 + $0xe0] sm:$0xff]
  %v764 = vld [vmem:[%s5 + $0xe8] sm:$0xff]
  %v765 = vld [vmem:[%s5 + $0xf0] sm:$0xff]
  %v766 = vld [vmem:[%s5 + $0xf8] sm:$0xff]
  %v767 = vld [vmem:[%s5 + $0x100] sm:$0xff]
  %v768 = vld [vmem:[%s5 + $0x108] sm:$0xff]
  %v769 = vld [vmem:[%s5 + $0x110] sm:$0xff]
  %v770 = vld [vmem:[%s5 + $0x118] sm:$0xff]
  %v771 = vld [vmem:[%s5 + $0x120] sm:$0xff]
  %v772 = vld [vmem:[%s5 + $0x128] sm:$0xff]
  %v773 = vld [vmem:[%s5 + $0x130] sm:$0xff]
  %v774 = vld [vmem:[%s5 + $0x138] sm:$0xff]
  %v775 = vld [vmem:[%s5 + $0x140] sm:$0xff]
  %v776 = vld [vmem:[%s5 + $0x148] sm:$0xff]
  %v777 = vld [vmem:[%s5 + $0x150] sm:$0xff]
  %v778 = vld [vmem:[%s5 + $0x158] sm:$0xff]
  %v779 = vld [vmem:[%s5 + $0x160] sm:$0xff]
  %v780 = vld [vmem:[%s5 + $0x168] sm:$0xff]
  %v781 = vld [vmem:[%s5 + $0x170] sm:$0xff]
  %v782 = vld [vmem:[%s5 + $0x178] sm:$0xff]
  %783 = vmatprep.subr.mxu0 %v736
  %784 = vmatpush1.msra.mxu0 %v735
  %785 = vmatprep.subr.mxu0 %v739
  %786 = vmatpush1.msra.mxu0 %v738
  %787 = vmatprep.subr.mxu0 %v742
  %788 = vmatpush1.msra.mxu0 %v741
  %789 = vmatprep.subr.mxu0 %v745
  %790 = vmatpush1.msra.mxu0 %v744
  %791 = vmatprep.subr.mxu0 %v748
  %792 = vmatpush1.msra.mxu0 %v747
  %793 = vmatprep.subr.mxu0 %v751
  %794 = vmatpush1.msra.mxu0 %v750
  %795 = vmatprep.subr.mxu0 %v754
  %796 = vmatpush1.msra.mxu0 %v753
  %797 = vmatprep.subr.mxu0 %v757
  %798 = vmatpush1.msra.mxu0 %v756
  %799 = vmatprep.subr.mxu0 %v760
  %800 = vmatpush1.msra.mxu0 %v759
  %801 = vmatprep.subr.mxu0 %v763
  %802 = vmatpush1.msra.mxu0 %v762
  %803 = vmatprep.subr.mxu0 %v766
  %804 = vmatpush1.msra.mxu0 %v765
  %805 = vmatprep.subr.mxu0 %v769
  %806 = vmatpush1.msra.mxu0 %v768
  %807 = vmatprep.subr.mxu0 %v772
  %808 = vmatpush1.msra.mxu0 %v771
  %809 = vmatprep.subr.mxu0 %v775
  %810 = vmatpush1.msra.mxu0 %v774
  %811 = vmatprep.subr.mxu0 %v778
  %812 = vmatpush1.msra.mxu0 %v777
  %813 = vmatprep.subr.mxu0 %v781
  %814 = vmatpush1.msra.mxu0 %v780
  %815 = vmatprep.subr.mxu0 0.0
  %816 = vmatpush1.msra.mxu0 0.0
  %817 = vmatprep.subr.mxu0 0.0
  %818 = vmatpush1.msra.mxu0 0.0
  %819 = vmatprep.subr.mxu0 0.0
  %820 = vmatpush1.msra.mxu0 0.0
  %821 = vmatprep.subr.mxu0 0.0
  %822 = vmatpush1.msra.mxu0 0.0
  %823 = vmatprep.subr.mxu0 0.0
  %824 = vmatpush1.msra.mxu0 0.0
  %825 = vmatprep.subr.mxu0 0.0
  %826 = vmatpush1.msra.mxu0 0.0
  %827 = vmatprep.subr.mxu0 0.0
  %828 = vmatpush1.msra.mxu0 0.0
  %829 = vmatprep.subr.mxu0 0.0
  %830 = vmatpush1.msra.mxu0 0.0
  %831 = vmatprep.subr.mxu0 0.0
  %832 = vmatpush1.msra.mxu0 0.0
  %833 = vmatprep.subr.mxu0 0.0
  %834 = vmatpush1.msra.mxu0 0.0
  %835 = vmatprep.subr.mxu0 0.0
  %836 = vmatpush1.msra.mxu0 0.0
  %837 = vmatprep.subr.mxu0 0.0
  %838 = vmatpush1.msra.mxu0 0.0
  %839 = vmatprep.subr.mxu0 0.0
  %840 = vmatpush1.msra.mxu0 0.0
  %841 = vmatprep.subr.mxu0 0.0
  %842 = vmatpush1.msra.mxu0 0.0
  %843 = vmatprep.subr.mxu0 0.0
  %844 = vmatpush1.msra.mxu0 0.0
  %845 = vmatprep.subr.mxu0 0.0
  %846 = vmatpush1.msra.mxu0 0.0
  %847 = vmatprep.mubr.f32.mxu0 0.0
  %848 = vmatmul.mubr.f32.gmra.mrb[0].mxu0 %v734
  %v849 = vpop.f32.mrb[0].mxu0
  %v850 = vadd.f32 0.0, %v849
  %v851 = vpop.f32.mrb[0].mxu0
  %v852 = vadd.f32 0.0, %v851
  %853 = vdwg.mxu0
  %854 = vmatprep.subr.mxu0 0.0
  %855 = vmatpush1.msra.mxu0 %v737
  %856 = vmatprep.subr.mxu0 0.0
  %857 = vmatpush1.msra.mxu0 %v740
  %858 = vmatprep.subr.mxu0 0.0
  %859 = vmatpush1.msra.mxu0 %v743
  %860 = vmatprep.subr.mxu0 0.0
  %861 = vmatpush1.msra.mxu0 %v746
  %862 = vmatprep.subr.mxu0 0.0
  %863 = vmatpush1.msra.mxu0 %v749
  %864 = vmatprep.subr.mxu0 0.0
  %865 = vmatpush1.msra.mxu0 %v752
  %866 = vmatprep.subr.mxu0 0.0
  %867 = vmatpush1.msra.mxu0 %v755
  %868 = vmatprep.subr.mxu0 0.0
  %869 = vmatpush1.msra.mxu0 %v758
  %870 = vmatprep.subr.mxu0 0.0
  %871 = vmatpush1.msra.mxu0 %v761
  %872 = vmatprep.subr.mxu0 0.0
  %873 = vmatpush1.msra.mxu0 %v764
  %874 = vmatprep.subr.mxu0 0.0
  %875 = vmatpush1.msra.mxu0 %v767
  %876 = vmatprep.subr.mxu0 0.0
  %877 = vmatpush1.msra.mxu0 %v770
  %878 = vmatprep.subr.mxu0 0.0
  %879 = vmatpush1.msra.mxu0 %v773
  %880 = vmatprep.subr.mxu0 0.0
  %881 = vmatpush1.msra.mxu0 %v776
  %882 = vmatprep.subr.mxu0 0.0
  %883 = vmatpush1.msra.mxu0 %v779
  %884 = vmatprep.subr.mxu0 0.0
  %885 = vmatpush1.msra.mxu0 %v782
  %886 = vmatprep.subr.mxu0 0.0
  %887 = vmatpush1.msra.mxu0 0.0
  %888 = vmatprep.subr.mxu0 0.0
  %889 = vmatpush1.msra.mxu0 0.0
  %890 = vmatprep.subr.mxu0 0.0
  %891 = vmatpush1.msra.mxu0 0.0
  %892 = vmatprep.subr.mxu0 0.0
  %893 = vmatpush1.msra.mxu0 0.0
  %894 = vmatprep.subr.mxu0 0.0
  %895 = vmatpush1.msra.mxu0 0.0
  %896 = vmatprep.subr.mxu0 0.0
  %897 = vmatpush1.msra.mxu0 0.0
  %898 = vmatprep.subr.mxu0 0.0
  %899 = vmatpush1.msra.mxu0 0.0
  %900 = vmatprep.subr.mxu0 0.0
  %901 = vmatpush1.msra.mxu0 0.0
  %902 = vmatprep.subr.mxu0 0.0
  %903 = vmatpush1.msra.mxu0 0.0
  %904 = vmatprep.subr.mxu0 0.0
  %905 = vmatpush1.msra.mxu0 0.0
  %906 = vmatprep.subr.mxu0 0.0
  %907 = vmatpush1.msra.mxu0 0.0
  %908 = vmatprep.subr.mxu0 0.0
  %909 = vmatpush1.msra.mxu0 0.0
  %910 = vmatprep.subr.mxu0 0.0
  %911 = vmatpush1.msra.mxu0 0.0
  %912 = vmatprep.subr.mxu0 0.0
  %913 = vmatpush1.msra.mxu0 0.0
  %914 = vmatprep.subr.mxu0 0.0
  %915 = vmatpush1.msra.mxu0 0.0
  %916 = vmatprep.subr.mxu0 0.0
  %917 = vmatpush1.msra.mxu0 0.0
  %918 = vmatprep.mubr.f32.mxu0 0.0
  %919 = vmatmul.mubr.f32.gmra.mrb[0].mxu0 %v734
  %v920 = vpop.f32.mrb[0].mxu0
  %v921 = vadd.f32 0.0, %v920
  %v922 = vpop.f32.mrb[0].mxu0
  %923 = vdwg.mxu0
  %v924 = vld [vmem:[%s6] sm:$0xff]
  %v925 = vld [vmem:[%s6 + $0x8] sm:$0xff]
  %v926 = vld [vmem:[%s6 + $0x10] sm:$0xff]
  %v927 = vld [vmem:[%s6 + $0x18] sm:$0xff]
  %v928 = vld [vmem:[%s6 + $0x20] sm:$0xff]
  %v929 = vld [vmem:[%s6 + $0x28] sm:$0xff]
  %v930 = vld [vmem:[%s6 + $0x30] sm:$0xff]
  %v931 = vld [vmem:[%s6 + $0x38] sm:$0xff]
  %v932 = vld [vmem:[%s6 + $0x40] sm:$0xff]
  %v933 = vld [vmem:[%s6 + $0x48] sm:$0xff]
  %v934 = vld [vmem:[%s6 + $0x50] sm:$0xff]
  %v935 = vld [vmem:[%s6 + $0x58] sm:$0xff]
  %v936 = vld [vmem:[%s6 + $0x60] sm:$0xff]
  %v937 = vld [vmem:[%s6 + $0x68] sm:$0xff]
  %v938 = vld [vmem:[%s6 + $0x70] sm:$0xff]
  %v939 = vld [vmem:[%s6 + $0x78] sm:$0xff]
  %v940 = vld [vmem:[%s6 + $0x80] sm:$0xff]
  %v941 = vld [vmem:[%s6 + $0x88] sm:$0xff]
  %v942 = vld [vmem:[%s6 + $0x90] sm:$0xff]
  %v943 = vld [vmem:[%s6 + $0x98] sm:$0xff]
  %v944 = vld [vmem:[%s6 + $0xa0] sm:$0xff]
  %v945 = vld [vmem:[%s6 + $0xa8] sm:$0xff]
  %v946 = vld [vmem:[%s6 + $0xb0] sm:$0xff]
  %v947 = vld [vmem:[%s6 + $0xb8] sm:$0xff]
  %v948 = vld [vmem:[%s6 + $0xc0] sm:$0xff]
  %v949 = vld [vmem:[%s6 + $0xc8] sm:$0xff]
  %v950 = vld [vmem:[%s6 + $0xd0] sm:$0xff]
  %v951 = vld [vmem:[%s6 + $0xd8] sm:$0xff]
  %v952 = vld [vmem:[%s6 + $0xe0] sm:$0xff]
  %v953 = vld [vmem:[%s6 + $0xe8] sm:$0xff]
  %v954 = vld [vmem:[%s6 + $0xf0] sm:$0xff]
  %v955 = vld [vmem:[%s6 + $0xf8] sm:$0xff]
  %v956 = vld [vmem:[%s6 + $0x100] sm:$0xff]
  %v957 = vld [vmem:[%s6 + $0x108] sm:$0xff]
  %v958 = vld [vmem:[%s6 + $0x110] sm:$0xff]
  %v959 = vld [vmem:[%s6 + $0x118] sm:$0xff]
  %v960 = vld [vmem:[%s6 + $0x120] sm:$0xff]
  %v961 = vld [vmem:[%s6 + $0x128] sm:$0xff]
  %v962 = vld [vmem:[%s6 + $0x130] sm:$0xff]
  %v963 = vld [vmem:[%s6 + $0x138] sm:$0xff]
  %v964 = vld [vmem:[%s6 + $0x140] sm:$0xff]
  %v965 = vld [vmem:[%s6 + $0x148] sm:$0xff]
  %v966 = vld [vmem:[%s6 + $0x150] sm:$0xff]
  %v967 = vld [vmem:[%s6 + $0x158] sm:$0xff]
  %v968 = vld [vmem:[%s6 + $0x160] sm:$0xff]
  %v969 = vld [vmem:[%s6 + $0x168] sm:$0xff]
  %v970 = vld [vmem:[%s6 + $0x170] sm:$0xff]
  %v971 = vld [vmem:[%s6 + $0x178] sm:$0xff]
  %972 = vmatprep.subr.mxu0 %v925
  %973 = vmatpush1.msra.mxu0 %v924
  %974 = vmatprep.subr.mxu0 %v928
  %975 = vmatpush1.msra.mxu0 %v927
  %976 = vmatprep.subr.mxu0 %v931
  %977 = vmatpush1.msra.mxu0 %v930
  %978 = vmatprep.subr.mxu0 %v934
  %979 = vmatpush1.msra.mxu0 %v933
  %980 = vmatprep.subr.mxu0 %v937
  %981 = vmatpush1.msra.mxu0 %v936
  %982 = vmatprep.subr.mxu0 %v940
  %983 = vmatpush1.msra.mxu0 %v939
  %984 = vmatprep.subr.mxu0 %v943
  %985 = vmatpush1.msra.mxu0 %v942
  %986 = vmatprep.subr.mxu0 %v946
  %987 = vmatpush1.msra.mxu0 %v945
  %988 = vmatprep.subr.mxu0 %v949
  %989 = vmatpush1.msra.mxu0 %v948
  %990 = vmatprep.subr.mxu0 %v952
  %991 = vmatpush1.msra.mxu0 %v951
  %992 = vmatprep.subr.mxu0 %v955
  %993 = vmatpush1.msra.mxu0 %v954
  %994 = vmatprep.subr.mxu0 %v958
  %995 = vmatpush1.msra.mxu0 %v957
  %996 = vmatprep.subr.mxu0 %v961
  %997 = vmatpush1.msra.mxu0 %v960
  %998 = vmatprep.subr.mxu0 %v964
  %999 = vmatpush1.msra.mxu0 %v963
  %1000 = vmatprep.subr.mxu0 %v967
  %1001 = vmatpush1.msra.mxu0 %v966
  %1002 = vmatprep.subr.mxu0 %v970
  %1003 = vmatpush1.msra.mxu0 %v969
  %1004 = vmatprep.subr.mxu0 0.0
  %1005 = vmatpush1.msra.mxu0 0.0
  %1006 = vmatprep.subr.mxu0 0.0
  %1007 = vmatpush1.msra.mxu0 0.0
  %1008 = vmatprep.subr.mxu0 0.0
  %1009 = vmatpush1.msra.mxu0 0.0
  %1010 = vmatprep.subr.mxu0 0.0
  %1011 = vmatpush1.msra.mxu0 0.0
  %1012 = vmatprep.subr.mxu0 0.0
  %1013 = vmatpush1.msra.mxu0 0.0
  %1014 = vmatprep.subr.mxu0 0.0
  %1015 = vmatpush1.msra.mxu0 0.0
  %1016 = vmatprep.subr.mxu0 0.0
  %1017 = vmatpush1.msra.mxu0 0.0
  %1018 = vmatprep.subr.mxu0 0.0
  %1019 = vmatpush1.msra.mxu0 0.0
  %1020 = vmatprep.subr.mxu0 0.0
  %1021 = vmatpush1.msra.mxu0 0.0
  %1022 = vmatprep.subr.mxu0 0.0
  %1023 = vmatpush1.msra.mxu0 0.0
  %1024 = vmatprep.subr.mxu0 0.0
  %1025 = vmatpush1.msra.mxu0 0.0
  %1026 = vmatprep.subr.mxu0 0.0
  %1027 = vmatpush1.msra.mxu0 0.0
  %1028 = vmatprep.subr.mxu0 0.0
  %1029 = vmatpush1.msra.mxu0 0.0
  %1030 = vmatprep.subr.mxu0 0.0
  %1031 = vmatpush1.msra.mxu0 0.0
  %1032 = vmatprep.subr.mxu0 0.0
  %1033 = vmatpush1.msra.mxu0 0.0
  %1034 = vmatprep.subr.mxu0 0.0
  %1035 = vmatpush1.msra.mxu0 0.0
  %1036 = vmatprep.mubr.f32.mxu0 0.0
  %1037 = vmatmul.mubr.f32.gmra.mrb[0].mxu0 %v33
  %v1038 = vpop.f32.mrb[0].mxu0
  %v1039 = vadd.f32 0.0, %v1038
  %v1040 = vpop.f32.mrb[0].mxu0
  %v1041 = vadd.f32 0.0, %v1040
  %1042 = vdwg.mxu0
  %1043 = vmatprep.subr.mxu0 0.0
  %1044 = vmatpush1.msra.mxu0 %v926
  %1045 = vmatprep.subr.mxu0 0.0
  %1046 = vmatpush1.msra.mxu0 %v929
  %1047 = vmatprep.subr.mxu0 0.0
  %1048 = vmatpush1.msra.mxu0 %v932
  %1049 = vmatprep.subr.mxu0 0.0
  %1050 = vmatpush1.msra.mxu0 %v935
  %1051 = vmatprep.subr.mxu0 0.0
  %1052 = vmatpush1.msra.mxu0 %v938
  %1053 = vmatprep.subr.mxu0 0.0
  %1054 = vmatpush1.msra.mxu0 %v941
  %1055 = vmatprep.subr.mxu0 0.0
  %1056 = vmatpush1.msra.mxu0 %v944
  %1057 = vmatprep.subr.mxu0 0.0
  %1058 = vmatpush1.msra.mxu0 %v947
  %1059 = vmatprep.subr.mxu0 0.0
  %1060 = vmatpush1.msra.mxu0 %v950
  %1061 = vmatprep.subr.mxu0 0.0
  %1062 = vmatpush1.msra.mxu0 %v953
  %1063 = vmatprep.subr.mxu0 0.0
  %1064 = vmatpush1.msra.mxu0 %v956
  %1065 = vmatprep.subr.mxu0 0.0
  %1066 = vmatpush1.msra.mxu0 %v959
  %1067 = vmatprep.subr.mxu0 0.0
  %1068 = vmatpush1.msra.mxu0 %v962
  %1069 = vmatprep.subr.mxu0 0.0
  %1070 = vmatpush1.msra.mxu0 %v965
  %1071 = vmatprep.subr.mxu0 0.0
  %1072 = vmatpush1.msra.mxu0 %v968
  %1073 = vmatprep.subr.mxu0 0.0
  %1074 = vmatpush1.msra.mxu0 %v971
  %1075 = vmatprep.subr.mxu0 0.0
  %1076 = vmatpush1.msra.mxu0 0.0
  %1077 = vmatprep.subr.mxu0 0.0
  %1078 = vmatpush1.msra.mxu0 0.0
  %1079 = vmatprep.subr.mxu0 0.0
  %1080 = vmatpush1.msra.mxu0 0.0
  %1081 = vmatprep.subr.mxu0 0.0
  %1082 = vmatpush1.msra.mxu0 0.0
  %1083 = vmatprep.subr.mxu0 0.0
  %1084 = vmatpush1.msra.mxu0 0.0
  %1085 = vmatprep.subr.mxu0 0.0
  %1086 = vmatpush1.msra.mxu0 0.0
  %1087 = vmatprep.subr.mxu0 0.0
  %1088 = vmatpush1.msra.mxu0 0.0
  %1089 = vmatprep.subr.mxu0 0.0
  %1090 = vmatpush1.msra.mxu0 0.0
  %1091 = vmatprep.subr.mxu0 0.0
  %1092 = vmatpush1.msra.mxu0 0.0
  %1093 = vmatprep.subr.mxu0 0.0
  %1094 = vmatpush1.msra.mxu0 0.0
  %1095 = vmatprep.subr.mxu0 0.0
  %1096 = vmatpush1.msra.mxu0 0.0
  %1097 = vmatprep.subr.mxu0 0.0
  %1098 = vmatpush1.msra.mxu0 0.0
  %1099 = vmatprep.subr.mxu0 0.0
  %1100 = vmatpush1.msra.mxu0 0.0
  %1101 = vmatprep.subr.mxu0 0.0
  %1102 = vmatpush1.msra.mxu0 0.0
  %1103 = vmatprep.subr.mxu0 0.0
  %1104 = vmatpush1.msra.mxu0 0.0
  %1105 = vmatprep.subr.mxu0 0.0
  %1106 = vmatpush1.msra.mxu0 0.0
  %1107 = vmatprep.mubr.f32.mxu0 0.0
  %1108 = vmatmul.mubr.f32.gmra.mrb[0].mxu0 %v33
  %v1109 = vpop.f32.mrb[0].mxu0
  %v1110 = vadd.f32 0.0, %v1109
  %v1111 = vpop.f32.mrb[0].mxu0
  %1112 = vdwg.mxu0
  %v1113 = vadd.f32 %v850, %v1039
  %v1114 = vxor.u32 %v1113, 2147483648
  %v1115 = vmul.f32 %v1114, 1.442695
  %v1116 = vpow.pop %v1115
  %v1117 = vadd.f32 %v1116, 1.0
  %v1118 = vrcp.pop %v1117
  %v1119 = vmul.f32 1.0, %v1118
  %v1120 = vadd.f32 %v852, %v1041
  %v1121 = vxor.u32 %v1120, 2147483648
  %v1122 = vmul.f32 %v1121, 1.442695
  %v1123 = vpow.pop %v1122
  %v1124 = vadd.f32 %v1123, 1.0
  %v1125 = vrcp.pop %v1124
  %v1126 = vmul.f32 1.0, %v1125
  %v1127 = vmul.f32 %v1119, %v1110
  %v1128 = vadd.f32 %v921, %v1127
  %v1129 = vtanh.pop %v1128
  %v1130 = vsub.f32 %v33, %v1129
  %v1131 = vmul.f32 %v1126, %v1130
  %v1132 = vadd.f32 %v1129, %v1131
  %v1133 = vld [vmem:[%s7] sm:$0xff]
  %v1134 = vld [vmem:[%s7 + $0x8] sm:$0xff]
  %v1135 = vld [vmem:[%s7 + $0x10] sm:$0xff]
  %v1136 = vld [vmem:[%s7 + $0x18] sm:$0xff]
  %v1137 = vld [vmem:[%s7 + $0x20] sm:$0xff]
  %v1138 = vld [vmem:[%s7 + $0x28] sm:$0xff]
  %v1139 = vld [vmem:[%s7 + $0x30] sm:$0xff]
  %v1140 = vld [vmem:[%s7 + $0x38] sm:$0xff]
  %v1141 = vld [vmem:[%s7 + $0x40] sm:$0xff]
  %v1142 = vld [vmem:[%s7 + $0x48] sm:$0xff]
  %v1143 = vld [vmem:[%s7 + $0x50] sm:$0xff]
  %v1144 = vld [vmem:[%s7 + $0x58] sm:$0xff]
  %v1145 = vld [vmem:[%s7 + $0x60] sm:$0xff]
  %v1146 = vld [vmem:[%s7 + $0x68] sm:$0xff]
  %v1147 = vld [vmem:[%s7 + $0x70] sm:$0xff]
  %v1148 = vld [vmem:[%s7 + $0x78] sm:$0xff]
  %v1149 = vld [vmem:[%s7 + $0x80] sm:$0xff]
  %v1150 = vld [vmem:[%s7 + $0x88] sm:$0xff]
  %v1151 = vld [vmem:[%s7 + $0x90] sm:$0xff]
  %v1152 = vld [vmem:[%s7 + $0x98] sm:$0xff]
  %v1153 = vld [vmem:[%s7 + $0xa0] sm:$0xff]
  %v1154 = vld [vmem:[%s7 + $0xa8] sm:$0xff]
  %v1155 = vld [vmem:[%s7 + $0xb0] sm:$0xff]
  %v1156 = vld [vmem:[%s7 + $0xb8] sm:$0xff]
  %v1157 = vld [vmem:[%s7 + $0xc0] sm:$0xff]
  %v1158 = vld [vmem:[%s7 + $0xc8] sm:$0xff]
  %v1159 = vld [vmem:[%s7 + $0xd0] sm:$0xff]
  %v1160 = vld [vmem:[%s7 + $0xd8] sm:$0xff]
  %v1161 = vld [vmem:[%s7 + $0xe0] sm:$0xff]
  %v1162 = vld [vmem:[%s7 + $0xe8] sm:$0xff]
  %v1163 = vld [vmem:[%s7 + $0xf0] sm:$0xff]
  %v1164 = vld [vmem:[%s7 + $0xf8] sm:$0xff]
  %v1165 = vld [vmem:[%s7 + $0x100] sm:$0xff]
  %v1166 = vld [vmem:[%s7 + $0x108] sm:$0xff]
  %v1167 = vld [vmem:[%s7 + $0x110] sm:$0xff]
  %v1168 = vld [vmem:[%s7 + $0x118] sm:$0xff]
  %v1169 = vld [vmem:[%s7 + $0x120] sm:$0xff]
  %v1170 = vld [vmem:[%s7 + $0x128] sm:$0xff]
  %v1171 = vld [vmem:[%s7 + $0x130] sm:$0xff]
  %v1172 = vld [vmem:[%s7 + $0x138] sm:$0xff]
  %v1173 = vld [vmem:[%s7 + $0x140] sm:$0xff]
  %v1174 = vld [vmem:[%s7 + $0x148] sm:$0xff]
  %v1175 = vld [vmem:[%s7 + $0x150] sm:$0xff]
  %v1176 = vld [vmem:[%s7 + $0x158] sm:$0xff]
  %v1177 = vld [vmem:[%s7 + $0x160] sm:$0xff]
  %v1178 = vld [vmem:[%s7 + $0x168] sm:$0xff]
  %v1179 = vld [vmem:[%s7 + $0x170] sm:$0xff]
  %v1180 = vld [vmem:[%s7 + $0x178] sm:$0xff]
  %v1181 = vld [vmem:[%s7 + $0x180] sm:$0xff]
  %v1182 = vld [vmem:[%s7 + $0x188] sm:$0xff]
  %v1183 = vld [vmem:[%s7 + $0x190] sm:$0xff]
  %v1184 = vld [vmem:[%s7 + $0x198] sm:$0xff]
  %v1185 = vld [vmem:[%s7 + $0x1a0] sm:$0xff]
  %v1186 = vld [vmem:[%s7 + $0x1a8] sm:$0xff]
  %v1187 = vld [vmem:[%s7 + $0x1b0] sm:$0xff]
  %v1188 = vld [vmem:[%s7 + $0x1b8] sm:$0xff]
  %v1189 = vld [vmem:[%s7 + $0x1c0] sm:$0xff]
  %v1190 = vld [vmem:[%s7 + $0x1c8] sm:$0xff]
  %v1191 = vld [vmem:[%s7 + $0x1d0] sm:$0xff]
  %v1192 = vld [vmem:[%s7 + $0x1d8] sm:$0xff]
  %v1193 = vld [vmem:[%s7 + $0x1e0] sm:$0xff]
  %v1194 = vld [vmem:[%s7 + $0x1e8] sm:$0xff]
  %v1195 = vld [vmem:[%s7 + $0x1f0] sm:$0xff]
  %v1196 = vld [vmem:[%s7 + $0x1f8] sm:$0xff]
  %v1197 = vld [vmem:[%s7 + $0x200] sm:$0xff]
  %v1198 = vld [vmem:[%s7 + $0x208] sm:$0xff]
  %v1199 = vld [vmem:[%s7 + $0x210] sm:$0xff]
  %v1200 = vld [vmem:[%s7 + $0x218] sm:$0xff]
  %v1201 = vld [vmem:[%s7 + $0x220] sm:$0xff]
  %v1202 = vld [vmem:[%s7 + $0x228] sm:$0xff]
  %v1203 = vld [vmem:[%s7 + $0x230] sm:$0xff]
  %v1204 = vld [vmem:[%s7 + $0x238] sm:$0xff]
  %v1205 = vld [vmem:[%s7 + $0x240] sm:$0xff]
  %v1206 = vld [vmem:[%s7 + $0x248] sm:$0xff]
  %v1207 = vld [vmem:[%s7 + $0x250] sm:$0xff]
  %v1208 = vld [vmem:[%s7 + $0x258] sm:$0xff]
  %v1209 = vld [vmem:[%s7 + $0x260] sm:$0xff]
  %v1210 = vld [vmem:[%s7 + $0x268] sm:$0xff]
  %v1211 = vld [vmem:[%s7 + $0x270] sm:$0xff]
  %v1212 = vld [vmem:[%s7 + $0x278] sm:$0xff]
  %v1213 = vld [vmem:[%s7 + $0x280] sm:$0xff]
  %v1214 = vld [vmem:[%s7 + $0x288] sm:$0xff]
  %v1215 = vld [vmem:[%s7 + $0x290] sm:$0xff]
  %v1216 = vld [vmem:[%s7 + $0x298] sm:$0xff]
  %v1217 = vld [vmem:[%s7 + $0x2a0] sm:$0xff]
  %v1218 = vld [vmem:[%s7 + $0x2a8] sm:$0xff]
  %v1219 = vld [vmem:[%s7 + $0x2b0] sm:$0xff]
  %v1220 = vld [vmem:[%s7 + $0x2b8] sm:$0xff]
  %v1221 = vld [vmem:[%s7 + $0x2c0] sm:$0xff]
  %v1222 = vld [vmem:[%s7 + $0x2c8] sm:$0xff]
  %v1223 = vld [vmem:[%s7 + $0x2d0] sm:$0xff]
  %v1224 = vld [vmem:[%s7 + $0x2d8] sm:$0xff]
  %v1225 = vld [vmem:[%s7 + $0x2e0] sm:$0xff]
  %v1226 = vld [vmem:[%s7 + $0x2e8] sm:$0xff]
  %v1227 = vld [vmem:[%s7 + $0x2f0] sm:$0xff]
  %v1228 = vld [vmem:[%s7 + $0x2f8] sm:$0xff]
  %v1229 = vld [vmem:[%s7 + $0x300] sm:$0xff]
  %v1230 = vld [vmem:[%s7 + $0x308] sm:$0xff]
  %v1231 = vld [vmem:[%s7 + $0x310] sm:$0xff]
  %v1232 = vld [vmem:[%s7 + $0x318] sm:$0xff]
  %v1233 = vld [vmem:[%s7 + $0x320] sm:$0xff]
  %v1234 = vld [vmem:[%s7 + $0x328] sm:$0xff]
  %v1235 = vld [vmem:[%s7 + $0x330] sm:$0xff]
  %v1236 = vld [vmem:[%s7 + $0x338] sm:$0xff]
  %v1237 = vld [vmem:[%s7 + $0x340] sm:$0xff]
  %v1238 = vld [vmem:[%s7 + $0x348] sm:$0xff]
  %v1239 = vld [vmem:[%s7 + $0x350] sm:$0xff]
  %v1240 = vld [vmem:[%s7 + $0x358] sm:$0xff]
  %v1241 = vld [vmem:[%s7 + $0x360] sm:$0xff]
  %v1242 = vld [vmem:[%s7 + $0x368] sm:$0xff]
  %v1243 = vld [vmem:[%s7 + $0x370] sm:$0xff]
  %v1244 = vld [vmem:[%s7 + $0x378] sm:$0xff]
  %v1245 = vld [vmem:[%s7 + $0x380] sm:$0xff]
  %v1246 = vld [vmem:[%s7 + $0x388] sm:$0xff]
  %v1247 = vld [vmem:[%s7 + $0x390] sm:$0xff]
  %v1248 = vld [vmem:[%s7 + $0x398] sm:$0xff]
  %v1249 = vld [vmem:[%s7 + $0x3a0] sm:$0xff]
  %v1250 = vld [vmem:[%s7 + $0x3a8] sm:$0xff]
  %v1251 = vld [vmem:[%s7 + $0x3b0] sm:$0xff]
  %v1252 = vld [vmem:[%s7 + $0x3b8] sm:$0xff]
  %v1253 = vld [vmem:[%s7 + $0x3c0] sm:$0xff]
  %v1254 = vld [vmem:[%s7 + $0x3c8] sm:$0xff]
  %v1255 = vld [vmem:[%s7 + $0x3d0] sm:$0xff]
  %v1256 = vld [vmem:[%s7 + $0x3d8] sm:$0xff]
  %v1257 = vld [vmem:[%s7 + $0x3e0] sm:$0xff]
  %v1258 = vld [vmem:[%s7 + $0x3e8] sm:$0xff]
  %v1259 = vld [vmem:[%s7 + $0x3f0] sm:$0xff]
  %v1260 = vld [vmem:[%s7 + $0x3f8] sm:$0xff]
  %1261 = vmatprep.subr.mxu0 %v1134
  %1262 = vmatpush1.msra.mxu0 %v1133
  %1263 = vmatprep.subr.mxu0 %v1142
  %1264 = vmatpush1.msra.mxu0 %v1141
  %1265 = vmatprep.subr.mxu0 %v1150
  %1266 = vmatpush1.msra.mxu0 %v1149
  %1267 = vmatprep.subr.mxu0 %v1158
  %1268 = vmatpush1.msra.mxu0 %v1157
  %1269 = vmatprep.subr.mxu0 %v1166
  %1270 = vmatpush1.msra.mxu0 %v1165
  %1271 = vmatprep.subr.mxu0 %v1174
  %1272 = vmatpush1.msra.mxu0 %v1173
  %1273 = vmatprep.subr.mxu0 %v1182
  %1274 = vmatpush1.msra.mxu0 %v1181
  %1275 = vmatprep.subr.mxu0 %v1190
  %1276 = vmatpush1.msra.mxu0 %v1189
  %1277 = vmatprep.subr.mxu0 %v1198
  %1278 = vmatpush1.msra.mxu0 %v1197
  %1279 = vmatprep.subr.mxu0 %v1206
  %1280 = vmatpush1.msra.mxu0 %v1205
  %1281 = vmatprep.subr.mxu0 %v1214
  %1282 = vmatpush1.msra.mxu0 %v1213
  %1283 = vmatprep.subr.mxu0 %v1222
  %1284 = vmatpush1.msra.mxu0 %v1221
  %1285 = vmatprep.subr.mxu0 %v1230
  %1286 = vmatpush1.msra.mxu0 %v1229
  %1287 = vmatprep.subr.mxu0 %v1238
  %1288 = vmatpush1.msra.mxu0 %v1237
  %1289 = vmatprep.subr.mxu0 %v1246
  %1290 = vmatpush1.msra.mxu0 %v1245
  %1291 = vmatprep.subr.mxu0 %v1254
  %1292 = vmatpush1.msra.mxu0 %v1253
  %1293 = vmatprep.subr.mxu0 0.0
  %1294 = vmatpush1.msra.mxu0 0.0
  %1295 = vmatprep.subr.mxu0 0.0
  %1296 = vmatpush1.msra.mxu0 0.0
  %1297 = vmatprep.subr.mxu0 0.0
  %1298 = vmatpush1.msra.mxu0 0.0
  %1299 = vmatprep.subr.mxu0 0.0
  %1300 = vmatpush1.msra.mxu0 0.0
  %1301 = vmatprep.subr.mxu0 0.0
  %1302 = vmatpush1.msra.mxu0 0.0
  %1303 = vmatprep.subr.mxu0 0.0
  %1304 = vmatpush1.msra.mxu0 0.0
  %1305 = vmatprep.subr.mxu0 0.0
  %1306 = vmatpush1.msra.mxu0 0.0
  %1307 = vmatprep.subr.mxu0 0.0
  %1308 = vmatpush1.msra.mxu0 0.0
  %1309 = vmatprep.subr.mxu0 0.0
  %1310 = vmatpush1.msra.mxu0 0.0
  %1311 = vmatprep.subr.mxu0 0.0
  %1312 = vmatpush1.msra.mxu0 0.0
  %1313 = vmatprep.subr.mxu0 0.0
  %1314 = vmatpush1.msra.mxu0 0.0
  %1315 = vmatprep.subr.mxu0 0.0
  %1316 = vmatpush1.msra.mxu0 0.0
  %1317 = vmatprep.subr.mxu0 0.0
  %1318 = vmatpush1.msra.mxu0 0.0
  %1319 = vmatprep.subr.mxu0 0.0
  %1320 = vmatpush1.msra.mxu0 0.0
  %1321 = vmatprep.subr.mxu0 0.0
  %1322 = vmatpush1.msra.mxu0 0.0
  %1323 = vmatprep.subr.mxu0 0.0
  %1324 = vmatpush1.msra.mxu0 0.0
  %1325 = vmatprep.mubr.f32.mxu0 0.0
  %1326 = vmatmul.mubr.f32.gmra.mrb[0].mxu0 %v1132
  %v1327 = vpop.f32.mrb[0].mxu0
  %v1328 = vadd.f32 0.0, %v1327
  %v1329 = vpop.f32.mrb[0].mxu0
  %v1330 = vadd.f32 0.0, %v1329
  %1331 = vdwg.mxu0
  %1332 = vmatprep.subr.mxu0 %v1136
  %1333 = vmatpush1.msra.mxu0 %v1135
  %1334 = vmatprep.subr.mxu0 %v1144
  %1335 = vmatpush1.msra.mxu0 %v1143
  %1336 = vmatprep.subr.mxu0 %v1152
  %1337 = vmatpush1.msra.mxu0 %v1151
  %1338 = vmatprep.subr.mxu0 %v1160
  %1339 = vmatpush1.msra.mxu0 %v1159
  %1340 = vmatprep.subr.mxu0 %v1168
  %1341 = vmatpush1.msra.mxu0 %v1167
  %1342 = vmatprep.subr.mxu0 %v1176
  %1343 = vmatpush1.msra.mxu0 %v1175
  %1344 = vmatprep.subr.mxu0 %v1184
  %1345 = vmatpush1.msra.mxu0 %v1183
  %1346 = vmatprep.subr.mxu0 %v1192
  %1347 = vmatpush1.msra.mxu0 %v1191
  %1348 = vmatprep.subr.mxu0 %v1200
  %1349 = vmatpush1.msra.mxu0 %v1199
  %1350 = vmatprep.subr.mxu0 %v1208
  %1351 = vmatpush1.msra.mxu0 %v1207
  %1352 = vmatprep.subr.mxu0 %v1216
  %1353 = vmatpush1.msra.mxu0 %v1215
  %1354 = vmatprep.subr.mxu0 %v1224
  %1355 = vmatpush1.msra.mxu0 %v1223
  %1356 = vmatprep.subr.mxu0 %v1232
  %1357 = vmatpush1.msra.mxu0 %v1231
  %1358 = vmatprep.subr.mxu0 %v1240
  %1359 = vmatpush1.msra.mxu0 %v1239
  %1360 = vmatprep.subr.mxu0 %v1248
  %1361 = vmatpush1.msra.mxu0 %v1247
  %1362 = vmatprep.subr.mxu0 %v1256
  %1363 = vmatpush1.msra.mxu0 %v1255
  %1364 = vmatprep.subr.mxu0 0.0
  %1365 = vmatpush1.msra.mxu0 0.0
  %1366 = vmatprep.subr.mxu0 0.0
  %1367 = vmatpush1.msra.mxu0 0.0
  %1368 = vmatprep.subr.mxu0 0.0
  %1369 = vmatpush1.msra.mxu0 0.0
  %1370 = vmatprep.subr.mxu0 0.0
  %1371 = vmatpush1.msra.mxu0 0.0
  %1372 = vmatprep.subr.mxu0 0.0
  %1373 = vmatpush1.msra.mxu0 0.0
  %1374 = vmatprep.subr.mxu0 0.0
  %1375 = vmatpush1.msra.mxu0 0.0
  %1376 = vmatprep.subr.mxu0 0.0
  %1377 = vmatpush1.msra.mxu0 0.0
  %1378 = vmatprep.subr.mxu0 0.0
  %1379 = vmatpush1.msra.mxu0 0.0
  %1380 = vmatprep.subr.mxu0 0.0
  %1381 = vmatpush1.msra.mxu0 0.0
  %1382 = vmatprep.subr.mxu0 0.0
  %1383 = vmatpush1.msra.mxu0 0.0
  %1384 = vmatprep.subr.mxu0 0.0
  %1385 = vmatpush1.msra.mxu0 0.0
  %1386 = vmatprep.subr.mxu0 0.0
  %1387 = vmatpush1.msra.mxu0 0.0
  %1388 = vmatprep.subr.mxu0 0.0
  %1389 = vmatpush1.msra.mxu0 0.0
  %1390 = vmatprep.subr.mxu0 0.0
  %1391 = vmatpush1.msra.mxu0 0.0
  %1392 = vmatprep.subr.mxu0 0.0
  %1393 = vmatpush1.msra.mxu0 0.0
  %1394 = vmatprep.subr.mxu0 0.0
  %1395 = vmatpush1.msra.mxu0 0.0
  %1396 = vmatprep.mubr.f32.mxu0 0.0
  %1397 = vmatmul.mubr.f32.gmra.mrb[0].mxu0 %v1132
  %v1398 = vpop.f32.mrb[0].mxu0
  %v1399 = vadd.f32 0.0, %v1398
  %v1400 = vpop.f32.mrb[0].mxu0
  %v1401 = vadd.f32 0.0, %v1400
  %1402 = vdwg.mxu0
  %1403 = vmatprep.subr.mxu0 %v1138
  %1404 = vmatpush1.msra.mxu0 %v1137
  %1405 = vmatprep.subr.mxu0 %v1146
  %1406 = vmatpush1.msra.mxu0 %v1145
  %1407 = vmatprep.subr.mxu0 %v1154
  %1408 = vmatpush1.msra.mxu0 %v1153
  %1409 = vmatprep.subr.mxu0 %v1162
  %1410 = vmatpush1.msra.mxu0 %v1161
  %1411 = vmatprep.subr.mxu0 %v1170
  %1412 = vmatpush1.msra.mxu0 %v1169
  %1413 = vmatprep.subr.mxu0 %v1178
  %1414 = vmatpush1.msra.mxu0 %v1177
  %1415 = vmatprep.subr.mxu0 %v1186
  %1416 = vmatpush1.msra.mxu0 %v1185
  %1417 = vmatprep.subr.mxu0 %v1194
  %1418 = vmatpush1.msra.mxu0 %v1193
  %1419 = vmatprep.subr.mxu0 %v1202
  %1420 = vmatpush1.msra.mxu0 %v1201
  %1421 = vmatprep.subr.mxu0 %v1210
  %1422 = vmatpush1.msra.mxu0 %v1209
  %1423 = vmatprep.subr.mxu0 %v1218
  %1424 = vmatpush1.msra.mxu0 %v1217
  %1425 = vmatprep.subr.mxu0 %v1226
  %1426 = vmatpush1.msra.mxu0 %v1225
  %1427 = vmatprep.subr.mxu0 %v1234
  %1428 = vmatpush1.msra.mxu0 %v1233
  %1429 = vmatprep.subr.mxu0 %v1242
  %1430 = vmatpush1.msra.mxu0 %v1241
  %1431 = vmatprep.subr.mxu0 %v1250
  %1432 = vmatpush1.msra.mxu0 %v1249
  %1433 = vmatprep.subr.mxu0 %v1258
  %1434 = vmatpush1.msra.mxu0 %v1257
  %1435 = vmatprep.subr.mxu0 0.0
  %1436 = vmatpush1.msra.mxu0 0.0
  %1437 = vmatprep.subr.mxu0 0.0
  %1438 = vmatpush1.msra.mxu0 0.0
  %1439 = vmatprep.subr.mxu0 0.0
  %1440 = vmatpush1.msra.mxu0 0.0
  %1441 = vmatprep.subr.mxu0 0.0
  %1442 = vmatpush1.msra.mxu0 0.0
  %1443 = vmatprep.subr.mxu0 0.0
  %1444 = vmatpush1.msra.mxu0 0.0
  %1445 = vmatprep.subr.mxu0 0.0
  %1446 = vmatpush1.msra.mxu0 0.0
  %1447 = vmatprep.subr.mxu0 0.0
  %1448 = vmatpush1.msra.mxu0 0.0
  %1449 = vmatprep.subr.mxu0 0.0
  %1450 = vmatpush1.msra.mxu0 0.0
  %1451 = vmatprep.subr.mxu0 0.0
  %1452 = vmatpush1.msra.mxu0 0.0
  %1453 = vmatprep.subr.mxu0 0.0
  %1454 = vmatpush1.msra.mxu0 0.0
  %1455 = vmatprep.subr.mxu0 0.0
  %1456 = vmatpush1.msra.mxu0 0.0
  %1457 = vmatprep.subr.mxu0 0.0
  %1458 = vmatpush1.msra.mxu0 0.0
  %1459 = vmatprep.subr.mxu0 0.0
  %1460 = vmatpush1.msra.mxu0 0.0
  %1461 = vmatprep.subr.mxu0 0.0
  %1462 = vmatpush1.msra.mxu0 0.0
  %1463 = vmatprep.subr.mxu0 0.0
  %1464 = vmatpush1.msra.mxu0 0.0
  %1465 = vmatprep.subr.mxu0 0.0
  %1466 = vmatpush1.msra.mxu0 0.0
  %1467 = vmatprep.mubr.f32.mxu0 0.0
  %1468 = vmatmul.mubr.f32.gmra.mrb[0].mxu0 %v1132
  %v1469 = vpop.f32.mrb[0].mxu0
  %v1470 = vadd.f32 0.0, %v1469
  %v1471 = vpop.f32.mrb[0].mxu0
  %v1472 = vadd.f32 0.0, %v1471
  %1473 = vdwg.mxu0
  %1474 = vmatprep.subr.mxu0 %v1140
  %1475 = vmatpush1.msra.mxu0 %v1139
  %1476 = vmatprep.subr.mxu0 %v1148
  %1477 = vmatpush1.msra.mxu0 %v1147
  %1478 = vmatprep.subr.mxu0 %v1156
  %1479 = vmatpush1.msra.mxu0 %v1155
  %1480 = vmatprep.subr.mxu0 %v1164
  %1481 = vmatpush1.msra.mxu0 %v1163
  %1482 = vmatprep.subr.mxu0 %v1172
  %1483 = vmatpush1.msra.mxu0 %v1171
  %1484 = vmatprep.subr.mxu0 %v1180
  %1485 = vmatpush1.msra.mxu0 %v1179
  %1486 = vmatprep.subr.mxu0 %v1188
  %1487 = vmatpush1.msra.mxu0 %v1187
  %1488 = vmatprep.subr.mxu0 %v1196
  %1489 = vmatpush1.msra.mxu0 %v1195
  %1490 = vmatprep.subr.mxu0 %v1204
  %1491 = vmatpush1.msra.mxu0 %v1203
  %1492 = vmatprep.subr.mxu0 %v1212
  %1493 = vmatpush1.msra.mxu0 %v1211
  %1494 = vmatprep.subr.mxu0 %v1220
  %1495 = vmatpush1.msra.mxu0 %v1219
  %1496 = vmatprep.subr.mxu0 %v1228
  %1497 = vmatpush1.msra.mxu0 %v1227
  %1498 = vmatprep.subr.mxu0 %v1236
  %1499 = vmatpush1.msra.mxu0 %v1235
  %1500 = vmatprep.subr.mxu0 %v1244
  %1501 = vmatpush1.msra.mxu0 %v1243
  %1502 = vmatprep.subr.mxu0 %v1252
  %1503 = vmatpush1.msra.mxu0 %v1251
  %1504 = vmatprep.subr.mxu0 %v1260
  %1505 = vmatpush1.msra.mxu0 %v1259
  %1506 = vmatprep.subr.mxu0 0.0
  %1507 = vmatpush1.msra.mxu0 0.0
  %1508 = vmatprep.subr.mxu0 0.0
  %1509 = vmatpush1.msra.mxu0 0.0
  %1510 = vmatprep.subr.mxu0 0.0
  %1511 = vmatpush1.msra.mxu0 0.0
  %1512 = vmatprep.subr.mxu0 0.0
  %1513 = vmatpush1.msra.mxu0 0.0
  %1514 = vmatprep.subr.mxu0 0.0
  %1515 = vmatpush1.msra.mxu0 0.0
  %1516 = vmatprep.subr.mxu0 0.0
  %1517 = vmatpush1.msra.mxu0 0.0
  %1518 = vmatprep.subr.mxu0 0.0
  %1519 = vmatpush1.msra.mxu0 0.0
  %1520 = vmatprep.subr.mxu0 0.0
  %1521 = vmatpush1.msra.mxu0 0.0
  %1522 = vmatprep.subr.mxu0 0.0
  %1523 = vmatpush1.msra.mxu0 0.0
  %1524 = vmatprep.subr.mxu0 0.0
  %1525 = vmatpush1.msra.mxu0 0.0
  %1526 = vmatprep.subr.mxu0 0.0
  %1527 = vmatpush1.msra.mxu0 0.0
  %1528 = vmatprep.subr.mxu0 0.0
  %1529 = vmatpush1.msra.mxu0 0.0
  %1530 = vmatprep.subr.mxu0 0.0
  %1531 = vmatpush1.msra.mxu0 0.0
  %1532 = vmatprep.subr.mxu0 0.0
  %1533 = vmatpush1.msra.mxu0 0.0
  %1534 = vmatprep.subr.mxu0 0.0
  %1535 = vmatpush1.msra.mxu0 0.0
  %1536 = vmatprep.subr.mxu0 0.0
  %1537 = vmatpush1.msra.mxu0 0.0
  %1538 = vmatprep.mubr.f32.mxu0 0.0
  %1539 = vmatmul.mubr.f32.gmra.mrb[0].mxu0 %v1132
  %v1540 = vpop.f32.mrb[0].mxu0
  %v1541 = vadd.f32 0.0, %v1540
  %v1542 = vpop.f32.mrb[0].mxu0
  %v1543 = vadd.f32 0.0, %v1542
  %1544 = vdwg.mxu0
  %v1547 = vcombine.low %v1328, %v1330
  %v1549 = vunpack.c.l.s4 1966171168
  %v1550 = vunpack.c.0.s8 %v1549
  %v1551 = vlaneseq
  %v1552 = vshrl.u32 %v1551, 7
  %v1553 = vsub.s32 %v1550, %v1552
  %v1554 = vrot.slane %v1547, %v1553
  %v1555 = vcombine.high %v1554, %v1554
  %v1557 = vunpack.c.l.s4 1966171168
  %v1558 = vunpack.c.0.s8 %v1557
  %v1559 = vlaneseq
  %v1560 = vshrl.u32 %v1559, 7
  %v1561 = vsub.s32 %v1558, %v1560
  %v1562 = vrot.slane %v1554, %v1561
  %v1564 = vunpack.c.l.s4 1966171168
  %v1565 = vunpack.c.0.s8 %v1564
  %v1566 = vlaneseq
  %v1567 = vshrl.u32 %v1566, 7
  %v1568 = vsub.s32 %v1565, %v1567
  %v1569 = vrot.slane %v1555, %v1568
  %v1572 = vlaneseq
  %vm1573 = vcmp.ge.s32.totalorder %v1572, 0
  %vm1574 = vcmp.lt.s32.totalorder %v1572, 256
  %vm1575 = vmand %vm1573, %vm1574
  %1576 = vst.msk [vmem:[#allocation2] ss:$4 sm:$0x3] %vm1575, %v1562
  %s1577 = scalar_lea.vmem [#allocation2], 8
  %1578 = vst.msk [vmem:[%s1577] ss:$4 sm:$0x3] %vm1575, %v1569
  %v1581 = vcombine.low %v1399, %v1401
  %v1583 = vunpack.c.l.s4 1966171168
  %v1584 = vunpack.c.0.s8 %v1583
  %v1585 = vlaneseq
  %v1586 = vshrl.u32 %v1585, 7
  %v1587 = vsub.s32 %v1584, %v1586
  %v1588 = vrot.slane %v1581, %v1587
  %v1589 = vcombine.high %v1588, %v1588
  %v1591 = vunpack.c.l.s4 1966171168
  %v1592 = vunpack.c.0.s8 %v1591
  %v1593 = vlaneseq
  %v1594 = vshrl.u32 %v1593, 7
  %v1595 = vsub.s32 %v1592, %v1594
  %v1596 = vrot.slane %v1588, %v1595
  %v1598 = vunpack.c.l.s4 1966171168
  %v1599 = vunpack.c.0.s8 %v1598
  %v1600 = vlaneseq
  %v1601 = vshrl.u32 %v1600, 7
  %v1602 = vsub.s32 %v1599, %v1601
  %v1603 = vrot.slane %v1589, %v1602
  %s1606 = scalar_lea.vmem [#allocation2], 1
  %1607 = vst.msk [vmem:[%s1606] ss:$4 sm:$0x3] %vm1575, %v1596
  %s1608 = scalar_lea.vmem [#allocation2], 9
  %1609 = vst.msk [vmem:[%s1608] ss:$4 sm:$0x3] %vm1575, %v1603
  %v1612 = vcombine.low %v1470, %v1472
  %v1614 = vunpack.c.l.s4 1966171168
  %v1615 = vunpack.c.0.s8 %v1614
  %v1616 = vlaneseq
  %v1617 = vshrl.u32 %v1616, 7
  %v1618 = vsub.s32 %v1615, %v1617
  %v1619 = vrot.slane %v1612, %v1618
  %v1620 = vcombine.high %v1619, %v1619
  %v1622 = vunpack.c.l.s4 1966171168
  %v1623 = vunpack.c.0.s8 %v1622
  %v1624 = vlaneseq
  %v1625 = vshrl.u32 %v1624, 7
  %v1626 = vsub.s32 %v1623, %v1625
  %v1627 = vrot.slane %v1619, %v1626
  %v1629 = vunpack.c.l.s4 1966171168
  %v1630 = vunpack.c.0.s8 %v1629
  %v1631 = vlaneseq
  %v1632 = vshrl.u32 %v1631, 7
  %v1633 = vsub.s32 %v1630, %v1632
  %v1634 = vrot.slane %v1620, %v1633
  %s1637 = scalar_lea.vmem [#allocation2], 2
  %1638 = vst.msk [vmem:[%s1637] ss:$4 sm:$0x3] %vm1575, %v1627
  %s1639 = scalar_lea.vmem [#allocation2], 10
  %1640 = vst.msk [vmem:[%s1639] ss:$4 sm:$0x3] %vm1575, %v1634
  %v1643 = vcombine.low %v1541, %v1543
  %v1645 = vunpack.c.l.s4 1966171168
  %v1646 = vunpack.c.0.s8 %v1645
  %v1647 = vlaneseq
  %v1648 = vshrl.u32 %v1647, 7
  %v1649 = vsub.s32 %v1646, %v1648
  %v1650 = vrot.slane %v1643, %v1649
  %v1651 = vcombine.high %v1650, %v1650
  %v1653 = vunpack.c.l.s4 1966171168
  %v1654 = vunpack.c.0.s8 %v1653
  %v1655 = vlaneseq
  %v1656 = vshrl.u32 %v1655, 7
  %v1657 = vsub.s32 %v1654, %v1656
  %v1658 = vrot.slane %v1650, %v1657
  %v1660 = vunpack.c.l.s4 1966171168
  %v1661 = vunpack.c.0.s8 %v1660
  %v1662 = vlaneseq
  %v1663 = vshrl.u32 %v1662, 7
  %v1664 = vsub.s32 %v1661, %v1663
  %v1665 = vrot.slane %v1651, %v1664
  %s1668 = scalar_lea.vmem [#allocation2], 3
  %1669 = vst.msk [vmem:[%s1668] ss:$4 sm:$0x3] %vm1575, %v1658
  %s1670 = scalar_lea.vmem [#allocation2], 11
  %1671 = vst.msk [vmem:[%s1670] ss:$4 sm:$0x3] %vm1575, %v1665
  %v1672 = vld [vmem:[#allocation2] sm:$0xf]
  %v1673 = vld [vmem:[#allocation2 + $0x8] sm:$0xf]
  %v1674 = vld [vmem:[#allocation2 + $0x4] sm:$0xf]
  %v1675 = vld [vmem:[#allocation2 + $0xc] sm:$0xf]
  %1677 = vrot.lane.b32.xlu0 %v1672, 64
  %v1678 = vpop.permute.xlu0 %1677
  %v1679 = vsel %vm275, %v1672, 0
  %v1681 = vsel %vm275, %v1678, 0
  %1683 = vmatprep.subr.mxu0 0.0
  %1684 = vmatpush1.xpose.msra.mxu0 %v1681
  %1685 = vmatprep.subr.mxu0 0.0
  %1686 = vmatpush1.xpose.msra.mxu0 0.0
  %1687 = vmatprep.subr.mxu0 0.0
  %1688 = vmatpush1.xpose.msra.mxu0 0.0
  %1689 = vmatprep.subr.mxu0 0.0
  %1690 = vmatpush1.xpose.msra.mxu0 0.0
  %1691 = vmatprep.subr.mxu0 0.0
  %1692 = vmatpush1.xpose.msra.mxu0 0.0
  %1693 = vmatprep.subr.mxu0 0.0
  %1694 = vmatpush1.xpose.msra.mxu0 0.0
  %1695 = vmatprep.subr.mxu0 0.0
  %1696 = vmatpush1.xpose.msra.mxu0 0.0
  %1697 = vmatprep.subr.mxu0 0.0
  %1698 = vmatpush1.xpose.msra.mxu0 0.0
  %1699 = vmatprep.subr.mxu0 0.0
  %1700 = vmatpush1.xpose.msra.mxu0 0.0
  %1701 = vmatprep.subr.mxu0 0.0
  %1702 = vmatpush1.xpose.msra.mxu0 0.0
  %1703 = vmatprep.subr.mxu0 0.0
  %1704 = vmatpush1.xpose.msra.mxu0 0.0
  %1705 = vmatprep.subr.mxu0 0.0
  %1706 = vmatpush1.xpose.msra.mxu0 0.0
  %1707 = vmatprep.subr.mxu0 0.0
  %1708 = vmatpush1.xpose.msra.mxu0 0.0
  %1709 = vmatprep.subr.mxu0 0.0
  %1710 = vmatpush1.xpose.msra.mxu0 0.0
  %1711 = vmatprep.subr.mxu0 0.0
  %1712 = vmatpush1.xpose.msra.mxu0 0.0
  %1713 = vmatprep.subr.mxu0 0.0
  %1714 = vmatpush1.xpose.msra.mxu0 0.0
  %1715 = vmatprep.subr.mxu0 0.0
  %1716 = vmatpush1.xpose.msra.mxu0 0.0
  %1717 = vmatprep.subr.mxu0 0.0
  %1718 = vmatpush1.xpose.msra.mxu0 0.0
  %1719 = vmatprep.subr.mxu0 0.0
  %1720 = vmatpush1.xpose.msra.mxu0 0.0
  %1721 = vmatprep.subr.mxu0 0.0
  %1722 = vmatpush1.xpose.msra.mxu0 0.0
  %1723 = vmatprep.subr.mxu0 0.0
  %1724 = vmatpush1.xpose.msra.mxu0 0.0
  %1725 = vmatprep.subr.mxu0 0.0
  %1726 = vmatpush1.xpose.msra.mxu0 0.0
  %1727 = vmatprep.subr.mxu0 0.0
  %1728 = vmatpush1.xpose.msra.mxu0 0.0
  %1729 = vmatprep.subr.mxu0 0.0
  %1730 = vmatpush1.xpose.msra.mxu0 0.0
  %1731 = vmatprep.subr.mxu0 0.0
  %1732 = vmatpush1.xpose.msra.mxu0 0.0
  %1733 = vmatprep.subr.mxu0 0.0
  %1734 = vmatpush1.xpose.msra.mxu0 0.0
  %1735 = vmatprep.subr.mxu0 0.0
  %1736 = vmatpush1.xpose.msra.mxu0 0.0
  %1737 = vmatprep.subr.mxu0 0.0
  %1738 = vmatpush1.xpose.msra.mxu0 0.0
  %1739 = vmatprep.subr.mxu0 0.0
  %1740 = vmatpush1.xpose.msra.mxu0 0.0
  %1741 = vmatprep.subr.mxu0 0.0
  %1742 = vmatpush1.xpose.msra.mxu0 0.0
  %1743 = vmatprep.subr.mxu0 0.0
  %1744 = vmatpush1.xpose.msra.mxu0 0.0
  %1745 = vmatprep.subr.mxu0 0.0
  %1746 = vmatpush1.xpose.msra.mxu0 0.0
  %1747 = vmatprep.mubr.f32.mxu0 0.0
  %1748 = vmatmul.mubr.f32.gmra.mrb[0].mxu0 %v1679
  %v1749 = vpop.f32.mrb[0].mxu0
  %v1750 = vadd.f32 0.0, %v1749
  %v1751 = vpop.f32.mrb[0].mxu0
  %1752 = vdwg.mxu0
  %1754 = vrot.lane.b32.xlu0 %v1673, 64
  %v1755 = vpop.permute.xlu0 %1754
  %v1756 = vsel %vm275, %v1673, 0
  %v1758 = vsel %vm275, %v1755, 0
  %1760 = vmatprep.subr.mxu0 0.0
  %1761 = vmatpush1.xpose.msra.mxu0 %v1758
  %1762 = vmatprep.subr.mxu0 0.0
  %1763 = vmatpush1.xpose.msra.mxu0 0.0
  %1764 = vmatprep.subr.mxu0 0.0
  %1765 = vmatpush1.xpose.msra.mxu0 0.0
  %1766 = vmatprep.subr.mxu0 0.0
  %1767 = vmatpush1.xpose.msra.mxu0 0.0
  %1768 = vmatprep.subr.mxu0 0.0
  %1769 = vmatpush1.xpose.msra.mxu0 0.0
  %1770 = vmatprep.subr.mxu0 0.0
  %1771 = vmatpush1.xpose.msra.mxu0 0.0
  %1772 = vmatprep.subr.mxu0 0.0
  %1773 = vmatpush1.xpose.msra.mxu0 0.0
  %1774 = vmatprep.subr.mxu0 0.0
  %1775 = vmatpush1.xpose.msra.mxu0 0.0
  %1776 = vmatprep.subr.mxu0 0.0
  %1777 = vmatpush1.xpose.msra.mxu0 0.0
  %1778 = vmatprep.subr.mxu0 0.0
  %1779 = vmatpush1.xpose.msra.mxu0 0.0
  %1780 = vmatprep.subr.mxu0 0.0
  %1781 = vmatpush1.xpose.msra.mxu0 0.0
  %1782 = vmatprep.subr.mxu0 0.0
  %1783 = vmatpush1.xpose.msra.mxu0 0.0
  %1784 = vmatprep.subr.mxu0 0.0
  %1785 = vmatpush1.xpose.msra.mxu0 0.0
  %1786 = vmatprep.subr.mxu0 0.0
  %1787 = vmatpush1.xpose.msra.mxu0 0.0
  %1788 = vmatprep.subr.mxu0 0.0
  %1789 = vmatpush1.xpose.msra.mxu0 0.0
  %1790 = vmatprep.subr.mxu0 0.0
  %1791 = vmatpush1.xpose.msra.mxu0 0.0
  %1792 = vmatprep.subr.mxu0 0.0
  %1793 = vmatpush1.xpose.msra.mxu0 0.0
  %1794 = vmatprep.subr.mxu0 0.0
  %1795 = vmatpush1.xpose.msra.mxu0 0.0
  %1796 = vmatprep.subr.mxu0 0.0
  %1797 = vmatpush1.xpose.msra.mxu0 0.0
  %1798 = vmatprep.subr.mxu0 0.0
  %1799 = vmatpush1.xpose.msra.mxu0 0.0
  %1800 = vmatprep.subr.mxu0 0.0
  %1801 = vmatpush1.xpose.msra.mxu0 0.0
  %1802 = vmatprep.subr.mxu0 0.0
  %1803 = vmatpush1.xpose.msra.mxu0 0.0
  %1804 = vmatprep.subr.mxu0 0.0
  %1805 = vmatpush1.xpose.msra.mxu0 0.0
  %1806 = vmatprep.subr.mxu0 0.0
  %1807 = vmatpush1.xpose.msra.mxu0 0.0
  %1808 = vmatprep.subr.mxu0 0.0
  %1809 = vmatpush1.xpose.msra.mxu0 0.0
  %1810 = vmatprep.subr.mxu0 0.0
  %1811 = vmatpush1.xpose.msra.mxu0 0.0
  %1812 = vmatprep.subr.mxu0 0.0
  %1813 = vmatpush1.xpose.msra.mxu0 0.0
  %1814 = vmatprep.subr.mxu0 0.0
  %1815 = vmatpush1.xpose.msra.mxu0 0.0
  %1816 = vmatprep.subr.mxu0 0.0
  %1817 = vmatpush1.xpose.msra.mxu0 0.0
  %1818 = vmatprep.subr.mxu0 0.0
  %1819 = vmatpush1.xpose.msra.mxu0 0.0
  %1820 = vmatprep.subr.mxu0 0.0
  %1821 = vmatpush1.xpose.msra.mxu0 0.0
  %1822 = vmatprep.subr.mxu0 0.0
  %1823 = vmatpush1.xpose.msra.mxu0 0.0
  %1824 = vmatprep.mubr.f32.mxu0 0.0
  %1825 = vmatmul.mubr.f32.gmra.mrb[0].mxu0 %v1756
  %v1826 = vpop.f32.mrb[0].mxu0
  %v1827 = vadd.f32 0.0, %v1826
  %v1828 = vpop.f32.mrb[0].mxu0
  %1829 = vdwg.mxu0
  %v1830 = vmul.f32 %v1750, 0.25
  %v1831 = vmul.f32 %v1827, 0.25
  %v1832 = vsel %vm505, %v1830, -inf
  %1833 = vmax.xlane.f32.xlu0 %v1832
  %v1834 = vpop.xlane.xlu0 %1833
  %v1835 = vsel %vm505, %v1831, -inf
  %1836 = vmax.xlane.f32.xlu0 %v1835
  %v1837 = vpop.xlane.xlu0 %1836
  %v1838 = vsub.f32 %v1830, %v1834
  %v1839 = vsub.f32 %v1831, %v1837
  %v1840 = vmul.f32 %v1838, 1.442695
  %v1841 = vpow.pop %v1840
  %v1842 = vmul.f32 %v1839, 1.442695
  %v1843 = vpow.pop %v1842
  %v1844 = vsel %vm505, %v1841, 0.0
  %1845 = vadd.xlane.f32.xlu0 %v1844
  %v1846 = vpop.xlane.xlu0 %1845
  %v1847 = vsel %vm505, %v1843, 0.0
  %1848 = vadd.xlane.f32.xlu0 %v1847
  %v1849 = vpop.xlane.xlu0 %1848
  %v1850 = vrcp.pop %v1846
  %v1851 = vrcp.pop %v1849
  %v1852 = vmul.f32 %v1841, %v1850
  %v1853 = vmul.f32 %v1843, %v1851
  %v1854 = vmul.f32 %v1852, %v536
  %v1855 = vmul.f32 %v1853, %v537
  %v1857 = vsel %vm545, %v1854, 0
  %v1860 = vsel %vm549, %v1674, 0
  %1862 = vmatprep.subr.mxu0 0.0
  %1863 = vmatpush1.msra.mxu0 %v1860
  %1864 = vmatprep.subr.mxu0 0.0
  %1865 = vmatpush1.msra.mxu0 0.0
  %1866 = vmatprep.subr.mxu0 0.0
  %1867 = vmatpush1.msra.mxu0 0.0
  %1868 = vmatprep.subr.mxu0 0.0
  %1869 = vmatpush1.msra.mxu0 0.0
  %1870 = vmatprep.subr.mxu0 0.0
  %1871 = vmatpush1.msra.mxu0 0.0
  %1872 = vmatprep.subr.mxu0 0.0
  %1873 = vmatpush1.msra.mxu0 0.0
  %1874 = vmatprep.subr.mxu0 0.0
  %1875 = vmatpush1.msra.mxu0 0.0
  %1876 = vmatprep.subr.mxu0 0.0
  %1877 = vmatpush1.msra.mxu0 0.0
  %1878 = vmatprep.subr.mxu0 0.0
  %1879 = vmatpush1.msra.mxu0 0.0
  %1880 = vmatprep.subr.mxu0 0.0
  %1881 = vmatpush1.msra.mxu0 0.0
  %1882 = vmatprep.subr.mxu0 0.0
  %1883 = vmatpush1.msra.mxu0 0.0
  %1884 = vmatprep.subr.mxu0 0.0
  %1885 = vmatpush1.msra.mxu0 0.0
  %1886 = vmatprep.subr.mxu0 0.0
  %1887 = vmatpush1.msra.mxu0 0.0
  %1888 = vmatprep.subr.mxu0 0.0
  %1889 = vmatpush1.msra.mxu0 0.0
  %1890 = vmatprep.subr.mxu0 0.0
  %1891 = vmatpush1.msra.mxu0 0.0
  %1892 = vmatprep.subr.mxu0 0.0
  %1893 = vmatpush1.msra.mxu0 0.0
  %1894 = vmatprep.subr.mxu0 0.0
  %1895 = vmatpush1.msra.mxu0 0.0
  %1896 = vmatprep.subr.mxu0 0.0
  %1897 = vmatpush1.msra.mxu0 0.0
  %1898 = vmatprep.subr.mxu0 0.0
  %1899 = vmatpush1.msra.mxu0 0.0
  %1900 = vmatprep.subr.mxu0 0.0
  %1901 = vmatpush1.msra.mxu0 0.0
  %1902 = vmatprep.subr.mxu0 0.0
  %1903 = vmatpush1.msra.mxu0 0.0
  %1904 = vmatprep.subr.mxu0 0.0
  %1905 = vmatpush1.msra.mxu0 0.0
  %1906 = vmatprep.subr.mxu0 0.0
  %1907 = vmatpush1.msra.mxu0 0.0
  %1908 = vmatprep.subr.mxu0 0.0
  %1909 = vmatpush1.msra.mxu0 0.0
  %1910 = vmatprep.subr.mxu0 0.0
  %1911 = vmatpush1.msra.mxu0 0.0
  %1912 = vmatprep.subr.mxu0 0.0
  %1913 = vmatpush1.msra.mxu0 0.0
  %1914 = vmatprep.subr.mxu0 0.0
  %1915 = vmatpush1.msra.mxu0 0.0
  %1916 = vmatprep.subr.mxu0 0.0
  %1917 = vmatpush1.msra.mxu0 0.0
  %1918 = vmatprep.subr.mxu0 0.0
  %1919 = vmatpush1.msra.mxu0 0.0
  %1920 = vmatprep.subr.mxu0 0.0
  %1921 = vmatpush1.msra.mxu0 0.0
  %1922 = vmatprep.subr.mxu0 0.0
  %1923 = vmatpush1.msra.mxu0 0.0
  %1924 = vmatprep.subr.mxu0 0.0
  %1925 = vmatpush1.msra.mxu0 0.0
  %1926 = vmatprep.mubr.f32.mxu0 0.0
  %1927 = vmatmul.mubr.f32.gmra.mrb[0].mxu0 %v1857
  %v1928 = vpop.f32.mrb[0].mxu0
  %v1929 = vadd.f32 0.0, %v1928
  %v1930 = vpop.f32.mrb[0].mxu0
  %1931 = vdwg.mxu0
  %v1933 = vsel %vm545, %v1855, 0
  %v1936 = vsel %vm549, %v1675, 0
  %1938 = vmatprep.subr.mxu0 0.0
  %1939 = vmatpush1.msra.mxu0 %v1936
  %1940 = vmatprep.subr.mxu0 0.0
  %1941 = vmatpush1.msra.mxu0 0.0
  %1942 = vmatprep.subr.mxu0 0.0
  %1943 = vmatpush1.msra.mxu0 0.0
  %1944 = vmatprep.subr.mxu0 0.0
  %1945 = vmatpush1.msra.mxu0 0.0
  %1946 = vmatprep.subr.mxu0 0.0
  %1947 = vmatpush1.msra.mxu0 0.0
  %1948 = vmatprep.subr.mxu0 0.0
  %1949 = vmatpush1.msra.mxu0 0.0
  %1950 = vmatprep.subr.mxu0 0.0
  %1951 = vmatpush1.msra.mxu0 0.0
  %1952 = vmatprep.subr.mxu0 0.0
  %1953 = vmatpush1.msra.mxu0 0.0
  %1954 = vmatprep.subr.mxu0 0.0
  %1955 = vmatpush1.msra.mxu0 0.0
  %1956 = vmatprep.subr.mxu0 0.0
  %1957 = vmatpush1.msra.mxu0 0.0
  %1958 = vmatprep.subr.mxu0 0.0
  %1959 = vmatpush1.msra.mxu0 0.0
  %1960 = vmatprep.subr.mxu0 0.0
  %1961 = vmatpush1.msra.mxu0 0.0
  %1962 = vmatprep.subr.mxu0 0.0
  %1963 = vmatpush1.msra.mxu0 0.0
  %1964 = vmatprep.subr.mxu0 0.0
  %1965 = vmatpush1.msra.mxu0 0.0
  %1966 = vmatprep.subr.mxu0 0.0
  %1967 = vmatpush1.msra.mxu0 0.0
  %1968 = vmatprep.subr.mxu0 0.0
  %1969 = vmatpush1.msra.mxu0 0.0
  %1970 = vmatprep.subr.mxu0 0.0
  %1971 = vmatpush1.msra.mxu0 0.0
  %1972 = vmatprep.subr.mxu0 0.0
  %1973 = vmatpush1.msra.mxu0 0.0
  %1974 = vmatprep.subr.mxu0 0.0
  %1975 = vmatpush1.msra.mxu0 0.0
  %1976 = vmatprep.subr.mxu0 0.0
  %1977 = vmatpush1.msra.mxu0 0.0
  %1978 = vmatprep.subr.mxu0 0.0
  %1979 = vmatpush1.msra.mxu0 0.0
  %1980 = vmatprep.subr.mxu0 0.0
  %1981 = vmatpush1.msra.mxu0 0.0
  %1982 = vmatprep.subr.mxu0 0.0
  %1983 = vmatpush1.msra.mxu0 0.0
  %1984 = vmatprep.subr.mxu0 0.0
  %1985 = vmatpush1.msra.mxu0 0.0
  %1986 = vmatprep.subr.mxu0 0.0
  %1987 = vmatpush1.msra.mxu0 0.0
  %1988 = vmatprep.subr.mxu0 0.0
  %1989 = vmatpush1.msra.mxu0 0.0
  %1990 = vmatprep.subr.mxu0 0.0
  %1991 = vmatpush1.msra.mxu0 0.0
  %1992 = vmatprep.subr.mxu0 0.0
  %1993 = vmatpush1.msra.mxu0 0.0
  %1994 = vmatprep.subr.mxu0 0.0
  %1995 = vmatpush1.msra.mxu0 0.0
  %1996 = vmatprep.subr.mxu0 0.0
  %1997 = vmatpush1.msra.mxu0 0.0
  %1998 = vmatprep.subr.mxu0 0.0
  %1999 = vmatpush1.msra.mxu0 0.0
  %2000 = vmatprep.subr.mxu0 0.0
  %2001 = vmatpush1.msra.mxu0 0.0
  %2002 = vmatprep.mubr.f32.mxu0 0.0
  %2003 = vmatmul.mubr.f32.gmra.mrb[0].mxu0 %v1933
  %v2004 = vpop.f32.mrb[0].mxu0
  %v2005 = vadd.f32 0.0, %v2004
  %v2006 = vpop.f32.mrb[0].mxu0
  %2007 = vdwg.mxu0
  %vm2008 = vcmask 257024
  %2009 = vst.msk [vmem:[#allocation3] sm:$0xf] %vm2008, %v1929
  %2010 = vst.msk [vmem:[#allocation3 + $0x4] sm:$0xf] %vm2008, %v2005
  %v2011 = vld [vmem:[#allocation2] sm:$0xf]
  %v2012 = vld [vmem:[#allocation2 + $0x8] sm:$0xf]
  %v2013 = vld [vmem:[#allocation2 + $0x4] sm:$0xf]
  %v2014 = vld [vmem:[#allocation2 + $0xc] sm:$0xf]
  %2016 = vrot.lane.b32.xlu0 %v2011, 112
  %v2017 = vpop.permute.xlu0 %2016
  %2018 = vrot.lane.b32.xlu0 %v2011, 48
  %v2019 = vpop.permute.xlu0 %2018
  %v2020 = vsel %vm275, %v2017, 0
  %v2022 = vsel %vm275, %v2019, 0
  %2024 = vmatprep.subr.mxu0 0.0
  %2025 = vmatpush1.xpose.msra.mxu0 %v2022
  %2026 = vmatprep.subr.mxu0 0.0
  %2027 = vmatpush1.xpose.msra.mxu0 0.0
  %2028 = vmatprep.subr.mxu0 0.0
  %2029 = vmatpush1.xpose.msra.mxu0 0.0
  %2030 = vmatprep.subr.mxu0 0.0
  %2031 = vmatpush1.xpose.msra.mxu0 0.0
  %2032 = vmatprep.subr.mxu0 0.0
  %2033 = vmatpush1.xpose.msra.mxu0 0.0
  %2034 = vmatprep.subr.mxu0 0.0
  %2035 = vmatpush1.xpose.msra.mxu0 0.0
  %2036 = vmatprep.subr.mxu0 0.0
  %2037 = vmatpush1.xpose.msra.mxu0 0.0
  %2038 = vmatprep.subr.mxu0 0.0
  %2039 = vmatpush1.xpose.msra.mxu0 0.0
  %2040 = vmatprep.subr.mxu0 0.0
  %2041 = vmatpush1.xpose.msra.mxu0 0.0
  %2042 = vmatprep.subr.mxu0 0.0
  %2043 = vmatpush1.xpose.msra.mxu0 0.0
  %2044 = vmatprep.subr.mxu0 0.0
  %2045 = vmatpush1.xpose.msra.mxu0 0.0
  %2046 = vmatprep.subr.mxu0 0.0
  %2047 = vmatpush1.xpose.msra.mxu0 0.0
  %2048 = vmatprep.subr.mxu0 0.0
  %2049 = vmatpush1.xpose.msra.mxu0 0.0
  %2050 = vmatprep.subr.mxu0 0.0
  %2051 = vmatpush1.xpose.msra.mxu0 0.0
  %2052 = vmatprep.subr.mxu0 0.0
  %2053 = vmatpush1.xpose.msra.mxu0 0.0
  %2054 = vmatprep.subr.mxu0 0.0
  %2055 = vmatpush1.xpose.msra.mxu0 0.0
  %2056 = vmatprep.subr.mxu0 0.0
  %2057 = vmatpush1.xpose.msra.mxu0 0.0
  %2058 = vmatprep.subr.mxu0 0.0
  %2059 = vmatpush1.xpose.msra.mxu0 0.0
  %2060 = vmatprep.subr.mxu0 0.0
  %2061 = vmatpush1.xpose.msra.mxu0 0.0
  %2062 = vmatprep.subr.mxu0 0.0
  %2063 = vmatpush1.xpose.msra.mxu0 0.0
  %2064 = vmatprep.subr.mxu0 0.0
  %2065 = vmatpush1.xpose.msra.mxu0 0.0
  %2066 = vmatprep.subr.mxu0 0.0
  %2067 = vmatpush1.xpose.msra.mxu0 0.0
  %2068 = vmatprep.subr.mxu0 0.0
  %2069 = vmatpush1.xpose.msra.mxu0 0.0
  %2070 = vmatprep.subr.mxu0 0.0
  %2071 = vmatpush1.xpose.msra.mxu0 0.0
  %2072 = vmatprep.subr.mxu0 0.0
  %2073 = vmatpush1.xpose.msra.mxu0 0.0
  %2074 = vmatprep.subr.mxu0 0.0
  %2075 = vmatpush1.xpose.msra.mxu0 0.0
  %2076 = vmatprep.subr.mxu0 0.0
  %2077 = vmatpush1.xpose.msra.mxu0 0.0
  %2078 = vmatprep.subr.mxu0 0.0
  %2079 = vmatpush1.xpose.msra.mxu0 0.0
  %2080 = vmatprep.subr.mxu0 0.0
  %2081 = vmatpush1.xpose.msra.mxu0 0.0
  %2082 = vmatprep.subr.mxu0 0.0
  %2083 = vmatpush1.xpose.msra.mxu0 0.0
  %2084 = vmatprep.subr.mxu0 0.0
  %2085 = vmatpush1.xpose.msra.mxu0 0.0
  %2086 = vmatprep.subr.mxu0 0.0
  %2087 = vmatpush1.xpose.msra.mxu0 0.0
  %2088 = vmatprep.mubr.f32.mxu0 0.0
  %2089 = vmatmul.mubr.f32.gmra.mrb[0].mxu0 %v2020
  %v2090 = vpop.f32.mrb[0].mxu0
  %v2091 = vadd.f32 0.0, %v2090
  %v2092 = vpop.f32.mrb[0].mxu0
  %2093 = vdwg.mxu0
  %2095 = vrot.lane.b32.xlu0 %v2012, 112
  %v2096 = vpop.permute.xlu0 %2095
  %2097 = vrot.lane.b32.xlu0 %v2012, 48
  %v2098 = vpop.permute.xlu0 %2097
  %v2099 = vsel %vm275, %v2096, 0
  %v2101 = vsel %vm275, %v2098, 0
  %2103 = vmatprep.subr.mxu0 0.0
  %2104 = vmatpush1.xpose.msra.mxu0 %v2101
  %2105 = vmatprep.subr.mxu0 0.0
  %2106 = vmatpush1.xpose.msra.mxu0 0.0
  %2107 = vmatprep.subr.mxu0 0.0
  %2108 = vmatpush1.xpose.msra.mxu0 0.0
  %2109 = vmatprep.subr.mxu0 0.0
  %2110 = vmatpush1.xpose.msra.mxu0 0.0
  %2111 = vmatprep.subr.mxu0 0.0
  %2112 = vmatpush1.xpose.msra.mxu0 0.0
  %2113 = vmatprep.subr.mxu0 0.0
  %2114 = vmatpush1.xpose.msra.mxu0 0.0
  %2115 = vmatprep.subr.mxu0 0.0
  %2116 = vmatpush1.xpose.msra.mxu0 0.0
  %2117 = vmatprep.subr.mxu0 0.0
  %2118 = vmatpush1.xpose.msra.mxu0 0.0
  %2119 = vmatprep.subr.mxu0 0.0
  %2120 = vmatpush1.xpose.msra.mxu0 0.0
  %2121 = vmatprep.subr.mxu0 0.0
  %2122 = vmatpush1.xpose.msra.mxu0 0.0
  %2123 = vmatprep.subr.mxu0 0.0
  %2124 = vmatpush1.xpose.msra.mxu0 0.0
  %2125 = vmatprep.subr.mxu0 0.0
  %2126 = vmatpush1.xpose.msra.mxu0 0.0
  %2127 = vmatprep.subr.mxu0 0.0
  %2128 = vmatpush1.xpose.msra.mxu0 0.0
  %2129 = vmatprep.subr.mxu0 0.0
  %2130 = vmatpush1.xpose.msra.mxu0 0.0
  %2131 = vmatprep.subr.mxu0 0.0
  %2132 = vmatpush1.xpose.msra.mxu0 0.0
  %2133 = vmatprep.subr.mxu0 0.0
  %2134 = vmatpush1.xpose.msra.mxu0 0.0
  %2135 = vmatprep.subr.mxu0 0.0
  %2136 = vmatpush1.xpose.msra.mxu0 0.0
  %2137 = vmatprep.subr.mxu0 0.0
  %2138 = vmatpush1.xpose.msra.mxu0 0.0
  %2139 = vmatprep.subr.mxu0 0.0
  %2140 = vmatpush1.xpose.msra.mxu0 0.0
  %2141 = vmatprep.subr.mxu0 0.0
  %2142 = vmatpush1.xpose.msra.mxu0 0.0
  %2143 = vmatprep.subr.mxu0 0.0
  %2144 = vmatpush1.xpose.msra.mxu0 0.0
  %2145 = vmatprep.subr.mxu0 0.0
  %2146 = vmatpush1.xpose.msra.mxu0 0.0
  %2147 = vmatprep.subr.mxu0 0.0
  %2148 = vmatpush1.xpose.msra.mxu0 0.0
  %2149 = vmatprep.subr.mxu0 0.0
  %2150 = vmatpush1.xpose.msra.mxu0 0.0
  %2151 = vmatprep.subr.mxu0 0.0
  %2152 = vmatpush1.xpose.msra.mxu0 0.0
  %2153 = vmatprep.subr.mxu0 0.0
  %2154 = vmatpush1.xpose.msra.mxu0 0.0
  %2155 = vmatprep.subr.mxu0 0.0
  %2156 = vmatpush1.xpose.msra.mxu0 0.0
  %2157 = vmatprep.subr.mxu0 0.0
  %2158 = vmatpush1.xpose.msra.mxu0 0.0
  %2159 = vmatprep.subr.mxu0 0.0
  %2160 = vmatpush1.xpose.msra.mxu0 0.0
  %2161 = vmatprep.subr.mxu0 0.0
  %2162 = vmatpush1.xpose.msra.mxu0 0.0
  %2163 = vmatprep.subr.mxu0 0.0
  %2164 = vmatpush1.xpose.msra.mxu0 0.0
  %2165 = vmatprep.subr.mxu0 0.0
  %2166 = vmatpush1.xpose.msra.mxu0 0.0
  %2167 = vmatprep.mubr.f32.mxu0 0.0
  %2168 = vmatmul.mubr.f32.gmra.mrb[0].mxu0 %v2099
  %v2169 = vpop.f32.mrb[0].mxu0
  %v2170 = vadd.f32 0.0, %v2169
  %v2171 = vpop.f32.mrb[0].mxu0
  %2172 = vdwg.mxu0
  %v2173 = vmul.f32 %v2091, 0.25
  %v2174 = vmul.f32 %v2170, 0.25
  %v2175 = vsel %vm505, %v2173, -inf
  %2176 = vmax.xlane.f32.xlu0 %v2175
  %v2177 = vpop.xlane.xlu0 %2176
  %v2178 = vsel %vm505, %v2174, -inf
  %2179 = vmax.xlane.f32.xlu0 %v2178
  %v2180 = vpop.xlane.xlu0 %2179
  %v2181 = vsub.f32 %v2173, %v2177
  %v2182 = vsub.f32 %v2174, %v2180
  %v2183 = vmul.f32 %v2181, 1.442695
  %v2184 = vpow.pop %v2183
  %v2185 = vmul.f32 %v2182, 1.442695
  %v2186 = vpow.pop %v2185
  %v2187 = vsel %vm505, %v2184, 0.0
  %2188 = vadd.xlane.f32.xlu0 %v2187
  %v2189 = vpop.xlane.xlu0 %2188
  %v2190 = vsel %vm505, %v2186, 0.0
  %2191 = vadd.xlane.f32.xlu0 %v2190
  %v2192 = vpop.xlane.xlu0 %2191
  %v2193 = vrcp.pop %v2189
  %v2194 = vrcp.pop %v2192
  %v2195 = vmul.f32 %v2184, %v2193
  %v2196 = vmul.f32 %v2186, %v2194
  %v2197 = vmul.f32 %v2195, %v536
  %v2198 = vmul.f32 %v2196, %v537
  %2200 = vrot.lane.b32.xlu0 %v2013, 96
  %v2201 = vpop.permute.xlu0 %2200
  %v2203 = vsel %vm545, %v2197, 0
  %v2205 = vsel %vm549, %v2201, 0
  %2207 = vmatprep.subr.mxu0 0.0
  %2208 = vmatpush1.msra.mxu0 %v2205
  %2209 = vmatprep.subr.mxu0 0.0
  %2210 = vmatpush1.msra.mxu0 0.0
  %2211 = vmatprep.subr.mxu0 0.0
  %2212 = vmatpush1.msra.mxu0 0.0
  %2213 = vmatprep.subr.mxu0 0.0
  %2214 = vmatpush1.msra.mxu0 0.0
  %2215 = vmatprep.subr.mxu0 0.0
  %2216 = vmatpush1.msra.mxu0 0.0
  %2217 = vmatprep.subr.mxu0 0.0
  %2218 = vmatpush1.msra.mxu0 0.0
  %2219 = vmatprep.subr.mxu0 0.0
  %2220 = vmatpush1.msra.mxu0 0.0
  %2221 = vmatprep.subr.mxu0 0.0
  %2222 = vmatpush1.msra.mxu0 0.0
  %2223 = vmatprep.subr.mxu0 0.0
  %2224 = vmatpush1.msra.mxu0 0.0
  %2225 = vmatprep.subr.mxu0 0.0
  %2226 = vmatpush1.msra.mxu0 0.0
  %2227 = vmatprep.subr.mxu0 0.0
  %2228 = vmatpush1.msra.mxu0 0.0
  %2229 = vmatprep.subr.mxu0 0.0
  %2230 = vmatpush1.msra.mxu0 0.0
  %2231 = vmatprep.subr.mxu0 0.0
  %2232 = vmatpush1.msra.mxu0 0.0
  %2233 = vmatprep.subr.mxu0 0.0
  %2234 = vmatpush1.msra.mxu0 0.0
  %2235 = vmatprep.subr.mxu0 0.0
  %2236 = vmatpush1.msra.mxu0 0.0
  %2237 = vmatprep.subr.mxu0 0.0
  %2238 = vmatpush1.msra.mxu0 0.0
  %2239 = vmatprep.subr.mxu0 0.0
  %2240 = vmatpush1.msra.mxu0 0.0
  %2241 = vmatprep.subr.mxu0 0.0
  %2242 = vmatpush1.msra.mxu0 0.0
  %2243 = vmatprep.subr.mxu0 0.0
  %2244 = vmatpush1.msra.mxu0 0.0
  %2245 = vmatprep.subr.mxu0 0.0
  %2246 = vmatpush1.msra.mxu0 0.0
  %2247 = vmatprep.subr.mxu0 0.0
  %2248 = vmatpush1.msra.mxu0 0.0
  %2249 = vmatprep.subr.mxu0 0.0
  %2250 = vmatpush1.msra.mxu0 0.0
  %2251 = vmatprep.subr.mxu0 0.0
  %2252 = vmatpush1.msra.mxu0 0.0
  %2253 = vmatprep.subr.mxu0 0.0
  %2254 = vmatpush1.msra.mxu0 0.0
  %2255 = vmatprep.subr.mxu0 0.0
  %2256 = vmatpush1.msra.mxu0 0.0
  %2257 = vmatprep.subr.mxu0 0.0
  %2258 = vmatpush1.msra.mxu0 0.0
  %2259 = vmatprep.subr.mxu0 0.0
  %2260 = vmatpush1.msra.mxu0 0.0
  %2261 = vmatprep.subr.mxu0 0.0
  %2262 = vmatpush1.msra.mxu0 0.0
  %2263 = vmatprep.subr.mxu0 0.0
  %2264 = vmatpush1.msra.mxu0 0.0
  %2265 = vmatprep.subr.mxu0 0.0
  %2266 = vmatpush1.msra.mxu0 0.0
  %2267 = vmatprep.subr.mxu0 0.0
  %2268 = vmatpush1.msra.mxu0 0.0
  %2269 = vmatprep.subr.mxu0 0.0
  %2270 = vmatpush1.msra.mxu0 0.0
  %2271 = vmatprep.mubr.f32.mxu0 0.0
  %2272 = vmatmul.mubr.f32.gmra.mrb[0].mxu0 %v2203
  %v2273 = vpop.f32.mrb[0].mxu0
  %v2274 = vadd.f32 0.0, %v2273
  %v2275 = vpop.f32.mrb[0].mxu0
  %2276 = vdwg.mxu0
  %2278 = vrot.lane.b32.xlu0 %v2014, 96
  %v2279 = vpop.permute.xlu0 %2278
  %v2281 = vsel %vm545, %v2198, 0
  %v2283 = vsel %vm549, %v2279, 0
  %2285 = vmatprep.subr.mxu0 0.0
  %2286 = vmatpush1.msra.mxu0 %v2283
  %2287 = vmatprep.subr.mxu0 0.0
  %2288 = vmatpush1.msra.mxu0 0.0
  %2289 = vmatprep.subr.mxu0 0.0
  %2290 = vmatpush1.msra.mxu0 0.0
  %2291 = vmatprep.subr.mxu0 0.0
  %2292 = vmatpush1.msra.mxu0 0.0
  %2293 = vmatprep.subr.mxu0 0.0
  %2294 = vmatpush1.msra.mxu0 0.0
  %2295 = vmatprep.subr.mxu0 0.0
  %2296 = vmatpush1.msra.mxu0 0.0
  %2297 = vmatprep.subr.mxu0 0.0
  %2298 = vmatpush1.msra.mxu0 0.0
  %2299 = vmatprep.subr.mxu0 0.0
  %2300 = vmatpush1.msra.mxu0 0.0
  %2301 = vmatprep.subr.mxu0 0.0
  %2302 = vmatpush1.msra.mxu0 0.0
  %2303 = vmatprep.subr.mxu0 0.0
  %2304 = vmatpush1.msra.mxu0 0.0
  %2305 = vmatprep.subr.mxu0 0.0
  %2306 = vmatpush1.msra.mxu0 0.0
  %2307 = vmatprep.subr.mxu0 0.0
  %2308 = vmatpush1.msra.mxu0 0.0
  %2309 = vmatprep.subr.mxu0 0.0
  %2310 = vmatpush1.msra.mxu0 0.0
  %2311 = vmatprep.subr.mxu0 0.0
  %2312 = vmatpush1.msra.mxu0 0.0
  %2313 = vmatprep.subr.mxu0 0.0
  %2314 = vmatpush1.msra.mxu0 0.0
  %2315 = vmatprep.subr.mxu0 0.0
  %2316 = vmatpush1.msra.mxu0 0.0
  %2317 = vmatprep.subr.mxu0 0.0
  %2318 = vmatpush1.msra.mxu0 0.0
  %2319 = vmatprep.subr.mxu0 0.0
  %2320 = vmatpush1.msra.mxu0 0.0
  %2321 = vmatprep.subr.mxu0 0.0
  %2322 = vmatpush1.msra.mxu0 0.0
  %2323 = vmatprep.subr.mxu0 0.0
  %2324 = vmatpush1.msra.mxu0 0.0
  %2325 = vmatprep.subr.mxu0 0.0
  %2326 = vmatpush1.msra.mxu0 0.0
  %2327 = vmatprep.subr.mxu0 0.0
  %2328 = vmatpush1.msra.mxu0 0.0
  %2329 = vmatprep.subr.mxu0 0.0
  %2330 = vmatpush1.msra.mxu0 0.0
  %2331 = vmatprep.subr.mxu0 0.0
  %2332 = vmatpush1.msra.mxu0 0.0
  %2333 = vmatprep.subr.mxu0 0.0
  %2334 = vmatpush1.msra.mxu0 0.0
  %2335 = vmatprep.subr.mxu0 0.0
  %2336 = vmatpush1.msra.mxu0 0.0
  %2337 = vmatprep.subr.mxu0 0.0
  %2338 = vmatpush1.msra.mxu0 0.0
  %2339 = vmatprep.subr.mxu0 0.0
  %2340 = vmatpush1.msra.mxu0 0.0
  %2341 = vmatprep.subr.mxu0 0.0
  %2342 = vmatpush1.msra.mxu0 0.0
  %2343 = vmatprep.subr.mxu0 0.0
  %2344 = vmatpush1.msra.mxu0 0.0
  %2345 = vmatprep.subr.mxu0 0.0
  %2346 = vmatpush1.msra.mxu0 0.0
  %2347 = vmatprep.subr.mxu0 0.0
  %2348 = vmatpush1.msra.mxu0 0.0
  %2349 = vmatprep.mubr.f32.mxu0 0.0
  %2350 = vmatmul.mubr.f32.gmra.mrb[0].mxu0 %v2281
  %v2351 = vpop.f32.mrb[0].mxu0
  %v2352 = vadd.f32 0.0, %v2351
  %v2353 = vpop.f32.mrb[0].mxu0
  %2354 = vdwg.mxu0
  %2357 = vrot.lane.b32.xlu0 %v2274, 32
  %v2358 = vpop.permute.xlu0 %2357
  %2359 = vrot.lane.b32.xlu0 %v2352, 32
  %v2360 = vpop.permute.xlu0 %2359
  %vm2363 = vcmask 519424
  %2364 = vst.msk [vmem:[#allocation3] sm:$0xf] %vm2363, %v2358
  %2365 = vst.msk [vmem:[#allocation3 + $0x4] sm:$0xf] %vm2363, %v2360
  %v2366 = vld [vmem:[#allocation2] sm:$0xf]
  %v2367 = vld [vmem:[#allocation2 + $0x8] sm:$0xf]
  %v2368 = vld [vmem:[#allocation2 + $0x4] sm:$0xf]
  %v2369 = vld [vmem:[#allocation2 + $0xc] sm:$0xf]
  %2371 = vrot.lane.b32.xlu0 %v2366, 96
  %v2372 = vpop.permute.xlu0 %2371
  %2373 = vrot.lane.b32.xlu0 %v2366, 32
  %v2374 = vpop.permute.xlu0 %2373
  %v2375 = vsel %vm275, %v2372, 0
  %v2377 = vsel %vm275, %v2374, 0
  %2379 = vmatprep.subr.mxu0 0.0
  %2380 = vmatpush1.xpose.msra.mxu0 %v2377
  %2381 = vmatprep.subr.mxu0 0.0
  %2382 = vmatpush1.xpose.msra.mxu0 0.0
  %2383 = vmatprep.subr.mxu0 0.0
  %2384 = vmatpush1.xpose.msra.mxu0 0.0
  %2385 = vmatprep.subr.mxu0 0.0
  %2386 = vmatpush1.xpose.msra.mxu0 0.0
  %2387 = vmatprep.subr.mxu0 0.0
  %2388 = vmatpush1.xpose.msra.mxu0 0.0
  %2389 = vmatprep.subr.mxu0 0.0
  %2390 = vmatpush1.xpose.msra.mxu0 0.0
  %2391 = vmatprep.subr.mxu0 0.0
  %2392 = vmatpush1.xpose.msra.mxu0 0.0
  %2393 = vmatprep.subr.mxu0 0.0
  %2394 = vmatpush1.xpose.msra.mxu0 0.0
  %2395 = vmatprep.subr.mxu0 0.0
  %2396 = vmatpush1.xpose.msra.mxu0 0.0
  %2397 = vmatprep.subr.mxu0 0.0
  %2398 = vmatpush1.xpose.msra.mxu0 0.0
  %2399 = vmatprep.subr.mxu0 0.0
  %2400 = vmatpush1.xpose.msra.mxu0 0.0
  %2401 = vmatprep.subr.mxu0 0.0
  %2402 = vmatpush1.xpose.msra.mxu0 0.0
  %2403 = vmatprep.subr.mxu0 0.0
  %2404 = vmatpush1.xpose.msra.mxu0 0.0
  %2405 = vmatprep.subr.mxu0 0.0
  %2406 = vmatpush1.xpose.msra.mxu0 0.0
  %2407 = vmatprep.subr.mxu0 0.0
  %2408 = vmatpush1.xpose.msra.mxu0 0.0
  %2409 = vmatprep.subr.mxu0 0.0
  %2410 = vmatpush1.xpose.msra.mxu0 0.0
  %2411 = vmatprep.subr.mxu0 0.0
  %2412 = vmatpush1.xpose.msra.mxu0 0.0
  %2413 = vmatprep.subr.mxu0 0.0
  %2414 = vmatpush1.xpose.msra.mxu0 0.0
  %2415 = vmatprep.subr.mxu0 0.0
  %2416 = vmatpush1.xpose.msra.mxu0 0.0
  %2417 = vmatprep.subr.mxu0 0.0
  %2418 = vmatpush1.xpose.msra.mxu0 0.0
  %2419 = vmatprep.subr.mxu0 0.0
  %2420 = vmatpush1.xpose.msra.mxu0 0.0
  %2421 = vmatprep.subr.mxu0 0.0
  %2422 = vmatpush1.xpose.msra.mxu0 0.0
  %2423 = vmatprep.subr.mxu0 0.0
  %2424 = vmatpush1.xpose.msra.mxu0 0.0
  %2425 = vmatprep.subr.mxu0 0.0
  %2426 = vmatpush1.xpose.msra.mxu0 0.0
  %2427 = vmatprep.subr.mxu0 0.0
  %2428 = vmatpush1.xpose.msra.mxu0 0.0
  %2429 = vmatprep.subr.mxu0 0.0
  %2430 = vmatpush1.xpose.msra.mxu0 0.0
  %2431 = vmatprep.subr.mxu0 0.0
  %2432 = vmatpush1.xpose.msra.mxu0 0.0
  %2433 = vmatprep.subr.mxu0 0.0
  %2434 = vmatpush1.xpose.msra.mxu0 0.0
  %2435 = vmatprep.subr.mxu0 0.0
  %2436 = vmatpush1.xpose.msra.mxu0 0.0
  %2437 = vmatprep.subr.mxu0 0.0
  %2438 = vmatpush1.xpose.msra.mxu0 0.0
  %2439 = vmatprep.subr.mxu0 0.0
  %2440 = vmatpush1.xpose.msra.mxu0 0.0
  %2441 = vmatprep.subr.mxu0 0.0
  %2442 = vmatpush1.xpose.msra.mxu0 0.0
  %2443 = vmatprep.mubr.f32.mxu0 0.0
  %2444 = vmatmul.mubr.f32.gmra.mrb[0].mxu0 %v2375
  %v2445 = vpop.f32.mrb[0].mxu0
  %v2446 = vadd.f32 0.0, %v2445
  %v2447 = vpop.f32.mrb[0].mxu0
  %2448 = vdwg.mxu0
  %2450 = vrot.lane.b32.xlu0 %v2367, 96
  %v2451 = vpop.permute.xlu0 %2450
  %2452 = vrot.lane.b32.xlu0 %v2367, 32
  %v2453 = vpop.permute.xlu0 %2452
  %v2454 = vsel %vm275, %v2451, 0
  %v2456 = vsel %vm275, %v2453, 0
  %2458 = vmatprep.subr.mxu0 0.0
  %2459 = vmatpush1.xpose.msra.mxu0 %v2456
  %2460 = vmatprep.subr.mxu0 0.0
  %2461 = vmatpush1.xpose.msra.mxu0 0.0
  %2462 = vmatprep.subr.mxu0 0.0
  %2463 = vmatpush1.xpose.msra.mxu0 0.0
  %2464 = vmatprep.subr.mxu0 0.0
  %2465 = vmatpush1.xpose.msra.mxu0 0.0
  %2466 = vmatprep.subr.mxu0 0.0
  %2467 = vmatpush1.xpose.msra.mxu0 0.0
  %2468 = vmatprep.subr.mxu0 0.0
  %2469 = vmatpush1.xpose.msra.mxu0 0.0
  %2470 = vmatprep.subr.mxu0 0.0
  %2471 = vmatpush1.xpose.msra.mxu0 0.0
  %2472 = vmatprep.subr.mxu0 0.0
  %2473 = vmatpush1.xpose.msra.mxu0 0.0
  %2474 = vmatprep.subr.mxu0 0.0
  %2475 = vmatpush1.xpose.msra.mxu0 0.0
  %2476 = vmatprep.subr.mxu0 0.0
  %2477 = vmatpush1.xpose.msra.mxu0 0.0
  %2478 = vmatprep.subr.mxu0 0.0
  %2479 = vmatpush1.xpose.msra.mxu0 0.0
  %2480 = vmatprep.subr.mxu0 0.0
  %2481 = vmatpush1.xpose.msra.mxu0 0.0
  %2482 = vmatprep.subr.mxu0 0.0
  %2483 = vmatpush1.xpose.msra.mxu0 0.0
  %2484 = vmatprep.subr.mxu0 0.0
  %2485 = vmatpush1.xpose.msra.mxu0 0.0
  %2486 = vmatprep.subr.mxu0 0.0
  %2487 = vmatpush1.xpose.msra.mxu0 0.0
  %2488 = vmatprep.subr.mxu0 0.0
  %2489 = vmatpush1.xpose.msra.mxu0 0.0
  %2490 = vmatprep.subr.mxu0 0.0
  %2491 = vmatpush1.xpose.msra.mxu0 0.0
  %2492 = vmatprep.subr.mxu0 0.0
  %2493 = vmatpush1.xpose.msra.mxu0 0.0
  %2494 = vmatprep.subr.mxu0 0.0
  %2495 = vmatpush1.xpose.msra.mxu0 0.0
  %2496 = vmatprep.subr.mxu0 0.0
  %2497 = vmatpush1.xpose.msra.mxu0 0.0
  %2498 = vmatprep.subr.mxu0 0.0
  %2499 = vmatpush1.xpose.msra.mxu0 0.0
  %2500 = vmatprep.subr.mxu0 0.0
  %2501 = vmatpush1.xpose.msra.mxu0 0.0
  %2502 = vmatprep.subr.mxu0 0.0
  %2503 = vmatpush1.xpose.msra.mxu0 0.0
  %2504 = vmatprep.subr.mxu0 0.0
  %2505 = vmatpush1.xpose.msra.mxu0 0.0
  %2506 = vmatprep.subr.mxu0 0.0
  %2507 = vmatpush1.xpose.msra.mxu0 0.0
  %2508 = vmatprep.subr.mxu0 0.0
  %2509 = vmatpush1.xpose.msra.mxu0 0.0
  %2510 = vmatprep.subr.mxu0 0.0
  %2511 = vmatpush1.xpose.msra.mxu0 0.0
  %2512 = vmatprep.subr.mxu0 0.0
  %2513 = vmatpush1.xpose.msra.mxu0 0.0
  %2514 = vmatprep.subr.mxu0 0.0
  %2515 = vmatpush1.xpose.msra.mxu0 0.0
  %2516 = vmatprep.subr.mxu0 0.0
  %2517 = vmatpush1.xpose.msra.mxu0 0.0
  %2518 = vmatprep.subr.mxu0 0.0
  %2519 = vmatpush1.xpose.msra.mxu0 0.0
  %2520 = vmatprep.subr.mxu0 0.0
  %2521 = vmatpush1.xpose.msra.mxu0 0.0
  %2522 = vmatprep.mubr.f32.mxu0 0.0
  %2523 = vmatmul.mubr.f32.gmra.mrb[0].mxu0 %v2454
  %v2524 = vpop.f32.mrb[0].mxu0
  %v2525 = vadd.f32 0.0, %v2524
  %v2526 = vpop.f32.mrb[0].mxu0
  %2527 = vdwg.mxu0
  %v2528 = vmul.f32 %v2446, 0.25
  %v2529 = vmul.f32 %v2525, 0.25
  %v2530 = vsel %vm505, %v2528, -inf
  %2531 = vmax.xlane.f32.xlu0 %v2530
  %v2532 = vpop.xlane.xlu0 %2531
  %v2533 = vsel %vm505, %v2529, -inf
  %2534 = vmax.xlane.f32.xlu0 %v2533
  %v2535 = vpop.xlane.xlu0 %2534
  %v2536 = vsub.f32 %v2528, %v2532
  %v2537 = vsub.f32 %v2529, %v2535
  %v2538 = vmul.f32 %v2536, 1.442695
  %v2539 = vpow.pop %v2538
  %v2540 = vmul.f32 %v2537, 1.442695
  %v2541 = vpow.pop %v2540
  %v2542 = vsel %vm505, %v2539, 0.0
  %2543 = vadd.xlane.f32.xlu0 %v2542
  %v2544 = vpop.xlane.xlu0 %2543
  %v2545 = vsel %vm505, %v2541, 0.0
  %2546 = vadd.xlane.f32.xlu0 %v2545
  %v2547 = vpop.xlane.xlu0 %2546
  %v2548 = vrcp.pop %v2544
  %v2549 = vrcp.pop %v2547
  %v2550 = vmul.f32 %v2539, %v2548
  %v2551 = vmul.f32 %v2541, %v2549
  %v2552 = vmul.f32 %v2550, %v536
  %v2553 = vmul.f32 %v2551, %v537
  %2555 = vrot.lane.b32.xlu0 %v2368, 64
  %v2556 = vpop.permute.xlu0 %2555
  %v2558 = vsel %vm545, %v2552, 0
  %v2560 = vsel %vm549, %v2556, 0
  %2562 = vmatprep.subr.mxu0 0.0
  %2563 = vmatpush1.msra.mxu0 %v2560
  %2564 = vmatprep.subr.mxu0 0.0
  %2565 = vmatpush1.msra.mxu0 0.0
  %2566 = vmatprep.subr.mxu0 0.0
  %2567 = vmatpush1.msra.mxu0 0.0
  %2568 = vmatprep.subr.mxu0 0.0
  %2569 = vmatpush1.msra.mxu0 0.0
  %2570 = vmatprep.subr.mxu0 0.0
  %2571 = vmatpush1.msra.mxu0 0.0
  %2572 = vmatprep.subr.mxu0 0.0
  %2573 = vmatpush1.msra.mxu0 0.0
  %2574 = vmatprep.subr.mxu0 0.0
  %2575 = vmatpush1.msra.mxu0 0.0
  %2576 = vmatprep.subr.mxu0 0.0
  %2577 = vmatpush1.msra.mxu0 0.0
  %2578 = vmatprep.subr.mxu0 0.0
  %2579 = vmatpush1.msra.mxu0 0.0
  %2580 = vmatprep.subr.mxu0 0.0
  %2581 = vmatpush1.msra.mxu0 0.0
  %2582 = vmatprep.subr.mxu0 0.0
  %2583 = vmatpush1.msra.mxu0 0.0
  %2584 = vmatprep.subr.mxu0 0.0
  %2585 = vmatpush1.msra.mxu0 0.0
  %2586 = vmatprep.subr.mxu0 0.0
  %2587 = vmatpush1.msra.mxu0 0.0
  %2588 = vmatprep.subr.mxu0 0.0
  %2589 = vmatpush1.msra.mxu0 0.0
  %2590 = vmatprep.subr.mxu0 0.0
  %2591 = vmatpush1.msra.mxu0 0.0
  %2592 = vmatprep.subr.mxu0 0.0
  %2593 = vmatpush1.msra.mxu0 0.0
  %2594 = vmatprep.subr.mxu0 0.0
  %2595 = vmatpush1.msra.mxu0 0.0
  %2596 = vmatprep.subr.mxu0 0.0
  %2597 = vmatpush1.msra.mxu0 0.0
  %2598 = vmatprep.subr.mxu0 0.0
  %2599 = vmatpush1.msra.mxu0 0.0
  %2600 = vmatprep.subr.mxu0 0.0
  %2601 = vmatpush1.msra.mxu0 0.0
  %2602 = vmatprep.subr.mxu0 0.0
  %2603 = vmatpush1.msra.mxu0 0.0
  %2604 = vmatprep.subr.mxu0 0.0
  %2605 = vmatpush1.msra.mxu0 0.0
  %2606 = vmatprep.subr.mxu0 0.0
  %2607 = vmatpush1.msra.mxu0 0.0
  %2608 = vmatprep.subr.mxu0 0.0
  %2609 = vmatpush1.msra.mxu0 0.0
  %2610 = vmatprep.subr.mxu0 0.0
  %2611 = vmatpush1.msra.mxu0 0.0
  %2612 = vmatprep.subr.mxu0 0.0
  %2613 = vmatpush1.msra.mxu0 0.0
  %2614 = vmatprep.subr.mxu0 0.0
  %2615 = vmatpush1.msra.mxu0 0.0
  %2616 = vmatprep.subr.mxu0 0.0
  %2617 = vmatpush1.msra.mxu0 0.0
  %2618 = vmatprep.subr.mxu0 0.0
  %2619 = vmatpush1.msra.mxu0 0.0
  %2620 = vmatprep.subr.mxu0 0.0
  %2621 = vmatpush1.msra.mxu0 0.0
  %2622 = vmatprep.subr.mxu0 0.0
  %2623 = vmatpush1.msra.mxu0 0.0
  %2624 = vmatprep.subr.mxu0 0.0
  %2625 = vmatpush1.msra.mxu0 0.0
  %2626 = vmatprep.mubr.f32.mxu0 0.0
  %2627 = vmatmul.mubr.f32.gmra.mrb[0].mxu0 %v2558
  %v2628 = vpop.f32.mrb[0].mxu0
  %v2629 = vadd.f32 0.0, %v2628
  %v2630 = vpop.f32.mrb[0].mxu0
  %2631 = vdwg.mxu0
  %2633 = vrot.lane.b32.xlu0 %v2369, 64
  %v2634 = vpop.permute.xlu0 %2633
  %v2636 = vsel %vm545, %v2553, 0
  %v2638 = vsel %vm549, %v2634, 0
  %2640 = vmatprep.subr.mxu0 0.0
  %2641 = vmatpush1.msra.mxu0 %v2638
  %2642 = vmatprep.subr.mxu0 0.0
  %2643 = vmatpush1.msra.mxu0 0.0
  %2644 = vmatprep.subr.mxu0 0.0
  %2645 = vmatpush1.msra.mxu0 0.0
  %2646 = vmatprep.subr.mxu0 0.0
  %2647 = vmatpush1.msra.mxu0 0.0
  %2648 = vmatprep.subr.mxu0 0.0
  %2649 = vmatpush1.msra.mxu0 0.0
  %2650 = vmatprep.subr.mxu0 0.0
  %2651 = vmatpush1.msra.mxu0 0.0
  %2652 = vmatprep.subr.mxu0 0.0
  %2653 = vmatpush1.msra.mxu0 0.0
  %2654 = vmatprep.subr.mxu0 0.0
  %2655 = vmatpush1.msra.mxu0 0.0
  %2656 = vmatprep.subr.mxu0 0.0
  %2657 = vmatpush1.msra.mxu0 0.0
  %2658 = vmatprep.subr.mxu0 0.0
  %2659 = vmatpush1.msra.mxu0 0.0
  %2660 = vmatprep.subr.mxu0 0.0
  %2661 = vmatpush1.msra.mxu0 0.0
  %2662 = vmatprep.subr.mxu0 0.0
  %2663 = vmatpush1.msra.mxu0 0.0
  %2664 = vmatprep.subr.mxu0 0.0
  %2665 = vmatpush1.msra.mxu0 0.0
  %2666 = vmatprep.subr.mxu0 0.0
  %2667 = vmatpush1.msra.mxu0 0.0
  %2668 = vmatprep.subr.mxu0 0.0
  %2669 = vmatpush1.msra.mxu0 0.0
  %2670 = vmatprep.subr.mxu0 0.0
  %2671 = vmatpush1.msra.mxu0 0.0
  %2672 = vmatprep.subr.mxu0 0.0
  %2673 = vmatpush1.msra.mxu0 0.0
  %2674 = vmatprep.subr.mxu0 0.0
  %2675 = vmatpush1.msra.mxu0 0.0
  %2676 = vmatprep.subr.mxu0 0.0
  %2677 = vmatpush1.msra.mxu0 0.0
  %2678 = vmatprep.subr.mxu0 0.0
  %2679 = vmatpush1.msra.mxu0 0.0
  %2680 = vmatprep.subr.mxu0 0.0
  %2681 = vmatpush1.msra.mxu0 0.0
  %2682 = vmatprep.subr.mxu0 0.0
  %2683 = vmatpush1.msra.mxu0 0.0
  %2684 = vmatprep.subr.mxu0 0.0
  %2685 = vmatpush1.msra.mxu0 0.0
  %2686 = vmatprep.subr.mxu0 0.0
  %2687 = vmatpush1.msra.mxu0 0.0
  %2688 = vmatprep.subr.mxu0 0.0
  %2689 = vmatpush1.msra.mxu0 0.0
  %2690 = vmatprep.subr.mxu0 0.0
  %2691 = vmatpush1.msra.mxu0 0.0
  %2692 = vmatprep.subr.mxu0 0.0
  %2693 = vmatpush1.msra.mxu0 0.0
  %2694 = vmatprep.subr.mxu0 0.0
  %2695 = vmatpush1.msra.mxu0 0.0
  %2696 = vmatprep.subr.mxu0 0.0
  %2697 = vmatpush1.msra.mxu0 0.0
  %2698 = vmatprep.subr.mxu0 0.0
  %2699 = vmatpush1.msra.mxu0 0.0
  %2700 = vmatprep.subr.mxu0 0.0
  %2701 = vmatpush1.msra.mxu0 0.0
  %2702 = vmatprep.subr.mxu0 0.0
  %2703 = vmatpush1.msra.mxu0 0.0
  %2704 = vmatprep.mubr.f32.mxu0 0.0
  %2705 = vmatmul.mubr.f32.gmra.mrb[0].mxu0 %v2636
  %v2706 = vpop.f32.mrb[0].mxu0
  %v2707 = vadd.f32 0.0, %v2706
  %v2708 = vpop.f32.mrb[0].mxu0
  %2709 = vdwg.mxu0
  %2712 = vrot.lane.b32.xlu0 %v2629, 64
  %v2713 = vpop.permute.xlu0 %2712
  %2714 = vrot.lane.b32.xlu0 %v2707, 64
  %v2715 = vpop.permute.xlu0 %2714
  %vm2718 = vcmask 781824
  %2719 = vst.msk [vmem:[#allocation3] sm:$0xf] %vm2718, %v2713
  %2720 = vst.msk [vmem:[#allocation3 + $0x4] sm:$0xf] %vm2718, %v2715
  %v2721 = vld [vmem:[#allocation2] sm:$0xf]
  %v2722 = vld [vmem:[#allocation2 + $0x8] sm:$0xf]
  %v2723 = vld [vmem:[#allocation2 + $0x4] sm:$0xf]
  %v2724 = vld [vmem:[#allocation2 + $0xc] sm:$0xf]
  %2726 = vrot.lane.b32.xlu0 %v2721, 80
  %v2727 = vpop.permute.xlu0 %2726
  %2728 = vrot.lane.b32.xlu0 %v2721, 16
  %v2729 = vpop.permute.xlu0 %2728
  %v2730 = vsel %vm275, %v2727, 0
  %v2732 = vsel %vm275, %v2729, 0
  %2734 = vmatprep.subr.mxu0 0.0
  %2735 = vmatpush1.xpose.msra.mxu0 %v2732
  %2736 = vmatprep.subr.mxu0 0.0
  %2737 = vmatpush1.xpose.msra.mxu0 0.0
  %2738 = vmatprep.subr.mxu0 0.0
  %2739 = vmatpush1.xpose.msra.mxu0 0.0
  %2740 = vmatprep.subr.mxu0 0.0
  %2741 = vmatpush1.xpose.msra.mxu0 0.0
  %2742 = vmatprep.subr.mxu0 0.0
  %2743 = vmatpush1.xpose.msra.mxu0 0.0
  %2744 = vmatprep.subr.mxu0 0.0
  %2745 = vmatpush1.xpose.msra.mxu0 0.0
  %2746 = vmatprep.subr.mxu0 0.0
  %2747 = vmatpush1.xpose.msra.mxu0 0.0
  %2748 = vmatprep.subr.mxu0 0.0
  %2749 = vmatpush1.xpose.msra.mxu0 0.0
  %2750 = vmatprep.subr.mxu0 0.0
  %2751 = vmatpush1.xpose.msra.mxu0 0.0
  %2752 = vmatprep.subr.mxu0 0.0
  %2753 = vmatpush1.xpose.msra.mxu0 0.0
  %2754 = vmatprep.subr.mxu0 0.0
  %2755 = vmatpush1.xpose.msra.mxu0 0.0
  %2756 = vmatprep.subr.mxu0 0.0
  %2757 = vmatpush1.xpose.msra.mxu0 0.0
  %2758 = vmatprep.subr.mxu0 0.0
  %2759 = vmatpush1.xpose.msra.mxu0 0.0
  %2760 = vmatprep.subr.mxu0 0.0
  %2761 = vmatpush1.xpose.msra.mxu0 0.0
  %2762 = vmatprep.subr.mxu0 0.0
  %2763 = vmatpush1.xpose.msra.mxu0 0.0
  %2764 = vmatprep.subr.mxu0 0.0
  %2765 = vmatpush1.xpose.msra.mxu0 0.0
  %2766 = vmatprep.subr.mxu0 0.0
  %2767 = vmatpush1.xpose.msra.mxu0 0.0
  %2768 = vmatprep.subr.mxu0 0.0
  %2769 = vmatpush1.xpose.msra.mxu0 0.0
  %2770 = vmatprep.subr.mxu0 0.0
  %2771 = vmatpush1.xpose.msra.mxu0 0.0
  %2772 = vmatprep.subr.mxu0 0.0
  %2773 = vmatpush1.xpose.msra.mxu0 0.0
  %2774 = vmatprep.subr.mxu0 0.0
  %2775 = vmatpush1.xpose.msra.mxu0 0.0
  %2776 = vmatprep.subr.mxu0 0.0
  %2777 = vmatpush1.xpose.msra.mxu0 0.0
  %2778 = vmatprep.subr.mxu0 0.0
  %2779 = vmatpush1.xpose.msra.mxu0 0.0
  %2780 = vmatprep.subr.mxu0 0.0
  %2781 = vmatpush1.xpose.msra.mxu0 0.0
  %2782 = vmatprep.subr.mxu0 0.0
  %2783 = vmatpush1.xpose.msra.mxu0 0.0
  %2784 = vmatprep.subr.mxu0 0.0
  %2785 = vmatpush1.xpose.msra.mxu0 0.0
  %2786 = vmatprep.subr.mxu0 0.0
  %2787 = vmatpush1.xpose.msra.mxu0 0.0
  %2788 = vmatprep.subr.mxu0 0.0
  %2789 = vmatpush1.xpose.msra.mxu0 0.0
  %2790 = vmatprep.subr.mxu0 0.0
  %2791 = vmatpush1.xpose.msra.mxu0 0.0
  %2792 = vmatprep.subr.mxu0 0.0
  %2793 = vmatpush1.xpose.msra.mxu0 0.0
  %2794 = vmatprep.subr.mxu0 0.0
  %2795 = vmatpush1.xpose.msra.mxu0 0.0
  %2796 = vmatprep.subr.mxu0 0.0
  %2797 = vmatpush1.xpose.msra.mxu0 0.0
  %2798 = vmatprep.mubr.f32.mxu0 0.0
  %2799 = vmatmul.mubr.f32.gmra.mrb[0].mxu0 %v2730
  %v2800 = vpop.f32.mrb[0].mxu0
  %v2801 = vadd.f32 0.0, %v2800
  %v2802 = vpop.f32.mrb[0].mxu0
  %2803 = vdwg.mxu0
  %2805 = vrot.lane.b32.xlu0 %v2722, 80
  %v2806 = vpop.permute.xlu0 %2805
  %2807 = vrot.lane.b32.xlu0 %v2722, 16
  %v2808 = vpop.permute.xlu0 %2807
  %v2809 = vsel %vm275, %v2806, 0
  %v2811 = vsel %vm275, %v2808, 0
  %2813 = vmatprep.subr.mxu0 0.0
  %2814 = vmatpush1.xpose.msra.mxu0 %v2811
  %2815 = vmatprep.subr.mxu0 0.0
  %2816 = vmatpush1.xpose.msra.mxu0 0.0
  %2817 = vmatprep.subr.mxu0 0.0
  %2818 = vmatpush1.xpose.msra.mxu0 0.0
  %2819 = vmatprep.subr.mxu0 0.0
  %2820 = vmatpush1.xpose.msra.mxu0 0.0
  %2821 = vmatprep.subr.mxu0 0.0
  %2822 = vmatpush1.xpose.msra.mxu0 0.0
  %2823 = vmatprep.subr.mxu0 0.0
  %2824 = vmatpush1.xpose.msra.mxu0 0.0
  %2825 = vmatprep.subr.mxu0 0.0
  %2826 = vmatpush1.xpose.msra.mxu0 0.0
  %2827 = vmatprep.subr.mxu0 0.0
  %2828 = vmatpush1.xpose.msra.mxu0 0.0
  %2829 = vmatprep.subr.mxu0 0.0
  %2830 = vmatpush1.xpose.msra.mxu0 0.0
  %2831 = vmatprep.subr.mxu0 0.0
  %2832 = vmatpush1.xpose.msra.mxu0 0.0
  %2833 = vmatprep.subr.mxu0 0.0
  %2834 = vmatpush1.xpose.msra.mxu0 0.0
  %2835 = vmatprep.subr.mxu0 0.0
  %2836 = vmatpush1.xpose.msra.mxu0 0.0
  %2837 = vmatprep.subr.mxu0 0.0
  %2838 = vmatpush1.xpose.msra.mxu0 0.0
  %2839 = vmatprep.subr.mxu0 0.0
  %2840 = vmatpush1.xpose.msra.mxu0 0.0
  %2841 = vmatprep.subr.mxu0 0.0
  %2842 = vmatpush1.xpose.msra.mxu0 0.0
  %2843 = vmatprep.subr.mxu0 0.0
  %2844 = vmatpush1.xpose.msra.mxu0 0.0
  %2845 = vmatprep.subr.mxu0 0.0
  %2846 = vmatpush1.xpose.msra.mxu0 0.0
  %2847 = vmatprep.subr.mxu0 0.0
  %2848 = vmatpush1.xpose.msra.mxu0 0.0
  %2849 = vmatprep.subr.mxu0 0.0
  %2850 = vmatpush1.xpose.msra.mxu0 0.0
  %2851 = vmatprep.subr.mxu0 0.0
  %2852 = vmatpush1.xpose.msra.mxu0 0.0
  %2853 = vmatprep.subr.mxu0 0.0
  %2854 = vmatpush1.xpose.msra.mxu0 0.0
  %2855 = vmatprep.subr.mxu0 0.0
  %2856 = vmatpush1.xpose.msra.mxu0 0.0
  %2857 = vmatprep.subr.mxu0 0.0
  %2858 = vmatpush1.xpose.msra.mxu0 0.0
  %2859 = vmatprep.subr.mxu0 0.0
  %2860 = vmatpush1.xpose.msra.mxu0 0.0
  %2861 = vmatprep.subr.mxu0 0.0
  %2862 = vmatpush1.xpose.msra.mxu0 0.0
  %2863 = vmatprep.subr.mxu0 0.0
  %2864 = vmatpush1.xpose.msra.mxu0 0.0
  %2865 = vmatprep.subr.mxu0 0.0
  %2866 = vmatpush1.xpose.msra.mxu0 0.0
  %2867 = vmatprep.subr.mxu0 0.0
  %2868 = vmatpush1.xpose.msra.mxu0 0.0
  %2869 = vmatprep.subr.mxu0 0.0
  %2870 = vmatpush1.xpose.msra.mxu0 0.0
  %2871 = vmatprep.subr.mxu0 0.0
  %2872 = vmatpush1.xpose.msra.mxu0 0.0
  %2873 = vmatprep.subr.mxu0 0.0
  %2874 = vmatpush1.xpose.msra.mxu0 0.0
  %2875 = vmatprep.subr.mxu0 0.0
  %2876 = vmatpush1.xpose.msra.mxu0 0.0
  %2877 = vmatprep.mubr.f32.mxu0 0.0
  %2878 = vmatmul.mubr.f32.gmra.mrb[0].mxu0 %v2809
  %v2879 = vpop.f32.mrb[0].mxu0
  %v2880 = vadd.f32 0.0, %v2879
  %v2881 = vpop.f32.mrb[0].mxu0
  %2882 = vdwg.mxu0
  %v2883 = vmul.f32 %v2801, 0.25
  %v2884 = vmul.f32 %v2880, 0.25
  %v2885 = vsel %vm505, %v2883, -inf
  %2886 = vmax.xlane.f32.xlu0 %v2885
  %v2887 = vpop.xlane.xlu0 %2886
  %v2888 = vsel %vm505, %v2884, -inf
  %2889 = vmax.xlane.f32.xlu0 %v2888
  %v2890 = vpop.xlane.xlu0 %2889
  %v2891 = vsub.f32 %v2883, %v2887
  %v2892 = vsub.f32 %v2884, %v2890
  %v2893 = vmul.f32 %v2891, 1.442695
  %v2894 = vpow.pop %v2893
  %v2895 = vmul.f32 %v2892, 1.442695
  %v2896 = vpow.pop %v2895
  %v2897 = vsel %vm505, %v2894, 0.0
  %2898 = vadd.xlane.f32.xlu0 %v2897
  %v2899 = vpop.xlane.xlu0 %2898
  %v2900 = vsel %vm505, %v2896, 0.0
  %2901 = vadd.xlane.f32.xlu0 %v2900
  %v2902 = vpop.xlane.xlu0 %2901
  %v2903 = vrcp.pop %v2899
  %v2904 = vrcp.pop %v2902
  %v2905 = vmul.f32 %v2894, %v2903
  %v2906 = vmul.f32 %v2896, %v2904
  %v2907 = vmul.f32 %v2905, %v536
  %v2908 = vmul.f32 %v2906, %v537
  %2910 = vrot.lane.b32.xlu0 %v2723, 32
  %v2911 = vpop.permute.xlu0 %2910
  %v2913 = vsel %vm545, %v2907, 0
  %v2915 = vsel %vm549, %v2911, 0
  %2917 = vmatprep.subr.mxu0 0.0
  %2918 = vmatpush1.msra.mxu0 %v2915
  %2919 = vmatprep.subr.mxu0 0.0
  %2920 = vmatpush1.msra.mxu0 0.0
  %2921 = vmatprep.subr.mxu0 0.0
  %2922 = vmatpush1.msra.mxu0 0.0
  %2923 = vmatprep.subr.mxu0 0.0
  %2924 = vmatpush1.msra.mxu0 0.0
  %2925 = vmatprep.subr.mxu0 0.0
  %2926 = vmatpush1.msra.mxu0 0.0
  %2927 = vmatprep.subr.mxu0 0.0
  %2928 = vmatpush1.msra.mxu0 0.0
  %2929 = vmatprep.subr.mxu0 0.0
  %2930 = vmatpush1.msra.mxu0 0.0
  %2931 = vmatprep.subr.mxu0 0.0
  %2932 = vmatpush1.msra.mxu0 0.0
  %2933 = vmatprep.subr.mxu0 0.0
  %2934 = vmatpush1.msra.mxu0 0.0
  %2935 = vmatprep.subr.mxu0 0.0
  %2936 = vmatpush1.msra.mxu0 0.0
  %2937 = vmatprep.subr.mxu0 0.0
  %2938 = vmatpush1.msra.mxu0 0.0
  %2939 = vmatprep.subr.mxu0 0.0
  %2940 = vmatpush1.msra.mxu0 0.0
  %2941 = vmatprep.subr.mxu0 0.0
  %2942 = vmatpush1.msra.mxu0 0.0
  %2943 = vmatprep.subr.mxu0 0.0
  %2944 = vmatpush1.msra.mxu0 0.0
  %2945 = vmatprep.subr.mxu0 0.0
  %2946 = vmatpush1.msra.mxu0 0.0
  %2947 = vmatprep.subr.mxu0 0.0
  %2948 = vmatpush1.msra.mxu0 0.0
  %2949 = vmatprep.subr.mxu0 0.0
  %2950 = vmatpush1.msra.mxu0 0.0
  %2951 = vmatprep.subr.mxu0 0.0
  %2952 = vmatpush1.msra.mxu0 0.0
  %2953 = vmatprep.subr.mxu0 0.0
  %2954 = vmatpush1.msra.mxu0 0.0
  %2955 = vmatprep.subr.mxu0 0.0
  %2956 = vmatpush1.msra.mxu0 0.0
  %2957 = vmatprep.subr.mxu0 0.0
  %2958 = vmatpush1.msra.mxu0 0.0
  %2959 = vmatprep.subr.mxu0 0.0
  %2960 = vmatpush1.msra.mxu0 0.0
  %2961 = vmatprep.subr.mxu0 0.0
  %2962 = vmatpush1.msra.mxu0 0.0
  %2963 = vmatprep.subr.mxu0 0.0
  %2964 = vmatpush1.msra.mxu0 0.0
  %2965 = vmatprep.subr.mxu0 0.0
  %2966 = vmatpush1.msra.mxu0 0.0
  %2967 = vmatprep.subr.mxu0 0.0
  %2968 = vmatpush1.msra.mxu0 0.0
  %2969 = vmatprep.subr.mxu0 0.0
  %2970 = vmatpush1.msra.mxu0 0.0
  %2971 = vmatprep.subr.mxu0 0.0
  %2972 = vmatpush1.msra.mxu0 0.0
  %2973 = vmatprep.subr.mxu0 0.0
  %2974 = vmatpush1.msra.mxu0 0.0
  %2975 = vmatprep.subr.mxu0 0.0
  %2976 = vmatpush1.msra.mxu0 0.0
  %2977 = vmatprep.subr.mxu0 0.0
  %2978 = vmatpush1.msra.mxu0 0.0
  %2979 = vmatprep.subr.mxu0 0.0
  %2980 = vmatpush1.msra.mxu0 0.0
  %2981 = vmatprep.mubr.f32.mxu0 0.0
  %2982 = vmatmul.mubr.f32.gmra.mrb[0].mxu0 %v2913
  %v2983 = vpop.f32.mrb[0].mxu0
  %v2984 = vadd.f32 0.0, %v2983
  %v2985 = vpop.f32.mrb[0].mxu0
  %2986 = vdwg.mxu0
  %2988 = vrot.lane.b32.xlu0 %v2724, 32
  %v2989 = vpop.permute.xlu0 %2988
  %v2991 = vsel %vm545, %v2908, 0
  %v2993 = vsel %vm549, %v2989, 0
  %2995 = vmatprep.subr.mxu0 0.0
  %2996 = vmatpush1.msra.mxu0 %v2993
  %2997 = vmatprep.subr.mxu0 0.0
  %2998 = vmatpush1.msra.mxu0 0.0
  %2999 = vmatprep.subr.mxu0 0.0
  %3000 = vmatpush1.msra.mxu0 0.0
  %3001 = vmatprep.subr.mxu0 0.0
  %3002 = vmatpush1.msra.mxu0 0.0
  %3003 = vmatprep.subr.mxu0 0.0
  %3004 = vmatpush1.msra.mxu0 0.0
  %3005 = vmatprep.subr.mxu0 0.0
  %3006 = vmatpush1.msra.mxu0 0.0
  %3007 = vmatprep.subr.mxu0 0.0
  %3008 = vmatpush1.msra.mxu0 0.0
  %3009 = vmatprep.subr.mxu0 0.0
  %3010 = vmatpush1.msra.mxu0 0.0
  %3011 = vmatprep.subr.mxu0 0.0
  %3012 = vmatpush1.msra.mxu0 0.0
  %3013 = vmatprep.subr.mxu0 0.0
  %3014 = vmatpush1.msra.mxu0 0.0
  %3015 = vmatprep.subr.mxu0 0.0
  %3016 = vmatpush1.msra.mxu0 0.0
  %3017 = vmatprep.subr.mxu0 0.0
  %3018 = vmatpush1.msra.mxu0 0.0
  %3019 = vmatprep.subr.mxu0 0.0
  %3020 = vmatpush1.msra.mxu0 0.0
  %3021 = vmatprep.subr.mxu0 0.0
  %3022 = vmatpush1.msra.mxu0 0.0
  %3023 = vmatprep.subr.mxu0 0.0
  %3024 = vmatpush1.msra.mxu0 0.0
  %3025 = vmatprep.subr.mxu0 0.0
  %3026 = vmatpush1.msra.mxu0 0.0
  %3027 = vmatprep.subr.mxu0 0.0
  %3028 = vmatpush1.msra.mxu0 0.0
  %3029 = vmatprep.subr.mxu0 0.0
  %3030 = vmatpush1.msra.mxu0 0.0
  %3031 = vmatprep.subr.mxu0 0.0
  %3032 = vmatpush1.msra.mxu0 0.0
  %3033 = vmatprep.subr.mxu0 0.0
  %3034 = vmatpush1.msra.mxu0 0.0
  %3035 = vmatprep.subr.mxu0 0.0
  %3036 = vmatpush1.msra.mxu0 0.0
  %3037 = vmatprep.subr.mxu0 0.0
  %3038 = vmatpush1.msra.mxu0 0.0
  %3039 = vmatprep.subr.mxu0 0.0
  %3040 = vmatpush1.msra.mxu0 0.0
  %3041 = vmatprep.subr.mxu0 0.0
  %3042 = vmatpush1.msra.mxu0 0.0
  %3043 = vmatprep.subr.mxu0 0.0
  %3044 = vmatpush1.msra.mxu0 0.0
  %3045 = vmatprep.subr.mxu0 0.0
  %3046 = vmatpush1.msra.mxu0 0.0
  %3047 = vmatprep.subr.mxu0 0.0
  %3048 = vmatpush1.msra.mxu0 0.0
  %3049 = vmatprep.subr.mxu0 0.0
  %3050 = vmatpush1.msra.mxu0 0.0
  %3051 = vmatprep.subr.mxu0 0.0
  %3052 = vmatpush1.msra.mxu0 0.0
  %3053 = vmatprep.subr.mxu0 0.0
  %3054 = vmatpush1.msra.mxu0 0.0
  %3055 = vmatprep.subr.mxu0 0.0
  %3056 = vmatpush1.msra.mxu0 0.0
  %3057 = vmatprep.subr.mxu0 0.0
  %3058 = vmatpush1.msra.mxu0 0.0
  %3059 = vmatprep.mubr.f32.mxu0 0.0
  %3060 = vmatmul.mubr.f32.gmra.mrb[0].mxu0 %v2991
  %v3061 = vpop.f32.mrb[0].mxu0
  %v3062 = vadd.f32 0.0, %v3061
  %v3063 = vpop.f32.mrb[0].mxu0
  %3064 = vdwg.mxu0
  %3067 = vrot.lane.b32.xlu0 %v2984, 96
  %v3068 = vpop.permute.xlu0 %3067
  %3069 = vrot.lane.b32.xlu0 %v3062, 96
  %v3070 = vpop.permute.xlu0 %3069
  %vm3073 = vcmask 1044224
  %3074 = vst.msk [vmem:[#allocation3] sm:$0xf] %vm3073, %v3068
  %3075 = vst.msk [vmem:[#allocation3 + $0x4] sm:$0xf] %vm3073, %v3070
  %v3076 = vld [vmem:[#allocation3] sm:$0x1]
  %v3077 = vld [vmem:[#allocation3 + $0x4] sm:$0x1]
  %v3078 = vld [vmem:[#allocation3 + $0x1] sm:$0x1]
  %v3079 = vld [vmem:[#allocation3 + $0x5] sm:$0x1]
  %v3080 = vld [vmem:[#allocation3 + $0x2] sm:$0x1]
  %v3081 = vld [vmem:[#allocation3 + $0x6] sm:$0x1]
  %v3082 = vld [vmem:[#allocation3 + $0x3] sm:$0x1]
  %v3083 = vld [vmem:[#allocation3 + $0x7] sm:$0x1]
  %v3086 = vrot.slane %v3077, 7
  %v3087 = vsel %vm633, %v3086, %v3076
  %v3091 = vrot.slane %v3079, 7
  %v3092 = vsel %vm633, %v3091, %v3078
  %v3096 = vrot.slane %v3081, 7
  %v3097 = vsel %vm633, %v3096, %v3080
  %v3101 = vrot.slane %v3083, 7
  %v3102 = vsel %vm633, %v3101, %v3082
  %v3104 = vld [vmem:[%s8] sm:$0xff]
  %v3105 = vld [vmem:[%s8 + $0x8] sm:$0xff]
  %v3106 = vld [vmem:[%s8 + $0x10] sm:$0xff]
  %v3107 = vld [vmem:[%s8 + $0x18] sm:$0xff]
  %v3108 = vld [vmem:[%s8 + $0x20] sm:$0xff]
  %v3109 = vld [vmem:[%s8 + $0x28] sm:$0xff]
  %v3110 = vld [vmem:[%s8 + $0x30] sm:$0xff]
  %v3111 = vld [vmem:[%s8 + $0x38] sm:$0xff]
  %v3112 = vld [vmem:[%s8 + $0x40] sm:$0xff]
  %v3113 = vld [vmem:[%s8 + $0x48] sm:$0xff]
  %v3114 = vld [vmem:[%s8 + $0x50] sm:$0xff]
  %v3115 = vld [vmem:[%s8 + $0x58] sm:$0xff]
  %v3116 = vld [vmem:[%s8 + $0x60] sm:$0xff]
  %v3117 = vld [vmem:[%s8 + $0x68] sm:$0xff]
  %v3118 = vld [vmem:[%s8 + $0x70] sm:$0xff]
  %v3119 = vld [vmem:[%s8 + $0x78] sm:$0xff]
  %v3120 = vld [vmem:[%s8 + $0x80] sm:$0xff]
  %v3121 = vld [vmem:[%s8 + $0x88] sm:$0xff]
  %v3122 = vld [vmem:[%s8 + $0x90] sm:$0xff]
  %v3123 = vld [vmem:[%s8 + $0x98] sm:$0xff]
  %v3124 = vld [vmem:[%s8 + $0xa0] sm:$0xff]
  %v3125 = vld [vmem:[%s8 + $0xa8] sm:$0xff]
  %v3126 = vld [vmem:[%s8 + $0xb0] sm:$0xff]
  %v3127 = vld [vmem:[%s8 + $0xb8] sm:$0xff]
  %v3128 = vld [vmem:[%s8 + $0xc0] sm:$0xff]
  %v3129 = vld [vmem:[%s8 + $0xc8] sm:$0xff]
  %v3130 = vld [vmem:[%s8 + $0xd0] sm:$0xff]
  %v3131 = vld [vmem:[%s8 + $0xd8] sm:$0xff]
  %v3132 = vld [vmem:[%s8 + $0xe0] sm:$0xff]
  %v3133 = vld [vmem:[%s8 + $0xe8] sm:$0xff]
  %v3134 = vld [vmem:[%s8 + $0xf0] sm:$0xff]
  %v3135 = vld [vmem:[%s8 + $0xf8] sm:$0xff]
  %v3136 = vld [vmem:[%s8 + $0x100] sm:$0xff]
  %v3137 = vld [vmem:[%s8 + $0x108] sm:$0xff]
  %v3138 = vld [vmem:[%s8 + $0x110] sm:$0xff]
  %v3139 = vld [vmem:[%s8 + $0x118] sm:$0xff]
  %v3140 = vld [vmem:[%s8 + $0x120] sm:$0xff]
  %v3141 = vld [vmem:[%s8 + $0x128] sm:$0xff]
  %v3142 = vld [vmem:[%s8 + $0x130] sm:$0xff]
  %v3143 = vld [vmem:[%s8 + $0x138] sm:$0xff]
  %v3144 = vld [vmem:[%s8 + $0x140] sm:$0xff]
  %v3145 = vld [vmem:[%s8 + $0x148] sm:$0xff]
  %v3146 = vld [vmem:[%s8 + $0x150] sm:$0xff]
  %v3147 = vld [vmem:[%s8 + $0x158] sm:$0xff]
  %v3148 = vld [vmem:[%s8 + $0x160] sm:$0xff]
  %v3149 = vld [vmem:[%s8 + $0x168] sm:$0xff]
  %v3150 = vld [vmem:[%s8 + $0x170] sm:$0xff]
  %v3151 = vld [vmem:[%s8 + $0x178] sm:$0xff]
  %v3152 = vld [vmem:[%s8 + $0x180] sm:$0xff]
  %v3153 = vld [vmem:[%s8 + $0x188] sm:$0xff]
  %v3154 = vld [vmem:[%s8 + $0x190] sm:$0xff]
  %v3155 = vld [vmem:[%s8 + $0x198] sm:$0xff]
  %v3156 = vld [vmem:[%s8 + $0x1a0] sm:$0xff]
  %v3157 = vld [vmem:[%s8 + $0x1a8] sm:$0xff]
  %v3158 = vld [vmem:[%s8 + $0x1b0] sm:$0xff]
  %v3159 = vld [vmem:[%s8 + $0x1b8] sm:$0xff]
  %v3160 = vld [vmem:[%s8 + $0x1c0] sm:$0xff]
  %v3161 = vld [vmem:[%s8 + $0x1c8] sm:$0xff]
  %v3162 = vld [vmem:[%s8 + $0x1d0] sm:$0xff]
  %v3163 = vld [vmem:[%s8 + $0x1d8] sm:$0xff]
  %v3164 = vld [vmem:[%s8 + $0x1e0] sm:$0xff]
  %v3165 = vld [vmem:[%s8 + $0x1e8] sm:$0xff]
  %v3166 = vld [vmem:[%s8 + $0x1f0] sm:$0xff]
  %v3167 = vld [vmem:[%s8 + $0x1f8] sm:$0xff]
  %3168 = vmatprep.subr.mxu0 0.0
  %3169 = vmatpush1.msra.mxu0 %v3104
  %3170 = vmatprep.subr.mxu0 0.0
  %3171 = vmatpush1.msra.mxu0 %v3105
  %3172 = vmatprep.subr.mxu0 0.0
  %3173 = vmatpush1.msra.mxu0 %v3106
  %3174 = vmatprep.subr.mxu0 0.0
  %3175 = vmatpush1.msra.mxu0 %v3107
  %3176 = vmatprep.subr.mxu0 0.0
  %3177 = vmatpush1.msra.mxu0 %v3108
  %3178 = vmatprep.subr.mxu0 0.0
  %3179 = vmatpush1.msra.mxu0 %v3109
  %3180 = vmatprep.subr.mxu0 0.0
  %3181 = vmatpush1.msra.mxu0 %v3110
  %3182 = vmatprep.subr.mxu0 0.0
  %3183 = vmatpush1.msra.mxu0 %v3111
  %3184 = vmatprep.subr.mxu0 0.0
  %3185 = vmatpush1.msra.mxu0 %v3112
  %3186 = vmatprep.subr.mxu0 0.0
  %3187 = vmatpush1.msra.mxu0 %v3113
  %3188 = vmatprep.subr.mxu0 0.0
  %3189 = vmatpush1.msra.mxu0 %v3114
  %3190 = vmatprep.subr.mxu0 0.0
  %3191 = vmatpush1.msra.mxu0 %v3115
  %3192 = vmatprep.subr.mxu0 0.0
  %3193 = vmatpush1.msra.mxu0 %v3116
  %3194 = vmatprep.subr.mxu0 0.0
  %3195 = vmatpush1.msra.mxu0 %v3117
  %3196 = vmatprep.subr.mxu0 0.0
  %3197 = vmatpush1.msra.mxu0 %v3118
  %3198 = vmatprep.subr.mxu0 0.0
  %3199 = vmatpush1.msra.mxu0 %v3119
  %3200 = vmatprep.subr.mxu0 0.0
  %3201 = vmatpush1.msra.mxu0 %v3120
  %3202 = vmatprep.subr.mxu0 0.0
  %3203 = vmatpush1.msra.mxu0 %v3121
  %3204 = vmatprep.subr.mxu0 0.0
  %3205 = vmatpush1.msra.mxu0 %v3122
  %3206 = vmatprep.subr.mxu0 0.0
  %3207 = vmatpush1.msra.mxu0 %v3123
  %3208 = vmatprep.subr.mxu0 0.0
  %3209 = vmatpush1.msra.mxu0 %v3124
  %3210 = vmatprep.subr.mxu0 0.0
  %3211 = vmatpush1.msra.mxu0 %v3125
  %3212 = vmatprep.subr.mxu0 0.0
  %3213 = vmatpush1.msra.mxu0 %v3126
  %3214 = vmatprep.subr.mxu0 0.0
  %3215 = vmatpush1.msra.mxu0 %v3127
  %3216 = vmatprep.subr.mxu0 0.0
  %3217 = vmatpush1.msra.mxu0 %v3128
  %3218 = vmatprep.subr.mxu0 0.0
  %3219 = vmatpush1.msra.mxu0 %v3129
  %3220 = vmatprep.subr.mxu0 0.0
  %3221 = vmatpush1.msra.mxu0 %v3130
  %3222 = vmatprep.subr.mxu0 0.0
  %3223 = vmatpush1.msra.mxu0 %v3131
  %3224 = vmatprep.subr.mxu0 0.0
  %3225 = vmatpush1.msra.mxu0 %v3132
  %3226 = vmatprep.subr.mxu0 0.0
  %3227 = vmatpush1.msra.mxu0 %v3133
  %3228 = vmatprep.subr.mxu0 0.0
  %3229 = vmatpush1.msra.mxu0 %v3134
  %3230 = vmatprep.subr.mxu0 0.0
  %3231 = vmatpush1.msra.mxu0 %v3135
  %3232 = vmatprep.mubr.f32.mxu0 %v3092
  %3233 = vmatmul.mubr.f32.gmra.mrb[0].mxu0 %v3087
  %v3234 = vpop.f32.mrb[0].mxu0
  %v3235 = vadd.f32 %v1132, %v3234
  %v3236 = vpop.f32.mrb[0].mxu0
  %3237 = vdwg.mxu0
  %3238 = vmatprep.subr.mxu0 0.0
  %3239 = vmatpush1.msra.mxu0 %v3136
  %3240 = vmatprep.subr.mxu0 0.0
  %3241 = vmatpush1.msra.mxu0 %v3137
  %3242 = vmatprep.subr.mxu0 0.0
  %3243 = vmatpush1.msra.mxu0 %v3138
  %3244 = vmatprep.subr.mxu0 0.0
  %3245 = vmatpush1.msra.mxu0 %v3139
  %3246 = vmatprep.subr.mxu0 0.0
  %3247 = vmatpush1.msra.mxu0 %v3140
  %3248 = vmatprep.subr.mxu0 0.0
  %3249 = vmatpush1.msra.mxu0 %v3141
  %3250 = vmatprep.subr.mxu0 0.0
  %3251 = vmatpush1.msra.mxu0 %v3142
  %3252 = vmatprep.subr.mxu0 0.0
  %3253 = vmatpush1.msra.mxu0 %v3143
  %3254 = vmatprep.subr.mxu0 0.0
  %3255 = vmatpush1.msra.mxu0 %v3144
  %3256 = vmatprep.subr.mxu0 0.0
  %3257 = vmatpush1.msra.mxu0 %v3145
  %3258 = vmatprep.subr.mxu0 0.0
  %3259 = vmatpush1.msra.mxu0 %v3146
  %3260 = vmatprep.subr.mxu0 0.0
  %3261 = vmatpush1.msra.mxu0 %v3147
  %3262 = vmatprep.subr.mxu0 0.0
  %3263 = vmatpush1.msra.mxu0 %v3148
  %3264 = vmatprep.subr.mxu0 0.0
  %3265 = vmatpush1.msra.mxu0 %v3149
  %3266 = vmatprep.subr.mxu0 0.0
  %3267 = vmatpush1.msra.mxu0 %v3150
  %3268 = vmatprep.subr.mxu0 0.0
  %3269 = vmatpush1.msra.mxu0 %v3151
  %3270 = vmatprep.subr.mxu0 0.0
  %3271 = vmatpush1.msra.mxu0 %v3152
  %3272 = vmatprep.subr.mxu0 0.0
  %3273 = vmatpush1.msra.mxu0 %v3153
  %3274 = vmatprep.subr.mxu0 0.0
  %3275 = vmatpush1.msra.mxu0 %v3154
  %3276 = vmatprep.subr.mxu0 0.0
  %3277 = vmatpush1.msra.mxu0 %v3155
  %3278 = vmatprep.subr.mxu0 0.0
  %3279 = vmatpush1.msra.mxu0 %v3156
  %3280 = vmatprep.subr.mxu0 0.0
  %3281 = vmatpush1.msra.mxu0 %v3157
  %3282 = vmatprep.subr.mxu0 0.0
  %3283 = vmatpush1.msra.mxu0 %v3158
  %3284 = vmatprep.subr.mxu0 0.0
  %3285 = vmatpush1.msra.mxu0 %v3159
  %3286 = vmatprep.subr.mxu0 0.0
  %3287 = vmatpush1.msra.mxu0 %v3160
  %3288 = vmatprep.subr.mxu0 0.0
  %3289 = vmatpush1.msra.mxu0 %v3161
  %3290 = vmatprep.subr.mxu0 0.0
  %3291 = vmatpush1.msra.mxu0 %v3162
  %3292 = vmatprep.subr.mxu0 0.0
  %3293 = vmatpush1.msra.mxu0 %v3163
  %3294 = vmatprep.subr.mxu0 0.0
  %3295 = vmatpush1.msra.mxu0 %v3164
  %3296 = vmatprep.subr.mxu0 0.0
  %3297 = vmatpush1.msra.mxu0 %v3165
  %3298 = vmatprep.subr.mxu0 0.0
  %3299 = vmatpush1.msra.mxu0 %v3166
  %3300 = vmatprep.subr.mxu0 0.0
  %3301 = vmatpush1.msra.mxu0 %v3167
  %3302 = vmatprep.mubr.f32.mxu0 %v3102
  %3303 = vmatmul.mubr.f32.gmra.mrb[0].mxu0 %v3097
  %v3304 = vpop.f32.mrb[0].mxu0
  %v3305 = vadd.f32 %v3235, %v3304
  %v3306 = vpop.f32.mrb[0].mxu0
  %3307 = vdwg.mxu0
  %v3308 = vmul.f32 %v704, %v3305
  %v3309 = vsub.f32 1.0, %v704
  %v3310 = vmul.f32 %v3309, %v33
  %v3311 = vadd.f32 %v3308, %v3310
  %3312 = vst [vmem:[%s9] sm:$0x3] %v3311
  // Predicated region
  $region38: #{rim_cell_forward.1} parent=0 // pred_check
    _
  $region39: #{rim_cell_forward.1} parent=0 // pred_check_branch
    %3314 = sbr.rel (0) target = $region41
  $region40: #{rim_cell_forward.1} parent=0 // pred_region
    _
  $region41: #{rim_cell_forward.1} parent=0 // pred_fallthru
    _
  // Predicated region
  $region42: #{rim_cell_forward.1} parent=0 // pred_check
    _
  $region43: #{rim_cell_forward.1} parent=0 // pred_check_branch
    %3316 = sbr.rel (0) target = $region45
  $region44: #{rim_cell_forward.1} parent=0 // pred_region
    _
  $region45: #{rim_cell_forward.1} parent=0 // pred_fallthru
    _

</llo_original>
